<compile_context>
chip_gen: v6e
topology: v6e:2x2x1
jax: 0.10.0
libtpu: 0.0.40
codegen_flags: <defaults>
</compile_context>

<pallas_src>
import functools
import numpy as np
import jax
import jax.numpy as jnp
from jax import lax
from jax.experimental import pallas as pl
from jax.experimental.pallas import tpu as pltpu

# ---------------- static "mc" config (deterministic, in-script) -------------
LCN_HEIGHT = 3                       # size_z
LCN_WIDTH = 5                        # size_a
NUM_CLASS = 4
BILATERAL_THETA_R = (0.015, 0.015, 0.01, 0.01)
IN_CHANNEL = 5                       # x, y, z, intensity, range
PAD_Z = LCN_HEIGHT // 2              # "same" padding (stride=1), as used by the
PAD_A = LCN_WIDTH // 2               # SqueezeSeg caller so shapes broadcast.
NBR_TILE = 7                         # neighbors per grid step (14 -> 2 tiles)
# TODO(synk): only stride=1 / same-padding supported (required for the
# broadcast `x[:,0] - condensed[:,0::C]` in the reference forward to be valid).


def _theta_groups(theta_r):
    """Group class indices by identical 1/(2*theta^2) so exp is computed once
    per unique theta (trace-time dedup)."""
    groups = []   # list of [inv_value, [class indices]]
    for cls, t in enumerate(theta_r):
        inv = float(1.0 / (2.0 * t * t))
        for g in groups:
            if g[0] == inv:
                g[1].append(cls)
                break
        else:
            groups.append([inv, [cls]])
    return tuple((g[0], tuple(g[1])) for g in groups)


def _neighbor_list(size_z, size_a):
    """Row-major (dz, da) neighbor order, center removed — matches the
    condensing_matrix channel order of the reference conv."""
    pz, pa = size_z // 2, size_a // 2
    return tuple((dz, da) for dz in range(size_z) for da in range(size_a)
                 if not (dz == pz and da == pa))


# ------------------------------- Pallas kernel ------------------------------
def _bilateral_kernel(x_ref, o_ref, sh_ref, *, size_z, size_a, groups,
                      neighbors, nbr_tile):
    # x_ref block:  (1, C, Z, A)
    # o_ref block:  (1, NUM_CLASS, nbr_tile, Z, A)
    # sh_ref:       (3, size_a, Z, A) VMEM scratch: xyz channels pre-shifted
    #               along azimuth, aligned (no zenith halo rows).
    Z = x_ref.shape[2]
    A = x_ref.shape[3]
    pz, pa = size_z // 2, size_a // 2
    n_tiles = len(neighbors) // nbr_tile

    # ---- hoisted iotas / edge masks (computed once per grid step) ----------
    lane = lax.broadcasted_iota(jnp.int32, (Z, A), 1)
    row = lax.broadcasted_iota(jnp.int32, (Z, A), 0)

    az_mask = {}                      # per-da keep-mask, shared by 3 channels
    for da in range(size_a):
        oa = da - pa
        if oa > 0:
            az_mask[da] = lane < (A - oa)
        elif oa < 0:
            az_mask[da] = lane >= (-oa)

    zen_mask = {}                     # per-dz keep-mask, shared by everything
    for dz in range(size_z):
        oz = dz - pz
        if oz > 0:
            zen_mask[dz] = row < (Z - oz)
        elif oz < 0:
            zen_mask[dz] = row >= (-oz)

    # ---- hoisted center-channel planes (reused for every neighbor) ---------
    center = [x_ref[0, ch, :, :] for ch in range(3)]

    # ---- pre-shift xyz along azimuth into the aligned scratch ---------------
    for ch in range(3):
        for da in range(size_a):
            oa = da - pa
            if oa == 0:
                sh = center[ch]
            else:
                sh = pltpu.roll(center[ch], shift=(-oa) % A, axis=1)
                sh = jnp.where(az_mask[da], sh, 0.0)
            sh_ref[ch, da, :, :] = sh

    # ---- per-neighbor fused sq-dist + exp + store (one tile per grid step) --
    t = pl.program_id(1)
    for tile_idx in range(n_tiles):
        tile_nbrs = neighbors[tile_idx * nbr_tile:(tile_idx + 1) * nbr_tile]

        @pl.when(t == tile_idx)
        def _(tile_nbrs=tile_nbrs):
            for local, (dz, da) in enumerate(tile_nbrs):
                oz = dz - pz
                diffs = []
                for ch in range(3):
                    # aligned full-plane read; da == pa is the unshifted plane
                    p = center[ch] if da == pa else sh_ref[ch, da, :, :]
                    if oz != 0:
                        # zenith offset via sublane roll + hoisted row mask
                        p = pltpu.roll(p, shift=(-oz) % Z, axis=0)
                        p = jnp.where(zen_mask[dz], p, 0.0)
                    diffs.append(center[ch] - p)
                sq = (diffs[0] * diffs[0] + diffs[1] * diffs[1]
                      + diffs[2] * diffs[2])
                for inv_val, cls_idxs in groups:
                    e = jnp.exp(sq * (-inv_val))
                    for cls in cls_idxs:
                        # TODO(synk): duplicate class planes + f32 are required
                        # by the module contract; group-dedup / bf16 output
                        # would halve/quarter HBM write traffic if the
                        # downstream CRF consumer is updated.
                        o_ref[0, cls, local, :, :] = e


def bilateral_filter(x):
    """x: (B, C, Z, A) float32 -> (B, NUM_CLASS, size_z*size_a-1, Z, A)."""
    B, C, Z, A = x.shape
    n_nbr = LCN_HEIGHT * LCN_WIDTH - 1
    assert n_nbr % NBR_TILE == 0
    n_tiles = n_nbr // NBR_TILE
    groups = _theta_groups(BILATERAL_THETA_R)
    neighbors = _neighbor_list(LCN_HEIGHT, LCN_WIDTH)

    kernel = functools.partial(
        _bilateral_kernel, size_z=LCN_HEIGHT, size_a=LCN_WIDTH, groups=groups,
        neighbors=neighbors, nbr_tile=NBR_TILE)

    # Explicit VMEM budget: double-buffered in/out blocks + scratch + margin,
    # capped by a generation-aware limit (v7x has only 64 MiB per TC).
    in_block = C * Z * A * 4
    out_block = NUM_CLASS * NBR_TILE * Z * A * 4
    scratch_bytes = 3 * LCN_WIDTH * Z * A * 4
    want = 2 * (in_block + out_block) + scratch_bytes + (4 << 20)
    try:
        phys = int(getattr(pltpu.get_tpu_info(), "vmem_capacity_bytes"))
        cap = max(phys - (16 << 20), 16 << 20)
    except Exception:
        cap = 48 << 20
    vmem_limit = int(min(max(want, 16 << 20), cap))

    n_elem = B * n_nbr * Z * A
    cost = pl.CostEstimate(
        flops=n_elem * (8 + len(groups)),
        transcendentals=n_elem * len(groups),
        bytes_accessed=4 * (B * C * Z * A) + 4 * (B * NUM_CLASS * n_nbr * Z * A),
    )

    return pl.pallas_call(
        kernel,
        out_shape=jax.ShapeDtypeStruct((B, NUM_CLASS, n_nbr, Z, A),
                                       jnp.float32),
        grid_spec=pltpu.PrefetchScalarGridSpec(
            num_scalar_prefetch=0,
            grid=(B, n_tiles),
            in_specs=[pl.BlockSpec((1, C, Z, A), lambda b, t: (b, 0, 0, 0))],
            out_specs=pl.BlockSpec((1, NUM_CLASS, NBR_TILE, Z, A),
                                   lambda b, t: (b, 0, t, 0, 0)),
            scratch_shapes=[
                pltpu.VMEM((3, LCN_WIDTH, Z, A), jnp.float32)],
        ),
        compiler_params=pltpu.CompilerParams(
            # Both axes independent (scratch is recomputed per step, no
            # carried state) -> safe to shard either across v7x TensorCores.
            dimension_semantics=("parallel", "parallel"),
            vmem_limit_bytes=vmem_limit),
        cost_estimate=cost,
    )(x)


# -------------------------- pure-JAX reference ------------------------------
def _condensing_matrix(size_z, size_a, in_channel):
    half = (size_z * size_a) // 2
    m = np.zeros((size_z * size_a * in_channel, in_channel, size_z, size_a),
                 dtype=np.float32)
    for z in range(size_z):
        for a in range(size_a):
            for ch in range(in_channel):
                m[z * (size_a * in_channel) + a * in_channel + ch, ch, z, a] = 1.0
    m = np.concatenate([m[:in_channel * half],
                        m[in_channel * (half + 1):]], axis=0)
    return m


def bilateral_filter_reference(x):
    B, C, Z, A = x.shape
    w = jnp.asarray(_condensing_matrix(LCN_HEIGHT, LCN_WIDTH, C))
    cond = lax.conv_general_dilated(
        x, w, window_strides=(1, 1),
        padding=((PAD_Z, PAD_Z), (PAD_A, PAD_A)),
        dimension_numbers=("NCHW", "OIHW", "NCHW"))
    dx = x[:, 0:1] - cond[:, 0::C]
    dy = x[:, 1:2] - cond[:, 1::C]
    dz = x[:, 2:3] - cond[:, 2::C]
    sq = dx ** 2 + dy ** 2 + dz ** 2
    # torch.stack(...,dim=0).transpose(0,1) == stack on axis=1
    return jnp.stack([jnp.exp(-sq / (2.0 * t * t)) for t in BILATERAL_THETA_R],
                     axis=1)


# ----------------------------------- main ------------------------------------
if __name__ == "__main__":
    key = jax.random.PRNGKey(0)
    # A = 128 keeps every output store lane-dense (full 128-lane vregs).
    B, C, Z, A = 2, IN_CHANNEL, 16, 128
    x = jax.random.normal(key, (B, C, Z, A), dtype=jnp.float32)

    out = bilateral_filter(x)
    out = jax.block_until_ready(out)

    ref = jax.block_until_ready(bilateral_filter_reference(x))
    np.testing.assert_allclose(np.asarray(out), np.asarray(ref),
                               rtol=1e-5, atol=1e-5)
    assert out.shape == (B, NUM_CLASS, LCN_HEIGHT * LCN_WIDTH - 1, Z, A)
    print("KERNEL_OK")
</pallas_src>

<mosaic_0001>
module attributes {stable_mosaic.version = 11 : i64} {
  func.func @_bilateral_kernel(%arg0: i32, %arg1: i32, %arg2: memref<1x5x16x128xf32, #tpu.memory_space<vmem>>, %arg3: memref<1x4x7x16x128xf32, #tpu.memory_space<vmem>>, %arg4: memref<3x5x16x128xf32, #tpu.memory_space<vmem>>) attributes {dimension_semantics = [#tpu.dimension_semantics<parallel>, #tpu.dimension_semantics<parallel>], iteration_bounds = array<i64: 2, 2>, scalar_prefetch = 0 : i64, scratch_operands = 1 : i64, tpu.core_type = #tpu.core_type<tc>, window_params = [{transform_indices = @transform_0, window_bounds = array<i64: 1, 5, 16, 128>}, {transform_indices = @transform_1, window_bounds = array<i64: 1, 4, 7, 16, 128>}]} {
    %0 = tpu.iota {dimensions = array<i32: 1>} : vector<16x128xi32>
    %1 = tpu.iota {dimensions = array<i32: 0>} : vector<16x128xi32>
    %c2_i32 = arith.constant 2 : i32
    %2 = vector.broadcast %c2_i32 : i32 to vector<16x128xi32>
    %3 = arith.cmpi sge, %0, %2 : vector<16x128xi32>
    %c1_i32 = arith.constant 1 : i32
    %4 = vector.broadcast %c1_i32 : i32 to vector<16x128xi32>
    %5 = arith.cmpi sge, %0, %4 : vector<16x128xi32>
    %c127_i32 = arith.constant 127 : i32
    %6 = vector.broadcast %c127_i32 : i32 to vector<16x128xi32>
    %7 = arith.cmpi slt, %0, %6 : vector<16x128xi32>
    %c126_i32 = arith.constant 126 : i32
    %8 = vector.broadcast %c126_i32 : i32 to vector<16x128xi32>
    %9 = arith.cmpi slt, %0, %8 : vector<16x128xi32>
    %c1_i32_0 = arith.constant 1 : i32
    %10 = vector.broadcast %c1_i32_0 : i32 to vector<16x128xi32>
    %11 = arith.cmpi sge, %1, %10 : vector<16x128xi32>
    %c15_i32 = arith.constant 15 : i32
    %12 = vector.broadcast %c15_i32 : i32 to vector<16x128xi32>
    %13 = arith.cmpi slt, %1, %12 : vector<16x128xi32>
    %c0 = arith.constant 0 : index
    %c0_1 = arith.constant 0 : index
    %c0_2 = arith.constant 0 : index
    %c0_3 = arith.constant 0 : index
    %14 = vector.load %arg2[%c0, %c0_1, %c0_2, %c0_3] : memref<1x5x16x128xf32, #tpu.memory_space<vmem>>, vector<1x1x16x128xf32>
    %15 = vector.shape_cast %14 : vector<1x1x16x128xf32> to vector<16x128xf32>
    %c0_4 = arith.constant 0 : index
    %c1 = arith.constant 1 : index
    %c0_5 = arith.constant 0 : index
    %c0_6 = arith.constant 0 : index
    %16 = vector.load %arg2[%c0_4, %c1, %c0_5, %c0_6] : memref<1x5x16x128xf32, #tpu.memory_space<vmem>>, vector<1x1x16x128xf32>
    %17 = vector.shape_cast %16 : vector<1x1x16x128xf32> to vector<16x128xf32>
    %c0_7 = arith.constant 0 : index
    %c2 = arith.constant 2 : index
    %c0_8 = arith.constant 0 : index
    %c0_9 = arith.constant 0 : index
    %18 = vector.load %arg2[%c0_7, %c2, %c0_8, %c0_9] : memref<1x5x16x128xf32, #tpu.memory_space<vmem>>, vector<1x1x16x128xf32>
    %19 = vector.shape_cast %18 : vector<1x1x16x128xf32> to vector<16x128xf32>
    %c2_i32_10 = arith.constant 2 : i32
    %20 = tpu.dynamic_rotate %15 by %c2_i32_10 dim 1 : vector<16x128xf32>, i32 -> vector<16x128xf32>
    %cst = arith.constant 0.000000e+00 : f32
    %21 = vector.broadcast %cst : f32 to vector<16x128xf32>
    %22 = arith.select %3, %20, %21 : vector<16x128xi1>, vector<16x128xf32>
    %c0_11 = arith.constant 0 : index
    %c0_12 = arith.constant 0 : index
    %c0_13 = arith.constant 0 : index
    %c0_14 = arith.constant 0 : index
    %23 = vector.load %arg4[%c0_11, %c0_12, %c0_13, %c0_14] : memref<3x5x16x128xf32, #tpu.memory_space<vmem>>, vector<1x1x16x128xf32>
    %24 = vector.shape_cast %23 : vector<1x1x16x128xf32> to vector<16x128xf32>
    %25 = vector.shape_cast %22 : vector<16x128xf32> to vector<1x1x16x128xf32>
    tpu.vector_store %arg4[%c0_11, %c0_12, %c0_13, %c0_14], %25 {strides = array<i32>} : memref<3x5x16x128xf32, #tpu.memory_space<vmem>>, vector<1x1x16x128xf32>,
    %c1_i32_15 = arith.constant 1 : i32
    %26 = tpu.dynamic_rotate %15 by %c1_i32_15 dim 1 : vector<16x128xf32>, i32 -> vector<16x128xf32>
    %cst_16 = arith.constant 0.000000e+00 : f32
    %27 = vector.broadcast %cst_16 : f32 to vector<16x128xf32>
    %28 = arith.select %5, %26, %27 : vector<16x128xi1>, vector<16x128xf32>
    %c0_17 = arith.constant 0 : index
    %c1_18 = arith.constant 1 : index
    %c0_19 = arith.constant 0 : index
    %c0_20 = arith.constant 0 : index
    %29 = vector.load %arg4[%c0_17, %c1_18, %c0_19, %c0_20] : memref<3x5x16x128xf32, #tpu.memory_space<vmem>>, vector<1x1x16x128xf32>
    %30 = vector.shape_cast %29 : vector<1x1x16x128xf32> to vector<16x128xf32>
    %31 = vector.shape_cast %28 : vector<16x128xf32> to vector<1x1x16x128xf32>
    tpu.vector_store %arg4[%c0_17, %c1_18, %c0_19, %c0_20], %31 {strides = array<i32>} : memref<3x5x16x128xf32, #tpu.memory_space<vmem>>, vector<1x1x16x128xf32>,
    %c0_21 = arith.constant 0 : index
    %c2_22 = arith.constant 2 : index
    %c0_23 = arith.constant 0 : index
    %c0_24 = arith.constant 0 : index
    %32 = vector.load %arg4[%c0_21, %c2_22, %c0_23, %c0_24] : memref<3x5x16x128xf32, #tpu.memory_space<vmem>>, vector<1x1x16x128xf32>
    %33 = vector.shape_cast %32 : vector<1x1x16x128xf32> to vector<16x128xf32>
    %34 = vector.shape_cast %15 : vector<16x128xf32> to vector<1x1x16x128xf32>
    tpu.vector_store %arg4[%c0_21, %c2_22, %c0_23, %c0_24], %34 {strides = array<i32>} : memref<3x5x16x128xf32, #tpu.memory_space<vmem>>, vector<1x1x16x128xf32>,
    %c127_i32_25 = arith.constant 127 : i32
    %35 = tpu.dynamic_rotate %15 by %c127_i32_25 dim 1 : vector<16x128xf32>, i32 -> vector<16x128xf32>
    %cst_26 = arith.constant 0.000000e+00 : f32
    %36 = vector.broadcast %cst_26 : f32 to vector<16x128xf32>
    %37 = arith.select %7, %35, %36 : vector<16x128xi1>, vector<16x128xf32>
    %c0_27 = arith.constant 0 : index
    %c3 = arith.constant 3 : index
    %c0_28 = arith.constant 0 : index
    %c0_29 = arith.constant 0 : index
    %38 = vector.load %arg4[%c0_27, %c3, %c0_28, %c0_29] : memref<3x5x16x128xf32, #tpu.memory_space<vmem>>, vector<1x1x16x128xf32>
    %39 = vector.shape_cast %38 : vector<1x1x16x128xf32> to vector<16x128xf32>
    %40 = vector.shape_cast %37 : vector<16x128xf32> to vector<1x1x16x128xf32>
    tpu.vector_store %arg4[%c0_27, %c3, %c0_28, %c0_29], %40 {strides = array<i32>} : memref<3x5x16x128xf32, #tpu.memory_space<vmem>>, vector<1x1x16x128xf32>,
    %c126_i32_30 = arith.constant 126 : i32
    %41 = tpu.dynamic_rotate %15 by %c126_i32_30 dim 1 : vector<16x128xf32>, i32 -> vector<16x128xf32>
    %cst_31 = arith.constant 0.000000e+00 : f32
    %42 = vector.broadcast %cst_31 : f32 to vector<16x128xf32>
    %43 = arith.select %9, %41, %42 : vector<16x128xi1>, vector<16x128xf32>
    %c0_32 = arith.constant 0 : index
    %c4 = arith.constant 4 : index
    %c0_33 = arith.constant 0 : index
    %c0_34 = arith.constant 0 : index
    %44 = vector.load %arg4[%c0_32, %c4, %c0_33, %c0_34] : memref<3x5x16x128xf32, #tpu.memory_space<vmem>>, vector<1x1x16x128xf32>
    %45 = vector.shape_cast %44 : vector<1x1x16x128xf32> to vector<16x128xf32>
    %46 = vector.shape_cast %43 : vector<16x128xf32> to vector<1x1x16x128xf32>
    tpu.vector_store %arg4[%c0_32, %c4, %c0_33, %c0_34], %46 {strides = array<i32>} : memref<3x5x16x128xf32, #tpu.memory_space<vmem>>, vector<1x1x16x128xf32>,
    %c2_i32_35 = arith.constant 2 : i32
    %47 = tpu.dynamic_rotate %17 by %c2_i32_35 dim 1 : vector<16x128xf32>, i32 -> vector<16x128xf32>
    %cst_36 = arith.constant 0.000000e+00 : f32
    %48 = vector.broadcast %cst_36 : f32 to vector<16x128xf32>
    %49 = arith.select %3, %47, %48 : vector<16x128xi1>, vector<16x128xf32>
    %c1_37 = arith.constant 1 : index
    %c0_38 = arith.constant 0 : index
    %c0_39 = arith.constant 0 : index
    %c0_40 = arith.constant 0 : index
    %50 = vector.load %arg4[%c1_37, %c0_38, %c0_39, %c0_40] : memref<3x5x16x128xf32, #tpu.memory_space<vmem>>, vector<1x1x16x128xf32>
    %51 = vector.shape_cast %50 : vector<1x1x16x128xf32> to vector<16x128xf32>
    %52 = vector.shape_cast %49 : vector<16x128xf32> to vector<1x1x16x128xf32>
    tpu.vector_store %arg4[%c1_37, %c0_38, %c0_39, %c0_40], %52 {strides = array<i32>} : memref<3x5x16x128xf32, #tpu.memory_space<vmem>>, vector<1x1x16x128xf32>,
    %c1_i32_41 = arith.constant 1 : i32
    %53 = tpu.dynamic_rotate %17 by %c1_i32_41 dim 1 : vector<16x128xf32>, i32 -> vector<16x128xf32>
    %cst_42 = arith.constant 0.000000e+00 : f32
    %54 = vector.broadcast %cst_42 : f32 to vector<16x128xf32>
    %55 = arith.select %5, %53, %54 : vector<16x128xi1>, vector<16x128xf32>
    %c1_43 = arith.constant 1 : index
    %c1_44 = arith.constant 1 : index
    %c0_45 = arith.constant 0 : index
    %c0_46 = arith.constant 0 : index
    %56 = vector.load %arg4[%c1_43, %c1_44, %c0_45, %c0_46] : memref<3x5x16x128xf32, #tpu.memory_space<vmem>>, vector<1x1x16x128xf32>
    %57 = vector.shape_cast %56 : vector<1x1x16x128xf32> to vector<16x128xf32>
    %58 = vector.shape_cast %55 : vector<16x128xf32> to vector<1x1x16x128xf32>
    tpu.vector_store %arg4[%c1_43, %c1_44, %c0_45, %c0_46], %58 {strides = array<i32>} : memref<3x5x16x128xf32, #tpu.memory_space<vmem>>, vector<1x1x16x128xf32>,
    %c1_47 = arith.constant 1 : index
    %c2_48 = arith.constant 2 : index
    %c0_49 = arith.constant 0 : index
    %c0_50 = arith.constant 0 : index
    %59 = vector.load %arg4[%c1_47, %c2_48, %c0_49, %c0_50] : memref<3x5x16x128xf32, #tpu.memory_space<vmem>>, vector<1x1x16x128xf32>
    %60 = vector.shape_cast %59 : vector<1x1x16x128xf32> to vector<16x128xf32>
    %61 = vector.shape_cast %17 : vector<16x128xf32> to vector<1x1x16x128xf32>
    tpu.vector_store %arg4[%c1_47, %c2_48, %c0_49, %c0_50], %61 {strides = array<i32>} : memref<3x5x16x128xf32, #tpu.memory_space<vmem>>, vector<1x1x16x128xf32>,
    %c127_i32_51 = arith.constant 127 : i32
    %62 = tpu.dynamic_rotate %17 by %c127_i32_51 dim 1 : vector<16x128xf32>, i32 -> vector<16x128xf32>
    %cst_52 = arith.constant 0.000000e+00 : f32
    %63 = vector.broadcast %cst_52 : f32 to vector<16x128xf32>
    %64 = arith.select %7, %62, %63 : vector<16x128xi1>, vector<16x128xf32>
    %c1_53 = arith.constant 1 : index
    %c3_54 = arith.constant 3 : index
    %c0_55 = arith.constant 0 : index
    %c0_56 = arith.constant 0 : index
    %65 = vector.load %arg4[%c1_53, %c3_54, %c0_55, %c0_56] : memref<3x5x16x128xf32, #tpu.memory_space<vmem>>, vector<1x1x16x128xf32>
    %66 = vector.shape_cast %65 : vector<1x1x16x128xf32> to vector<16x128xf32>
    %67 = vector.shape_cast %64 : vector<16x128xf32> to vector<1x1x16x128xf32>
    tpu.vector_store %arg4[%c1_53, %c3_54, %c0_55, %c0_56], %67 {strides = array<i32>} : memref<3x5x16x128xf32, #tpu.memory_space<vmem>>, vector<1x1x16x128xf32>,
    %c126_i32_57 = arith.constant 126 : i32
    %68 = tpu.dynamic_rotate %17 by %c126_i32_57 dim 1 : vector<16x128xf32>, i32 -> vector<16x128xf32>
    %cst_58 = arith.constant 0.000000e+00 : f32
    %69 = vector.broadcast %cst_58 : f32 to vector<16x128xf32>
    %70 = arith.select %9, %68, %69 : vector<16x128xi1>, vector<16x128xf32>
    %c1_59 = arith.constant 1 : index
    %c4_60 = arith.constant 4 : index
    %c0_61 = arith.constant 0 : index
    %c0_62 = arith.constant 0 : index
    %71 = vector.load %arg4[%c1_59, %c4_60, %c0_61, %c0_62] : memref<3x5x16x128xf32, #tpu.memory_space<vmem>>, vector<1x1x16x128xf32>
    %72 = vector.shape_cast %71 : vector<1x1x16x128xf32> to vector<16x128xf32>
    %73 = vector.shape_cast %70 : vector<16x128xf32> to vector<1x1x16x128xf32>
    tpu.vector_store %arg4[%c1_59, %c4_60, %c0_61, %c0_62], %73 {strides = array<i32>} : memref<3x5x16x128xf32, #tpu.memory_space<vmem>>, vector<1x1x16x128xf32>,
    %c2_i32_63 = arith.constant 2 : i32
    %74 = tpu.dynamic_rotate %19 by %c2_i32_63 dim 1 : vector<16x128xf32>, i32 -> vector<16x128xf32>
    %cst_64 = arith.constant 0.000000e+00 : f32
    %75 = vector.broadcast %cst_64 : f32 to vector<16x128xf32>
    %76 = arith.select %3, %74, %75 : vector<16x128xi1>, vector<16x128xf32>
    %c2_65 = arith.constant 2 : index
    %c0_66 = arith.constant 0 : index
    %c0_67 = arith.constant 0 : index
    %c0_68 = arith.constant 0 : index
    %77 = vector.load %arg4[%c2_65, %c0_66, %c0_67, %c0_68] : memref<3x5x16x128xf32, #tpu.memory_space<vmem>>, vector<1x1x16x128xf32>
    %78 = vector.shape_cast %77 : vector<1x1x16x128xf32> to vector<16x128xf32>
    %79 = vector.shape_cast %76 : vector<16x128xf32> to vector<1x1x16x128xf32>
    tpu.vector_store %arg4[%c2_65, %c0_66, %c0_67, %c0_68], %79 {strides = array<i32>} : memref<3x5x16x128xf32, #tpu.memory_space<vmem>>, vector<1x1x16x128xf32>,
    %c1_i32_69 = arith.constant 1 : i32
    %80 = tpu.dynamic_rotate %19 by %c1_i32_69 dim 1 : vector<16x128xf32>, i32 -> vector<16x128xf32>
    %cst_70 = arith.constant 0.000000e+00 : f32
    %81 = vector.broadcast %cst_70 : f32 to vector<16x128xf32>
    %82 = arith.select %5, %80, %81 : vector<16x128xi1>, vector<16x128xf32>
    %c2_71 = arith.constant 2 : index
    %c1_72 = arith.constant 1 : index
    %c0_73 = arith.constant 0 : index
    %c0_74 = arith.constant 0 : index
    %83 = vector.load %arg4[%c2_71, %c1_72, %c0_73, %c0_74] : memref<3x5x16x128xf32, #tpu.memory_space<vmem>>, vector<1x1x16x128xf32>
    %84 = vector.shape_cast %83 : vector<1x1x16x128xf32> to vector<16x128xf32>
    %85 = vector.shape_cast %82 : vector<16x128xf32> to vector<1x1x16x128xf32>
    tpu.vector_store %arg4[%c2_71, %c1_72, %c0_73, %c0_74], %85 {strides = array<i32>} : memref<3x5x16x128xf32, #tpu.memory_space<vmem>>, vector<1x1x16x128xf32>,
    %c2_75 = arith.constant 2 : index
    %c2_76 = arith.constant 2 : index
    %c0_77 = arith.constant 0 : index
    %c0_78 = arith.constant 0 : index
    %86 = vector.load %arg4[%c2_75, %c2_76, %c0_77, %c0_78] : memref<3x5x16x128xf32, #tpu.memory_space<vmem>>, vector<1x1x16x128xf32>
    %87 = vector.shape_cast %86 : vector<1x1x16x128xf32> to vector<16x128xf32>
    %88 = vector.shape_cast %19 : vector<16x128xf32> to vector<1x1x16x128xf32>
    tpu.vector_store %arg4[%c2_75, %c2_76, %c0_77, %c0_78], %88 {strides = array<i32>} : memref<3x5x16x128xf32, #tpu.memory_space<vmem>>, vector<1x1x16x128xf32>,
    %c127_i32_79 = arith.constant 127 : i32
    %89 = tpu.dynamic_rotate %19 by %c127_i32_79 dim 1 : vector<16x128xf32>, i32 -> vector<16x128xf32>
    %cst_80 = arith.constant 0.000000e+00 : f32
    %90 = vector.broadcast %cst_80 : f32 to vector<16x128xf32>
    %91 = arith.select %7, %89, %90 : vector<16x128xi1>, vector<16x128xf32>
    %c2_81 = arith.constant 2 : index
    %c3_82 = arith.constant 3 : index
    %c0_83 = arith.constant 0 : index
    %c0_84 = arith.constant 0 : index
    %92 = vector.load %arg4[%c2_81, %c3_82, %c0_83, %c0_84] : memref<3x5x16x128xf32, #tpu.memory_space<vmem>>, vector<1x1x16x128xf32>
    %93 = vector.shape_cast %92 : vector<1x1x16x128xf32> to vector<16x128xf32>
    %94 = vector.shape_cast %91 : vector<16x128xf32> to vector<1x1x16x128xf32>
    tpu.vector_store %arg4[%c2_81, %c3_82, %c0_83, %c0_84], %94 {strides = array<i32>} : memref<3x5x16x128xf32, #tpu.memory_space<vmem>>, vector<1x1x16x128xf32>,
    %c126_i32_85 = arith.constant 126 : i32
    %95 = tpu.dynamic_rotate %19 by %c126_i32_85 dim 1 : vector<16x128xf32>, i32 -> vector<16x128xf32>
    %cst_86 = arith.constant 0.000000e+00 : f32
    %96 = vector.broadcast %cst_86 : f32 to vector<16x128xf32>
    %97 = arith.select %9, %95, %96 : vector<16x128xi1>, vector<16x128xf32>
    %c2_87 = arith.constant 2 : index
    %c4_88 = arith.constant 4 : index
    %c0_89 = arith.constant 0 : index
    %c0_90 = arith.constant 0 : index
    %98 = vector.load %arg4[%c2_87, %c4_88, %c0_89, %c0_90] : memref<3x5x16x128xf32, #tpu.memory_space<vmem>>, vector<1x1x16x128xf32>
    %99 = vector.shape_cast %98 : vector<1x1x16x128xf32> to vector<16x128xf32>
    %100 = vector.shape_cast %97 : vector<16x128xf32> to vector<1x1x16x128xf32>
    tpu.vector_store %arg4[%c2_87, %c4_88, %c0_89, %c0_90], %100 {strides = array<i32>} : memref<3x5x16x128xf32, #tpu.memory_space<vmem>>, vector<1x1x16x128xf32>,
    %c0_i32 = arith.constant 0 : i32
    %101 = arith.cmpi eq, %arg1, %c0_i32 : i32
    %102 = arith.extui %101 : i1 to i32
    %c0_i32_91 = arith.constant 0 : i32
    %103 = arith.cmpi ne, %102, %c0_i32_91 : i32
    scf.if %103 {
      %c0_94 = arith.constant 0 : index
      %c0_95 = arith.constant 0 : index
      %c0_96 = arith.constant 0 : index
      %c0_97 = arith.constant 0 : index
      %107 = vector.load %arg4[%c0_94, %c0_95, %c0_96, %c0_97] : memref<3x5x16x128xf32, #tpu.memory_space<vmem>>, vector<1x1x16x128xf32>
      %108 = vector.shape_cast %107 : vector<1x1x16x128xf32> to vector<16x128xf32>
      %c1_i32_98 = arith.constant 1 : i32
      %109 = tpu.dynamic_rotate %108 by %c1_i32_98 dim 0 : vector<16x128xf32>, i32 -> vector<16x128xf32>
      %cst_99 = arith.constant 0.000000e+00 : f32
      %110 = vector.broadcast %cst_99 : f32 to vector<16x128xf32>
      %111 = arith.select %11, %109, %110 : vector<16x128xi1>, vector<16x128xf32>
      %112 = arith.subf %15, %111 : vector<16x128xf32>
      %c1_100 = arith.constant 1 : index
      %c0_101 = arith.constant 0 : index
      %c0_102 = arith.constant 0 : index
      %c0_103 = arith.constant 0 : index
      %113 = vector.load %arg4[%c1_100, %c0_101, %c0_102, %c0_103] : memref<3x5x16x128xf32, #tpu.memory_space<vmem>>, vector<1x1x16x128xf32>
      %114 = vector.shape_cast %113 : vector<1x1x16x128xf32> to vector<16x128xf32>
      %c1_i32_104 = arith.constant 1 : i32
      %115 = tpu.dynamic_rotate %114 by %c1_i32_104 dim 0 : vector<16x128xf32>, i32 -> vector<16x128xf32>
      %cst_105 = arith.constant 0.000000e+00 : f32
      %116 = vector.broadcast %cst_105 : f32 to vector<16x128xf32>
      %117 = arith.select %11, %115, %116 : vector<16x128xi1>, vector<16x128xf32>
      %118 = arith.subf %17, %117 : vector<16x128xf32>
      %c2_106 = arith.constant 2 : index
      %c0_107 = arith.constant 0 : index
      %c0_108 = arith.constant 0 : index
      %c0_109 = arith.constant 0 : index
      %119 = vector.load %arg4[%c2_106, %c0_107, %c0_108, %c0_109] : memref<3x5x16x128xf32, #tpu.memory_space<vmem>>, vector<1x1x16x128xf32>
      %120 = vector.shape_cast %119 : vector<1x1x16x128xf32> to vector<16x128xf32>
      %c1_i32_110 = arith.constant 1 : i32
      %121 = tpu.dynamic_rotate %120 by %c1_i32_110 dim 0 : vector<16x128xf32>, i32 -> vector<16x128xf32>
      %cst_111 = arith.constant 0.000000e+00 : f32
      %122 = vector.broadcast %cst_111 : f32 to vector<16x128xf32>
      %123 = arith.select %11, %121, %122 : vector<16x128xi1>, vector<16x128xf32>
      %124 = arith.subf %19, %123 : vector<16x128xf32>
      %125 = arith.mulf %112, %112 : vector<16x128xf32>
      %126 = arith.mulf %118, %118 : vector<16x128xf32>
      %127 = arith.addf %125, %126 : vector<16x128xf32>
      %128 = arith.mulf %124, %124 : vector<16x128xf32>
      %129 = arith.addf %127, %128 : vector<16x128xf32>
      %cst_112 = arith.constant -2222.22217 : f32
      %130 = vector.broadcast %cst_112 : f32 to vector<16x128xf32>
      %131 = arith.mulf %129, %130 : vector<16x128xf32>
      %132 = math.exp %131 : vector<16x128xf32>
      %c0_113 = arith.constant 0 : index
      %c0_114 = arith.constant 0 : index
      %c0_115 = arith.constant 0 : index
      %c0_116 = arith.constant 0 : index
      %c0_117 = arith.constant 0 : index
      %133 = vector.load %arg3[%c0_113, %c0_114, %c0_115, %c0_116, %c0_117] : memref<1x4x7x16x128xf32, #tpu.memory_space<vmem>>, vector<1x1x1x16x128xf32>
      %134 = vector.shape_cast %133 : vector<1x1x1x16x128xf32> to vector<16x128xf32>
      %135 = vector.shape_cast %132 : vector<16x128xf32> to vector<1x1x1x16x128xf32>
      tpu.vector_store %arg3[%c0_113, %c0_114, %c0_115, %c0_116, %c0_117], %135 {strides = array<i32>} : memref<1x4x7x16x128xf32, #tpu.memory_space<vmem>>, vector<1x1x1x16x128xf32>,
      %c0_118 = arith.constant 0 : index
      %c1_119 = arith.constant 1 : index
      %c0_120 = arith.constant 0 : index
      %c0_121 = arith.constant 0 : index
      %c0_122 = arith.constant 0 : index
      %136 = vector.load %arg3[%c0_118, %c1_119, %c0_120, %c0_121, %c0_122] : memref<1x4x7x16x128xf32, #tpu.memory_space<vmem>>, vector<1x1x1x16x128xf32>
      %137 = vector.shape_cast %136 : vector<1x1x1x16x128xf32> to vector<16x128xf32>
      %138 = vector.shape_cast %132 : vector<16x128xf32> to vector<1x1x1x16x128xf32>
      tpu.vector_store %arg3[%c0_118, %c1_119, %c0_120, %c0_121, %c0_122], %138 {strides = array<i32>} : memref<1x4x7x16x128xf32, #tpu.memory_space<vmem>>, vector<1x1x1x16x128xf32>,
      %cst_123 = arith.constant -5.000000e+03 : f32
      %139 = vector.broadcast %cst_123 : f32 to vector<16x128xf32>
      %140 = arith.mulf %129, %139 : vector<16x128xf32>
      %141 = math.exp %140 : vector<16x128xf32>
      %c0_124 = arith.constant 0 : index
      %c2_125 = arith.constant 2 : index
      %c0_126 = arith.constant 0 : index
      %c0_127 = arith.constant 0 : index
      %c0_128 = arith.constant 0 : index
      %142 = vector.load %arg3[%c0_124, %c2_125, %c0_126, %c0_127, %c0_128] : memref<1x4x7x16x128xf32, #tpu.memory_space<vmem>>, vector<1x1x1x16x128xf32>
      %143 = vector.shape_cast %142 : vector<1x1x1x16x128xf32> to vector<16x128xf32>
      %144 = vector.shape_cast %141 : vector<16x128xf32> to vector<1x1x1x16x128xf32>
      tpu.vector_store %arg3[%c0_124, %c2_125, %c0_126, %c0_127, %c0_128], %144 {strides = array<i32>} : memref<1x4x7x16x128xf32, #tpu.memory_space<vmem>>, vector<1x1x1x16x128xf32>,
      %c0_129 = arith.constant 0 : index
      %c3_130 = arith.constant 3 : index
      %c0_131 = arith.constant 0 : index
      %c0_132 = arith.constant 0 : index
      %c0_133 = arith.constant 0 : index
      %145 = vector.load %arg3[%c0_129, %c3_130, %c0_131, %c0_132, %c0_133] : memref<1x4x7x16x128xf32, #tpu.memory_space<vmem>>, vector<1x1x1x16x128xf32>
      %146 = vector.shape_cast %145 : vector<1x1x1x16x128xf32> to vector<16x128xf32>
      %147 = vector.shape_cast %141 : vector<16x128xf32> to vector<1x1x1x16x128xf32>
      tpu.vector_store %arg3[%c0_129, %c3_130, %c0_131, %c0_132, %c0_133], %147 {strides = array<i32>} : memref<1x4x7x16x128xf32, #tpu.memory_space<vmem>>, vector<1x1x1x16x128xf32>,
      %c0_134 = arith.constant 0 : index
      %c1_135 = arith.constant 1 : index
      %c0_136 = arith.constant 0 : index
      %c0_137 = arith.constant 0 : index
      %148 = vector.load %arg4[%c0_134, %c1_135, %c0_136, %c0_137] : memref<3x5x16x128xf32, #tpu.memory_space<vmem>>, vector<1x1x16x128xf32>
      %149 = vector.shape_cast %148 : vector<1x1x16x128xf32> to vector<16x128xf32>
      %c1_i32_138 = arith.constant 1 : i32
      %150 = tpu.dynamic_rotate %149 by %c1_i32_138 dim 0 : vector<16x128xf32>, i32 -> vector<16x128xf32>
      %cst_139 = arith.constant 0.000000e+00 : f32
      %151 = vector.broadcast %cst_139 : f32 to vector<16x128xf32>
      %152 = arith.select %11, %150, %151 : vector<16x128xi1>, vector<16x128xf32>
      %153 = arith.subf %15, %152 : vector<16x128xf32>
      %c1_140 = arith.constant 1 : index
      %c1_141 = arith.constant 1 : index
      %c0_142 = arith.constant 0 : index
      %c0_143 = arith.constant 0 : index
      %154 = vector.load %arg4[%c1_140, %c1_141, %c0_142, %c0_143] : memref<3x5x16x128xf32, #tpu.memory_space<vmem>>, vector<1x1x16x128xf32>
      %155 = vector.shape_cast %154 : vector<1x1x16x128xf32> to vector<16x128xf32>
      %c1_i32_144 = arith.constant 1 : i32
      %156 = tpu.dynamic_rotate %155 by %c1_i32_144 dim 0 : vector<16x128xf32>, i32 -> vector<16x128xf32>
      %cst_145 = arith.constant 0.000000e+00 : f32
      %157 = vector.broadcast %cst_145 : f32 to vector<16x128xf32>
      %158 = arith.select %11, %156, %157 : vector<16x128xi1>, vector<16x128xf32>
      %159 = arith.subf %17, %158 : vector<16x128xf32>
      %c2_146 = arith.constant 2 : index
      %c1_147 = arith.constant 1 : index
      %c0_148 = arith.constant 0 : index
      %c0_149 = arith.constant 0 : index
      %160 = vector.load %arg4[%c2_146, %c1_147, %c0_148, %c0_149] : memref<3x5x16x128xf32, #tpu.memory_space<vmem>>, vector<1x1x16x128xf32>
      %161 = vector.shape_cast %160 : vector<1x1x16x128xf32> to vector<16x128xf32>
      %c1_i32_150 = arith.constant 1 : i32
      %162 = tpu.dynamic_rotate %161 by %c1_i32_150 dim 0 : vector<16x128xf32>, i32 -> vector<16x128xf32>
      %cst_151 = arith.constant 0.000000e+00 : f32
      %163 = vector.broadcast %cst_151 : f32 to vector<16x128xf32>
      %164 = arith.select %11, %162, %163 : vector<16x128xi1>, vector<16x128xf32>
      %165 = arith.subf %19, %164 : vector<16x128xf32>
      %166 = arith.mulf %153, %153 : vector<16x128xf32>
      %167 = arith.mulf %159, %159 : vector<16x128xf32>
      %168 = arith.addf %166, %167 : vector<16x128xf32>
      %169 = arith.mulf %165, %165 : vector<16x128xf32>
      %170 = arith.addf %168, %169 : vector<16x128xf32>
      %cst_152 = arith.constant -2222.22217 : f32
      %171 = vector.broadcast %cst_152 : f32 to vector<16x128xf32>
      %172 = arith.mulf %170, %171 : vector<16x128xf32>
      %173 = math.exp %172 : vector<16x128xf32>
      %c0_153 = arith.constant 0 : index
      %c0_154 = arith.constant 0 : index
      %c1_155 = arith.constant 1 : index
      %c0_156 = arith.constant 0 : index
      %c0_157 = arith.constant 0 : index
      %174 = vector.load %arg3[%c0_153, %c0_154, %c1_155, %c0_156, %c0_157] : memref<1x4x7x16x128xf32, #tpu.memory_space<vmem>>, vector<1x1x1x16x128xf32>
      %175 = vector.shape_cast %174 : vector<1x1x1x16x128xf32> to vector<16x128xf32>
      %176 = vector.shape_cast %173 : vector<16x128xf32> to vector<1x1x1x16x128xf32>
      tpu.vector_store %arg3[%c0_153, %c0_154, %c1_155, %c0_156, %c0_157], %176 {strides = array<i32>} : memref<1x4x7x16x128xf32, #tpu.memory_space<vmem>>, vector<1x1x1x16x128xf32>,
      %c0_158 = arith.constant 0 : index
      %c1_159 = arith.constant 1 : index
      %c1_160 = arith.constant 1 : index
      %c0_161 = arith.constant 0 : index
      %c0_162 = arith.constant 0 : index
      %177 = vector.load %arg3[%c0_158, %c1_159, %c1_160, %c0_161, %c0_162] : memref<1x4x7x16x128xf32, #tpu.memory_space<vmem>>, vector<1x1x1x16x128xf32>
      %178 = vector.shape_cast %177 : vector<1x1x1x16x128xf32> to vector<16x128xf32>
      %179 = vector.shape_cast %173 : vector<16x128xf32> to vector<1x1x1x16x128xf32>
      tpu.vector_store %arg3[%c0_158, %c1_159, %c1_160, %c0_161, %c0_162], %179 {strides = array<i32>} : memref<1x4x7x16x128xf32, #tpu.memory_space<vmem>>, vector<1x1x1x16x128xf32>,
      %cst_163 = arith.constant -5.000000e+03 : f32
      %180 = vector.broadcast %cst_163 : f32 to vector<16x128xf32>
      %181 = arith.mulf %170, %180 : vector<16x128xf32>
      %182 = math.exp %181 : vector<16x128xf32>
      %c0_164 = arith.constant 0 : index
      %c2_165 = arith.constant 2 : index
      %c1_166 = arith.constant 1 : index
      %c0_167 = arith.constant 0 : index
      %c0_168 = arith.constant 0 : index
      %183 = vector.load %arg3[%c0_164, %c2_165, %c1_166, %c0_167, %c0_168] : memref<1x4x7x16x128xf32, #tpu.memory_space<vmem>>, vector<1x1x1x16x128xf32>
      %184 = vector.shape_cast %183 : vector<1x1x1x16x128xf32> to vector<16x128xf32>
      %185 = vector.shape_cast %182 : vector<16x128xf32> to vector<1x1x1x16x128xf32>
      tpu.vector_store %arg3[%c0_164, %c2_165, %c1_166, %c0_167, %c0_168], %185 {strides = array<i32>} : memref<1x4x7x16x128xf32, #tpu.memory_space<vmem>>, vector<1x1x1x16x128xf32>,
      %c0_169 = arith.constant 0 : index
      %c3_170 = arith.constant 3 : index
      %c1_171 = arith.constant 1 : index
      %c0_172 = arith.constant 0 : index
      %c0_173 = arith.constant 0 : index
      %186 = vector.load %arg3[%c0_169, %c3_170, %c1_171, %c0_172, %c0_173] : memref<1x4x7x16x128xf32, #tpu.memory_space<vmem>>, vector<1x1x1x16x128xf32>
      %187 = vector.shape_cast %186 : vector<1x1x1x16x128xf32> to vector<16x128xf32>
      %188 = vector.shape_cast %182 : vector<16x128xf32> to vector<1x1x1x16x128xf32>
      tpu.vector_store %arg3[%c0_169, %c3_170, %c1_171, %c0_172, %c0_173], %188 {strides = array<i32>} : memref<1x4x7x16x128xf32, #tpu.memory_space<vmem>>, vector<1x1x1x16x128xf32>,
      %c1_i32_174 = arith.constant 1 : i32
      %189 = tpu.dynamic_rotate %15 by %c1_i32_174 dim 0 : vector<16x128xf32>, i32 -> vector<16x128xf32>
      %cst_175 = arith.constant 0.000000e+00 : f32
      %190 = vector.broadcast %cst_175 : f32 to vector<16x128xf32>
      %191 = arith.select %11, %189, %190 : vector<16x128xi1>, vector<16x128xf32>
      %192 = arith.subf %15, %191 : vector<16x128xf32>
      %c1_i32_176 = arith.constant 1 : i32
      %193 = tpu.dynamic_rotate %17 by %c1_i32_176 dim 0 : vector<16x128xf32>, i32 -> vector<16x128xf32>
      %cst_177 = arith.constant 0.000000e+00 : f32
      %194 = vector.broadcast %cst_177 : f32 to vector<16x128xf32>
      %195 = arith.select %11, %193, %194 : vector<16x128xi1>, vector<16x128xf32>
      %196 = arith.subf %17, %195 : vector<16x128xf32>
      %c1_i32_178 = arith.constant 1 : i32
      %197 = tpu.dynamic_rotate %19 by %c1_i32_178 dim 0 : vector<16x128xf32>, i32 -> vector<16x128xf32>
      %cst_179 = arith.constant 0.000000e+00 : f32
      %198 = vector.broadcast %cst_179 : f32 to vector<16x128xf32>
      %199 = arith.select %11, %197, %198 : vector<16x128xi1>, vector<16x128xf32>
      %200 = arith.subf %19, %199 : vector<16x128xf32>
      %201 = arith.mulf %192, %192 : vector<16x128xf32>
      %202 = arith.mulf %196, %196 : vector<16x128xf32>
      %203 = arith.addf %201, %202 : vector<16x128xf32>
      %204 = arith.mulf %200, %200 : vector<16x128xf32>
      %205 = arith.addf %203, %204 : vector<16x128xf32>
      %cst_180 = arith.constant -2222.22217 : f32
      %206 = vector.broadcast %cst_180 : f32 to vector<16x128xf32>
      %207 = arith.mulf %205, %206 : vector<16x128xf32>
      %208 = math.exp %207 : vector<16x128xf32>
      %c0_181 = arith.constant 0 : index
      %c0_182 = arith.constant 0 : index
      %c2_183 = arith.constant 2 : index
      %c0_184 = arith.constant 0 : index
      %c0_185 = arith.constant 0 : index
      %209 = vector.load %arg3[%c0_181, %c0_182, %c2_183, %c0_184, %c0_185] : memref<1x4x7x16x128xf32, #tpu.memory_space<vmem>>, vector<1x1x1x16x128xf32>
      %210 = vector.shape_cast %209 : vector<1x1x1x16x128xf32> to vector<16x128xf32>
      %211 = vector.shape_cast %208 : vector<16x128xf32> to vector<1x1x1x16x128xf32>
      tpu.vector_store %arg3[%c0_181, %c0_182, %c2_183, %c0_184, %c0_185], %211 {strides = array<i32>} : memref<1x4x7x16x128xf32, #tpu.memory_space<vmem>>, vector<1x1x1x16x128xf32>,
      %c0_186 = arith.constant 0 : index
      %c1_187 = arith.constant 1 : index
      %c2_188 = arith.constant 2 : index
      %c0_189 = arith.constant 0 : index
      %c0_190 = arith.constant 0 : index
      %212 = vector.load %arg3[%c0_186, %c1_187, %c2_188, %c0_189, %c0_190] : memref<1x4x7x16x128xf32, #tpu.memory_space<vmem>>, vector<1x1x1x16x128xf32>
      %213 = vector.shape_cast %212 : vector<1x1x1x16x128xf32> to vector<16x128xf32>
      %214 = vector.shape_cast %208 : vector<16x128xf32> to vector<1x1x1x16x128xf32>
      tpu.vector_store %arg3[%c0_186, %c1_187, %c2_188, %c0_189, %c0_190], %214 {strides = array<i32>} : memref<1x4x7x16x128xf32, #tpu.memory_space<vmem>>, vector<1x1x1x16x128xf32>,
      %cst_191 = arith.constant -5.000000e+03 : f32
      %215 = vector.broadcast %cst_191 : f32 to vector<16x128xf32>
      %216 = arith.mulf %205, %215 : vector<16x128xf32>
      %217 = math.exp %216 : vector<16x128xf32>
      %c0_192 = arith.constant 0 : index
      %c2_193 = arith.constant 2 : index
      %c2_194 = arith.constant 2 : index
      %c0_195 = arith.constant 0 : index
      %c0_196 = arith.constant 0 : index
      %218 = vector.load %arg3[%c0_192, %c2_193, %c2_194, %c0_195, %c0_196] : memref<1x4x7x16x128xf32, #tpu.memory_space<vmem>>, vector<1x1x1x16x128xf32>
      %219 = vector.shape_cast %218 : vector<1x1x1x16x128xf32> to vector<16x128xf32>
      %220 = vector.shape_cast %217 : vector<16x128xf32> to vector<1x1x1x16x128xf32>
      tpu.vector_store %arg3[%c0_192, %c2_193, %c2_194, %c0_195, %c0_196], %220 {strides = array<i32>} : memref<1x4x7x16x128xf32, #tpu.memory_space<vmem>>, vector<1x1x1x16x128xf32>,
      %c0_197 = arith.constant 0 : index
      %c3_198 = arith.constant 3 : index
      %c2_199 = arith.constant 2 : index
      %c0_200 = arith.constant 0 : index
      %c0_201 = arith.constant 0 : index
      %221 = vector.load %arg3[%c0_197, %c3_198, %c2_199, %c0_200, %c0_201] : memref<1x4x7x16x128xf32, #tpu.memory_space<vmem>>, vector<1x1x1x16x128xf32>
      %222 = vector.shape_cast %221 : vector<1x1x1x16x128xf32> to vector<16x128xf32>
      %223 = vector.shape_cast %217 : vector<16x128xf32> to vector<1x1x1x16x128xf32>
      tpu.vector_store %arg3[%c0_197, %c3_198, %c2_199, %c0_200, %c0_201], %223 {strides = array<i32>} : memref<1x4x7x16x128xf32, #tpu.memory_space<vmem>>, vector<1x1x1x16x128xf32>,
      %c0_202 = arith.constant 0 : index
      %c3_203 = arith.constant 3 : index
      %c0_204 = arith.constant 0 : index
      %c0_205 = arith.constant 0 : index
      %224 = vector.load %arg4[%c0_202, %c3_203, %c0_204, %c0_205] : memref<3x5x16x128xf32, #tpu.memory_space<vmem>>, vector<1x1x16x128xf32>
      %225 = vector.shape_cast %224 : vector<1x1x16x128xf32> to vector<16x128xf32>
      %c1_i32_206 = arith.constant 1 : i32
      %226 = tpu.dynamic_rotate %225 by %c1_i32_206 dim 0 : vector<16x128xf32>, i32 -> vector<16x128xf32>
      %cst_207 = arith.constant 0.000000e+00 : f32
      %227 = vector.broadcast %cst_207 : f32 to vector<16x128xf32>
      %228 = arith.select %11, %226, %227 : vector<16x128xi1>, vector<16x128xf32>
      %229 = arith.subf %15, %228 : vector<16x128xf32>
      %c1_208 = arith.constant 1 : index
      %c3_209 = arith.constant 3 : index
      %c0_210 = arith.constant 0 : index
      %c0_211 = arith.constant 0 : index
      %230 = vector.load %arg4[%c1_208, %c3_209, %c0_210, %c0_211] : memref<3x5x16x128xf32, #tpu.memory_space<vmem>>, vector<1x1x16x128xf32>
      %231 = vector.shape_cast %230 : vector<1x1x16x128xf32> to vector<16x128xf32>
      %c1_i32_212 = arith.constant 1 : i32
      %232 = tpu.dynamic_rotate %231 by %c1_i32_212 dim 0 : vector<16x128xf32>, i32 -> vector<16x128xf32>
      %cst_213 = arith.constant 0.000000e+00 : f32
      %233 = vector.broadcast %cst_213 : f32 to vector<16x128xf32>
      %234 = arith.select %11, %232, %233 : vector<16x128xi1>, vector<16x128xf32>
      %235 = arith.subf %17, %234 : vector<16x128xf32>
      %c2_214 = arith.constant 2 : index
      %c3_215 = arith.constant 3 : index
      %c0_216 = arith.constant 0 : index
      %c0_217 = arith.constant 0 : index
      %236 = vector.load %arg4[%c2_214, %c3_215, %c0_216, %c0_217] : memref<3x5x16x128xf32, #tpu.memory_space<vmem>>, vector<1x1x16x128xf32>
      %237 = vector.shape_cast %236 : vector<1x1x16x128xf32> to vector<16x128xf32>
      %c1_i32_218 = arith.constant 1 : i32
      %238 = tpu.dynamic_rotate %237 by %c1_i32_218 dim 0 : vector<16x128xf32>, i32 -> vector<16x128xf32>
      %cst_219 = arith.constant 0.000000e+00 : f32
      %239 = vector.broadcast %cst_219 : f32 to vector<16x128xf32>
      %240 = arith.select %11, %238, %239 : vector<16x128xi1>, vector<16x128xf32>
      %241 = arith.subf %19, %240 : vector<16x128xf32>
      %242 = arith.mulf %229, %229 : vector<16x128xf32>
      %243 = arith.mulf %235, %235 : vector<16x128xf32>
      %244 = arith.addf %242, %243 : vector<16x128xf32>
      %245 = arith.mulf %241, %241 : vector<16x128xf32>
      %246 = arith.addf %244, %245 : vector<16x128xf32>
      %cst_220 = arith.constant -2222.22217 : f32
      %247 = vector.broadcast %cst_220 : f32 to vector<16x128xf32>
      %248 = arith.mulf %246, %247 : vector<16x128xf32>
      %249 = math.exp %248 : vector<16x128xf32>
      %c0_221 = arith.constant 0 : index
      %c0_222 = arith.constant 0 : index
      %c3_223 = arith.constant 3 : index
      %c0_224 = arith.constant 0 : index
      %c0_225 = arith.constant 0 : index
      %250 = vector.load %arg3[%c0_221, %c0_222, %c3_223, %c0_224, %c0_225] : memref<1x4x7x16x128xf32, #tpu.memory_space<vmem>>, vector<1x1x1x16x128xf32>
      %251 = vector.shape_cast %250 : vector<1x1x1x16x128xf32> to vector<16x128xf32>
      %252 = vector.shape_cast %249 : vector<16x128xf32> to vector<1x1x1x16x128xf32>
      tpu.vector_store %arg3[%c0_221, %c0_222, %c3_223, %c0_224, %c0_225], %252 {strides = array<i32>} : memref<1x4x7x16x128xf32, #tpu.memory_space<vmem>>, vector<1x1x1x16x128xf32>,
      %c0_226 = arith.constant 0 : index
      %c1_227 = arith.constant 1 : index
      %c3_228 = arith.constant 3 : index
      %c0_229 = arith.constant 0 : index
      %c0_230 = arith.constant 0 : index
      %253 = vector.load %arg3[%c0_226, %c1_227, %c3_228, %c0_229, %c0_230] : memref<1x4x7x16x128xf32, #tpu.memory_space<vmem>>, vector<1x1x1x16x128xf32>
      %254 = vector.shape_cast %253 : vector<1x1x1x16x128xf32> to vector<16x128xf32>
      %255 = vector.shape_cast %249 : vector<16x128xf32> to vector<1x1x1x16x128xf32>
      tpu.vector_store %arg3[%c0_226, %c1_227, %c3_228, %c0_229, %c0_230], %255 {strides = array<i32>} : memref<1x4x7x16x128xf32, #tpu.memory_space<vmem>>, vector<1x1x1x16x128xf32>,
      %cst_231 = arith.constant -5.000000e+03 : f32
      %256 = vector.broadcast %cst_231 : f32 to vector<16x128xf32>
      %257 = arith.mulf %246, %256 : vector<16x128xf32>
      %258 = math.exp %257 : vector<16x128xf32>
      %c0_232 = arith.constant 0 : index
      %c2_233 = arith.constant 2 : index
      %c3_234 = arith.constant 3 : index
      %c0_235 = arith.constant 0 : index
      %c0_236 = arith.constant 0 : index
      %259 = vector.load %arg3[%c0_232, %c2_233, %c3_234, %c0_235, %c0_236] : memref<1x4x7x16x128xf32, #tpu.memory_space<vmem>>, vector<1x1x1x16x128xf32>
      %260 = vector.shape_cast %259 : vector<1x1x1x16x128xf32> to vector<16x128xf32>
      %261 = vector.shape_cast %258 : vector<16x128xf32> to vector<1x1x1x16x128xf32>
      tpu.vector_store %arg3[%c0_232, %c2_233, %c3_234, %c0_235, %c0_236], %261 {strides = array<i32>} : memref<1x4x7x16x128xf32, #tpu.memory_space<vmem>>, vector<1x1x1x16x128xf32>,
      %c0_237 = arith.constant 0 : index
      %c3_238 = arith.constant 3 : index
      %c3_239 = arith.constant 3 : index
      %c0_240 = arith.constant 0 : index
      %c0_241 = arith.constant 0 : index
      %262 = vector.load %arg3[%c0_237, %c3_238, %c3_239, %c0_240, %c0_241] : memref<1x4x7x16x128xf32, #tpu.memory_space<vmem>>, vector<1x1x1x16x128xf32>
      %263 = vector.shape_cast %262 : vector<1x1x1x16x128xf32> to vector<16x128xf32>
      %264 = vector.shape_cast %258 : vector<16x128xf32> to vector<1x1x1x16x128xf32>
      tpu.vector_store %arg3[%c0_237, %c3_238, %c3_239, %c0_240, %c0_241], %264 {strides = array<i32>} : memref<1x4x7x16x128xf32, #tpu.memory_space<vmem>>, vector<1x1x1x16x128xf32>,
      %c0_242 = arith.constant 0 : index
      %c4_243 = arith.constant 4 : index
      %c0_244 = arith.constant 0 : index
      %c0_245 = arith.constant 0 : index
      %265 = vector.load %arg4[%c0_242, %c4_243, %c0_244, %c0_245] : memref<3x5x16x128xf32, #tpu.memory_space<vmem>>, vector<1x1x16x128xf32>
      %266 = vector.shape_cast %265 : vector<1x1x16x128xf32> to vector<16x128xf32>
      %c1_i32_246 = arith.constant 1 : i32
      %267 = tpu.dynamic_rotate %266 by %c1_i32_246 dim 0 : vector<16x128xf32>, i32 -> vector<16x128xf32>
      %cst_247 = arith.constant 0.000000e+00 : f32
      %268 = vector.broadcast %cst_247 : f32 to vector<16x128xf32>
      %269 = arith.select %11, %267, %268 : vector<16x128xi1>, vector<16x128xf32>
      %270 = arith.subf %15, %269 : vector<16x128xf32>
      %c1_248 = arith.constant 1 : index
      %c4_249 = arith.constant 4 : index
      %c0_250 = arith.constant 0 : index
      %c0_251 = arith.constant 0 : index
      %271 = vector.load %arg4[%c1_248, %c4_249, %c0_250, %c0_251] : memref<3x5x16x128xf32, #tpu.memory_space<vmem>>, vector<1x1x16x128xf32>
      %272 = vector.shape_cast %271 : vector<1x1x16x128xf32> to vector<16x128xf32>
      %c1_i32_252 = arith.constant 1 : i32
      %273 = tpu.dynamic_rotate %272 by %c1_i32_252 dim 0 : vector<16x128xf32>, i32 -> vector<16x128xf32>
      %cst_253 = arith.constant 0.000000e+00 : f32
      %274 = vector.broadcast %cst_253 : f32 to vector<16x128xf32>
      %275 = arith.select %11, %273, %274 : vector<16x128xi1>, vector<16x128xf32>
      %276 = arith.subf %17, %275 : vector<16x128xf32>
      %c2_254 = arith.constant 2 : index
      %c4_255 = arith.constant 4 : index
      %c0_256 = arith.constant 0 : index
      %c0_257 = arith.constant 0 : index
      %277 = vector.load %arg4[%c2_254, %c4_255, %c0_256, %c0_257] : memref<3x5x16x128xf32, #tpu.memory_space<vmem>>, vector<1x1x16x128xf32>
      %278 = vector.shape_cast %277 : vector<1x1x16x128xf32> to vector<16x128xf32>
      %c1_i32_258 = arith.constant 1 : i32
      %279 = tpu.dynamic_rotate %278 by %c1_i32_258 dim 0 : vector<16x128xf32>, i32 -> vector<16x128xf32>
      %cst_259 = arith.constant 0.000000e+00 : f32
      %280 = vector.broadcast %cst_259 : f32 to vector<16x128xf32>
      %281 = arith.select %11, %279, %280 : vector<16x128xi1>, vector<16x128xf32>
      %282 = arith.subf %19, %281 : vector<16x128xf32>
      %283 = arith.mulf %270, %270 : vector<16x128xf32>
      %284 = arith.mulf %276, %276 : vector<16x128xf32>
      %285 = arith.addf %283, %284 : vector<16x128xf32>
      %286 = arith.mulf %282, %282 : vector<16x128xf32>
      %287 = arith.addf %285, %286 : vector<16x128xf32>
      %cst_260 = arith.constant -2222.22217 : f32
      %288 = vector.broadcast %cst_260 : f32 to vector<16x128xf32>
      %289 = arith.mulf %287, %288 : vector<16x128xf32>
      %290 = math.exp %289 : vector<16x128xf32>
      %c0_261 = arith.constant 0 : index
      %c0_262 = arith.constant 0 : index
      %c4_263 = arith.constant 4 : index
      %c0_264 = arith.constant 0 : index
      %c0_265 = arith.constant 0 : index
      %291 = vector.load %arg3[%c0_261, %c0_262, %c4_263, %c0_264, %c0_265] : memref<1x4x7x16x128xf32, #tpu.memory_space<vmem>>, vector<1x1x1x16x128xf32>
      %292 = vector.shape_cast %291 : vector<1x1x1x16x128xf32> to vector<16x128xf32>
      %293 = vector.shape_cast %290 : vector<16x128xf32> to vector<1x1x1x16x128xf32>
      tpu.vector_store %arg3[%c0_261, %c0_262, %c4_263, %c0_264, %c0_265], %293 {strides = array<i32>} : memref<1x4x7x16x128xf32, #tpu.memory_space<vmem>>, vector<1x1x1x16x128xf32>,
      %c0_266 = arith.constant 0 : index
      %c1_267 = arith.constant 1 : index
      %c4_268 = arith.constant 4 : index
      %c0_269 = arith.constant 0 : index
      %c0_270 = arith.constant 0 : index
      %294 = vector.load %arg3[%c0_266, %c1_267, %c4_268, %c0_269, %c0_270] : memref<1x4x7x16x128xf32, #tpu.memory_space<vmem>>, vector<1x1x1x16x128xf32>
      %295 = vector.shape_cast %294 : vector<1x1x1x16x128xf32> to vector<16x128xf32>
      %296 = vector.shape_cast %290 : vector<16x128xf32> to vector<1x1x1x16x128xf32>
      tpu.vector_store %arg3[%c0_266, %c1_267, %c4_268, %c0_269, %c0_270], %296 {strides = array<i32>} : memref<1x4x7x16x128xf32, #tpu.memory_space<vmem>>, vector<1x1x1x16x128xf32>,
      %cst_271 = arith.constant -5.000000e+03 : f32
      %297 = vector.broadcast %cst_271 : f32 to vector<16x128xf32>
      %298 = arith.mulf %287, %297 : vector<16x128xf32>
      %299 = math.exp %298 : vector<16x128xf32>
      %c0_272 = arith.constant 0 : index
      %c2_273 = arith.constant 2 : index
      %c4_274 = arith.constant 4 : index
      %c0_275 = arith.constant 0 : index
      %c0_276 = arith.constant 0 : index
      %300 = vector.load %arg3[%c0_272, %c2_273, %c4_274, %c0_275, %c0_276] : memref<1x4x7x16x128xf32, #tpu.memory_space<vmem>>, vector<1x1x1x16x128xf32>
      %301 = vector.shape_cast %300 : vector<1x1x1x16x128xf32> to vector<16x128xf32>
      %302 = vector.shape_cast %299 : vector<16x128xf32> to vector<1x1x1x16x128xf32>
      tpu.vector_store %arg3[%c0_272, %c2_273, %c4_274, %c0_275, %c0_276], %302 {strides = array<i32>} : memref<1x4x7x16x128xf32, #tpu.memory_space<vmem>>, vector<1x1x1x16x128xf32>,
      %c0_277 = arith.constant 0 : index
      %c3_278 = arith.constant 3 : index
      %c4_279 = arith.constant 4 : index
      %c0_280 = arith.constant 0 : index
      %c0_281 = arith.constant 0 : index
      %303 = vector.load %arg3[%c0_277, %c3_278, %c4_279, %c0_280, %c0_281] : memref<1x4x7x16x128xf32, #tpu.memory_space<vmem>>, vector<1x1x1x16x128xf32>
      %304 = vector.shape_cast %303 : vector<1x1x1x16x128xf32> to vector<16x128xf32>
      %305 = vector.shape_cast %299 : vector<16x128xf32> to vector<1x1x1x16x128xf32>
      tpu.vector_store %arg3[%c0_277, %c3_278, %c4_279, %c0_280, %c0_281], %305 {strides = array<i32>} : memref<1x4x7x16x128xf32, #tpu.memory_space<vmem>>, vector<1x1x1x16x128xf32>,
      %c0_282 = arith.constant 0 : index
      %c0_283 = arith.constant 0 : index
      %c0_284 = arith.constant 0 : index
      %c0_285 = arith.constant 0 : index
      %306 = vector.load %arg4[%c0_282, %c0_283, %c0_284, %c0_285] : memref<3x5x16x128xf32, #tpu.memory_space<vmem>>, vector<1x1x16x128xf32>
      %307 = vector.shape_cast %306 : vector<1x1x16x128xf32> to vector<16x128xf32>
      %308 = arith.subf %15, %307 : vector<16x128xf32>
      %c1_286 = arith.constant 1 : index
      %c0_287 = arith.constant 0 : index
      %c0_288 = arith.constant 0 : index
      %c0_289 = arith.constant 0 : index
      %309 = vector.load %arg4[%c1_286, %c0_287, %c0_288, %c0_289] : memref<3x5x16x128xf32, #tpu.memory_space<vmem>>, vector<1x1x16x128xf32>
      %310 = vector.shape_cast %309 : vector<1x1x16x128xf32> to vector<16x128xf32>
      %311 = arith.subf %17, %310 : vector<16x128xf32>
      %c2_290 = arith.constant 2 : index
      %c0_291 = arith.constant 0 : index
      %c0_292 = arith.constant 0 : index
      %c0_293 = arith.constant 0 : index
      %312 = vector.load %arg4[%c2_290, %c0_291, %c0_292, %c0_293] : memref<3x5x16x128xf32, #tpu.memory_space<vmem>>, vector<1x1x16x128xf32>
      %313 = vector.shape_cast %312 : vector<1x1x16x128xf32> to vector<16x128xf32>
      %314 = arith.subf %19, %313 : vector<16x128xf32>
      %315 = arith.mulf %308, %308 : vector<16x128xf32>
      %316 = arith.mulf %311, %311 : vector<16x128xf32>
      %317 = arith.addf %315, %316 : vector<16x128xf32>
      %318 = arith.mulf %314, %314 : vector<16x128xf32>
      %319 = arith.addf %317, %318 : vector<16x128xf32>
      %cst_294 = arith.constant -2222.22217 : f32
      %320 = vector.broadcast %cst_294 : f32 to vector<16x128xf32>
      %321 = arith.mulf %319, %320 : vector<16x128xf32>
      %322 = math.exp %321 : vector<16x128xf32>
      %c0_295 = arith.constant 0 : index
      %c0_296 = arith.constant 0 : index
      %c5 = arith.constant 5 : index
      %c0_297 = arith.constant 0 : index
      %c0_298 = arith.constant 0 : index
      %323 = vector.load %arg3[%c0_295, %c0_296, %c5, %c0_297, %c0_298] : memref<1x4x7x16x128xf32, #tpu.memory_space<vmem>>, vector<1x1x1x16x128xf32>
      %324 = vector.shape_cast %323 : vector<1x1x1x16x128xf32> to vector<16x128xf32>
      %325 = vector.shape_cast %322 : vector<16x128xf32> to vector<1x1x1x16x128xf32>
      tpu.vector_store %arg3[%c0_295, %c0_296, %c5, %c0_297, %c0_298], %325 {strides = array<i32>} : memref<1x4x7x16x128xf32, #tpu.memory_space<vmem>>, vector<1x1x1x16x128xf32>,
      %c0_299 = arith.constant 0 : index
      %c1_300 = arith.constant 1 : index
      %c5_301 = arith.constant 5 : index
      %c0_302 = arith.constant 0 : index
      %c0_303 = arith.constant 0 : index
      %326 = vector.load %arg3[%c0_299, %c1_300, %c5_301, %c0_302, %c0_303] : memref<1x4x7x16x128xf32, #tpu.memory_space<vmem>>, vector<1x1x1x16x128xf32>
      %327 = vector.shape_cast %326 : vector<1x1x1x16x128xf32> to vector<16x128xf32>
      %328 = vector.shape_cast %322 : vector<16x128xf32> to vector<1x1x1x16x128xf32>
      tpu.vector_store %arg3[%c0_299, %c1_300, %c5_301, %c0_302, %c0_303], %328 {strides = array<i32>} : memref<1x4x7x16x128xf32, #tpu.memory_space<vmem>>, vector<1x1x1x16x128xf32>,
      %cst_304 = arith.constant -5.000000e+03 : f32
      %329 = vector.broadcast %cst_304 : f32 to vector<16x128xf32>
      %330 = arith.mulf %319, %329 : vector<16x128xf32>
      %331 = math.exp %330 : vector<16x128xf32>
      %c0_305 = arith.constant 0 : index
      %c2_306 = arith.constant 2 : index
      %c5_307 = arith.constant 5 : index
      %c0_308 = arith.constant 0 : index
      %c0_309 = arith.constant 0 : index
      %332 = vector.load %arg3[%c0_305, %c2_306, %c5_307, %c0_308, %c0_309] : memref<1x4x7x16x128xf32, #tpu.memory_space<vmem>>, vector<1x1x1x16x128xf32>
      %333 = vector.shape_cast %332 : vector<1x1x1x16x128xf32> to vector<16x128xf32>
      %334 = vector.shape_cast %331 : vector<16x128xf32> to vector<1x1x1x16x128xf32>
      tpu.vector_store %arg3[%c0_305, %c2_306, %c5_307, %c0_308, %c0_309], %334 {strides = array<i32>} : memref<1x4x7x16x128xf32, #tpu.memory_space<vmem>>, vector<1x1x1x16x128xf32>,
      %c0_310 = arith.constant 0 : index
      %c3_311 = arith.constant 3 : index
      %c5_312 = arith.constant 5 : index
      %c0_313 = arith.constant 0 : index
      %c0_314 = arith.constant 0 : index
      %335 = vector.load %arg3[%c0_310, %c3_311, %c5_312, %c0_313, %c0_314] : memref<1x4x7x16x128xf32, #tpu.memory_space<vmem>>, vector<1x1x1x16x128xf32>
      %336 = vector.shape_cast %335 : vector<1x1x1x16x128xf32> to vector<16x128xf32>
      %337 = vector.shape_cast %331 : vector<16x128xf32> to vector<1x1x1x16x128xf32>
      tpu.vector_store %arg3[%c0_310, %c3_311, %c5_312, %c0_313, %c0_314], %337 {strides = array<i32>} : memref<1x4x7x16x128xf32, #tpu.memory_space<vmem>>, vector<1x1x1x16x128xf32>,
      %c0_315 = arith.constant 0 : index
      %c1_316 = arith.constant 1 : index
      %c0_317 = arith.constant 0 : index
      %c0_318 = arith.constant 0 : index
      %338 = vector.load %arg4[%c0_315, %c1_316, %c0_317, %c0_318] : memref<3x5x16x128xf32, #tpu.memory_space<vmem>>, vector<1x1x16x128xf32>
      %339 = vector.shape_cast %338 : vector<1x1x16x128xf32> to vector<16x128xf32>
      %340 = arith.subf %15, %339 : vector<16x128xf32>
      %c1_319 = arith.constant 1 : index
      %c1_320 = arith.constant 1 : index
      %c0_321 = arith.constant 0 : index
      %c0_322 = arith.constant 0 : index
      %341 = vector.load %arg4[%c1_319, %c1_320, %c0_321, %c0_322] : memref<3x5x16x128xf32, #tpu.memory_space<vmem>>, vector<1x1x16x128xf32>
      %342 = vector.shape_cast %341 : vector<1x1x16x128xf32> to vector<16x128xf32>
      %343 = arith.subf %17, %342 : vector<16x128xf32>
      %c2_323 = arith.constant 2 : index
      %c1_324 = arith.constant 1 : index
      %c0_325 = arith.constant 0 : index
      %c0_326 = arith.constant 0 : index
      %344 = vector.load %arg4[%c2_323, %c1_324, %c0_325, %c0_326] : memref<3x5x16x128xf32, #tpu.memory_space<vmem>>, vector<1x1x16x128xf32>
      %345 = vector.shape_cast %344 : vector<1x1x16x128xf32> to vector<16x128xf32>
      %346 = arith.subf %19, %345 : vector<16x128xf32>
      %347 = arith.mulf %340, %340 : vector<16x128xf32>
      %348 = arith.mulf %343, %343 : vector<16x128xf32>
      %349 = arith.addf %347, %348 : vector<16x128xf32>
      %350 = arith.mulf %346, %346 : vector<16x128xf32>
      %351 = arith.addf %349, %350 : vector<16x128xf32>
      %cst_327 = arith.constant -2222.22217 : f32
      %352 = vector.broadcast %cst_327 : f32 to vector<16x128xf32>
      %353 = arith.mulf %351, %352 : vector<16x128xf32>
      %354 = math.exp %353 : vector<16x128xf32>
      %c0_328 = arith.constant 0 : index
      %c0_329 = arith.constant 0 : index
      %c6 = arith.constant 6 : index
      %c0_330 = arith.constant 0 : index
      %c0_331 = arith.constant 0 : index
      %355 = vector.load %arg3[%c0_328, %c0_329, %c6, %c0_330, %c0_331] : memref<1x4x7x16x128xf32, #tpu.memory_space<vmem>>, vector<1x1x1x16x128xf32>
      %356 = vector.shape_cast %355 : vector<1x1x1x16x128xf32> to vector<16x128xf32>
      %357 = vector.shape_cast %354 : vector<16x128xf32> to vector<1x1x1x16x128xf32>
      tpu.vector_store %arg3[%c0_328, %c0_329, %c6, %c0_330, %c0_331], %357 {strides = array<i32>} : memref<1x4x7x16x128xf32, #tpu.memory_space<vmem>>, vector<1x1x1x16x128xf32>,
      %c0_332 = arith.constant 0 : index
      %c1_333 = arith.constant 1 : index
      %c6_334 = arith.constant 6 : index
      %c0_335 = arith.constant 0 : index
      %c0_336 = arith.constant 0 : index
      %358 = vector.load %arg3[%c0_332, %c1_333, %c6_334, %c0_335, %c0_336] : memref<1x4x7x16x128xf32, #tpu.memory_space<vmem>>, vector<1x1x1x16x128xf32>
      %359 = vector.shape_cast %358 : vector<1x1x1x16x128xf32> to vector<16x128xf32>
      %360 = vector.shape_cast %354 : vector<16x128xf32> to vector<1x1x1x16x128xf32>
      tpu.vector_store %arg3[%c0_332, %c1_333, %c6_334, %c0_335, %c0_336], %360 {strides = array<i32>} : memref<1x4x7x16x128xf32, #tpu.memory_space<vmem>>, vector<1x1x1x16x128xf32>,
      %cst_337 = arith.constant -5.000000e+03 : f32
      %361 = vector.broadcast %cst_337 : f32 to vector<16x128xf32>
      %362 = arith.mulf %351, %361 : vector<16x128xf32>
      %363 = math.exp %362 : vector<16x128xf32>
      %c0_338 = arith.constant 0 : index
      %c2_339 = arith.constant 2 : index
      %c6_340 = arith.constant 6 : index
      %c0_341 = arith.constant 0 : index
      %c0_342 = arith.constant 0 : index
      %364 = vector.load %arg3[%c0_338, %c2_339, %c6_340, %c0_341, %c0_342] : memref<1x4x7x16x128xf32, #tpu.memory_space<vmem>>, vector<1x1x1x16x128xf32>
      %365 = vector.shape_cast %364 : vector<1x1x1x16x128xf32> to vector<16x128xf32>
      %366 = vector.shape_cast %363 : vector<16x128xf32> to vector<1x1x1x16x128xf32>
      tpu.vector_store %arg3[%c0_338, %c2_339, %c6_340, %c0_341, %c0_342], %366 {strides = array<i32>} : memref<1x4x7x16x128xf32, #tpu.memory_space<vmem>>, vector<1x1x1x16x128xf32>,
      %c0_343 = arith.constant 0 : index
      %c3_344 = arith.constant 3 : index
      %c6_345 = arith.constant 6 : index
      %c0_346 = arith.constant 0 : index
      %c0_347 = arith.constant 0 : index
      %367 = vector.load %arg3[%c0_343, %c3_344, %c6_345, %c0_346, %c0_347] : memref<1x4x7x16x128xf32, #tpu.memory_space<vmem>>, vector<1x1x1x16x128xf32>
      %368 = vector.shape_cast %367 : vector<1x1x1x16x128xf32> to vector<16x128xf32>
      %369 = vector.shape_cast %363 : vector<16x128xf32> to vector<1x1x1x16x128xf32>
      tpu.vector_store %arg3[%c0_343, %c3_344, %c6_345, %c0_346, %c0_347], %369 {strides = array<i32>} : memref<1x4x7x16x128xf32, #tpu.memory_space<vmem>>, vector<1x1x1x16x128xf32>,
    } else {
    }
    %c1_i32_92 = arith.constant 1 : i32
    %104 = arith.cmpi eq, %arg1, %c1_i32_92 : i32
    %105 = arith.extui %104 : i1 to i32
    %c0_i32_93 = arith.constant 0 : i32
    %106 = arith.cmpi ne, %105, %c0_i32_93 : i32
    scf.if %106 {
      %c0_94 = arith.constant 0 : index
      %c3_95 = arith.constant 3 : index
      %c0_96 = arith.constant 0 : index
      %c0_97 = arith.constant 0 : index
      %107 = vector.load %arg4[%c0_94, %c3_95, %c0_96, %c0_97] : memref<3x5x16x128xf32, #tpu.memory_space<vmem>>, vector<1x1x16x128xf32>
      %108 = vector.shape_cast %107 : vector<1x1x16x128xf32> to vector<16x128xf32>
      %109 = arith.subf %15, %108 : vector<16x128xf32>
      %c1_98 = arith.constant 1 : index
      %c3_99 = arith.constant 3 : index
      %c0_100 = arith.constant 0 : index
      %c0_101 = arith.constant 0 : index
      %110 = vector.load %arg4[%c1_98, %c3_99, %c0_100, %c0_101] : memref<3x5x16x128xf32, #tpu.memory_space<vmem>>, vector<1x1x16x128xf32>
      %111 = vector.shape_cast %110 : vector<1x1x16x128xf32> to vector<16x128xf32>
      %112 = arith.subf %17, %111 : vector<16x128xf32>
      %c2_102 = arith.constant 2 : index
      %c3_103 = arith.constant 3 : index
      %c0_104 = arith.constant 0 : index
      %c0_105 = arith.constant 0 : index
      %113 = vector.load %arg4[%c2_102, %c3_103, %c0_104, %c0_105] : memref<3x5x16x128xf32, #tpu.memory_space<vmem>>, vector<1x1x16x128xf32>
      %114 = vector.shape_cast %113 : vector<1x1x16x128xf32> to vector<16x128xf32>
      %115 = arith.subf %19, %114 : vector<16x128xf32>
      %116 = arith.mulf %109, %109 : vector<16x128xf32>
      %117 = arith.mulf %112, %112 : vector<16x128xf32>
      %118 = arith.addf %116, %117 : vector<16x128xf32>
      %119 = arith.mulf %115, %115 : vector<16x128xf32>
      %120 = arith.addf %118, %119 : vector<16x128xf32>
      %cst_106 = arith.constant -2222.22217 : f32
      %121 = vector.broadcast %cst_106 : f32 to vector<16x128xf32>
      %122 = arith.mulf %120, %121 : vector<16x128xf32>
      %123 = math.exp %122 : vector<16x128xf32>
      %c0_107 = arith.constant 0 : index
      %c0_108 = arith.constant 0 : index
      %c0_109 = arith.constant 0 : index
      %c0_110 = arith.constant 0 : index
      %c0_111 = arith.constant 0 : index
      %124 = vector.load %arg3[%c0_107, %c0_108, %c0_109, %c0_110, %c0_111] : memref<1x4x7x16x128xf32, #tpu.memory_space<vmem>>, vector<1x1x1x16x128xf32>
      %125 = vector.shape_cast %124 : vector<1x1x1x16x128xf32> to vector<16x128xf32>
      %126 = vector.shape_cast %123 : vector<16x128xf32> to vector<1x1x1x16x128xf32>
      tpu.vector_store %arg3[%c0_107, %c0_108, %c0_109, %c0_110, %c0_111], %126 {strides = array<i32>} : memref<1x4x7x16x128xf32, #tpu.memory_space<vmem>>, vector<1x1x1x16x128xf32>,
      %c0_112 = arith.constant 0 : index
      %c1_113 = arith.constant 1 : index
      %c0_114 = arith.constant 0 : index
      %c0_115 = arith.constant 0 : index
      %c0_116 = arith.constant 0 : index
      %127 = vector.load %arg3[%c0_112, %c1_113, %c0_114, %c0_115, %c0_116] : memref<1x4x7x16x128xf32, #tpu.memory_space<vmem>>, vector<1x1x1x16x128xf32>
      %128 = vector.shape_cast %127 : vector<1x1x1x16x128xf32> to vector<16x128xf32>
      %129 = vector.shape_cast %123 : vector<16x128xf32> to vector<1x1x1x16x128xf32>
      tpu.vector_store %arg3[%c0_112, %c1_113, %c0_114, %c0_115, %c0_116], %129 {strides = array<i32>} : memref<1x4x7x16x128xf32, #tpu.memory_space<vmem>>, vector<1x1x1x16x128xf32>,
      %cst_117 = arith.constant -5.000000e+03 : f32
      %130 = vector.broadcast %cst_117 : f32 to vector<16x128xf32>
      %131 = arith.mulf %120, %130 : vector<16x128xf32>
      %132 = math.exp %131 : vector<16x128xf32>
      %c0_118 = arith.constant 0 : index
      %c2_119 = arith.constant 2 : index
      %c0_120 = arith.constant 0 : index
      %c0_121 = arith.constant 0 : index
      %c0_122 = arith.constant 0 : index
      %133 = vector.load %arg3[%c0_118, %c2_119, %c0_120, %c0_121, %c0_122] : memref<1x4x7x16x128xf32, #tpu.memory_space<vmem>>, vector<1x1x1x16x128xf32>
      %134 = vector.shape_cast %133 : vector<1x1x1x16x128xf32> to vector<16x128xf32>
      %135 = vector.shape_cast %132 : vector<16x128xf32> to vector<1x1x1x16x128xf32>
      tpu.vector_store %arg3[%c0_118, %c2_119, %c0_120, %c0_121, %c0_122], %135 {strides = array<i32>} : memref<1x4x7x16x128xf32, #tpu.memory_space<vmem>>, vector<1x1x1x16x128xf32>,
      %c0_123 = arith.constant 0 : index
      %c3_124 = arith.constant 3 : index
      %c0_125 = arith.constant 0 : index
      %c0_126 = arith.constant 0 : index
      %c0_127 = arith.constant 0 : index
      %136 = vector.load %arg3[%c0_123, %c3_124, %c0_125, %c0_126, %c0_127] : memref<1x4x7x16x128xf32, #tpu.memory_space<vmem>>, vector<1x1x1x16x128xf32>
      %137 = vector.shape_cast %136 : vector<1x1x1x16x128xf32> to vector<16x128xf32>
      %138 = vector.shape_cast %132 : vector<16x128xf32> to vector<1x1x1x16x128xf32>
      tpu.vector_store %arg3[%c0_123, %c3_124, %c0_125, %c0_126, %c0_127], %138 {strides = array<i32>} : memref<1x4x7x16x128xf32, #tpu.memory_space<vmem>>, vector<1x1x1x16x128xf32>,
      %c0_128 = arith.constant 0 : index
      %c4_129 = arith.constant 4 : index
      %c0_130 = arith.constant 0 : index
      %c0_131 = arith.constant 0 : index
      %139 = vector.load %arg4[%c0_128, %c4_129, %c0_130, %c0_131] : memref<3x5x16x128xf32, #tpu.memory_space<vmem>>, vector<1x1x16x128xf32>
      %140 = vector.shape_cast %139 : vector<1x1x16x128xf32> to vector<16x128xf32>
      %141 = arith.subf %15, %140 : vector<16x128xf32>
      %c1_132 = arith.constant 1 : index
      %c4_133 = arith.constant 4 : index
      %c0_134 = arith.constant 0 : index
      %c0_135 = arith.constant 0 : index
      %142 = vector.load %arg4[%c1_132, %c4_133, %c0_134, %c0_135] : memref<3x5x16x128xf32, #tpu.memory_space<vmem>>, vector<1x1x16x128xf32>
      %143 = vector.shape_cast %142 : vector<1x1x16x128xf32> to vector<16x128xf32>
      %144 = arith.subf %17, %143 : vector<16x128xf32>
      %c2_136 = arith.constant 2 : index
      %c4_137 = arith.constant 4 : index
      %c0_138 = arith.constant 0 : index
      %c0_139 = arith.constant 0 : index
      %145 = vector.load %arg4[%c2_136, %c4_137, %c0_138, %c0_139] : memref<3x5x16x128xf32, #tpu.memory_space<vmem>>, vector<1x1x16x128xf32>
      %146 = vector.shape_cast %145 : vector<1x1x16x128xf32> to vector<16x128xf32>
      %147 = arith.subf %19, %146 : vector<16x128xf32>
      %148 = arith.mulf %141, %141 : vector<16x128xf32>
      %149 = arith.mulf %144, %144 : vector<16x128xf32>
      %150 = arith.addf %148, %149 : vector<16x128xf32>
      %151 = arith.mulf %147, %147 : vector<16x128xf32>
      %152 = arith.addf %150, %151 : vector<16x128xf32>
      %cst_140 = arith.constant -2222.22217 : f32
      %153 = vector.broadcast %cst_140 : f32 to vector<16x128xf32>
      %154 = arith.mulf %152, %153 : vector<16x128xf32>
      %155 = math.exp %154 : vector<16x128xf32>
      %c0_141 = arith.constant 0 : index
      %c0_142 = arith.constant 0 : index
      %c1_143 = arith.constant 1 : index
      %c0_144 = arith.constant 0 : index
      %c0_145 = arith.constant 0 : index
      %156 = vector.load %arg3[%c0_141, %c0_142, %c1_143, %c0_144, %c0_145] : memref<1x4x7x16x128xf32, #tpu.memory_space<vmem>>, vector<1x1x1x16x128xf32>
      %157 = vector.shape_cast %156 : vector<1x1x1x16x128xf32> to vector<16x128xf32>
      %158 = vector.shape_cast %155 : vector<16x128xf32> to vector<1x1x1x16x128xf32>
      tpu.vector_store %arg3[%c0_141, %c0_142, %c1_143, %c0_144, %c0_145], %158 {strides = array<i32>} : memref<1x4x7x16x128xf32, #tpu.memory_space<vmem>>, vector<1x1x1x16x128xf32>,
      %c0_146 = arith.constant 0 : index
      %c1_147 = arith.constant 1 : index
      %c1_148 = arith.constant 1 : index
      %c0_149 = arith.constant 0 : index
      %c0_150 = arith.constant 0 : index
      %159 = vector.load %arg3[%c0_146, %c1_147, %c1_148, %c0_149, %c0_150] : memref<1x4x7x16x128xf32, #tpu.memory_space<vmem>>, vector<1x1x1x16x128xf32>
      %160 = vector.shape_cast %159 : vector<1x1x1x16x128xf32> to vector<16x128xf32>
      %161 = vector.shape_cast %155 : vector<16x128xf32> to vector<1x1x1x16x128xf32>
      tpu.vector_store %arg3[%c0_146, %c1_147, %c1_148, %c0_149, %c0_150], %161 {strides = array<i32>} : memref<1x4x7x16x128xf32, #tpu.memory_space<vmem>>, vector<1x1x1x16x128xf32>,
      %cst_151 = arith.constant -5.000000e+03 : f32
      %162 = vector.broadcast %cst_151 : f32 to vector<16x128xf32>
      %163 = arith.mulf %152, %162 : vector<16x128xf32>
      %164 = math.exp %163 : vector<16x128xf32>
      %c0_152 = arith.constant 0 : index
      %c2_153 = arith.constant 2 : index
      %c1_154 = arith.constant 1 : index
      %c0_155 = arith.constant 0 : index
      %c0_156 = arith.constant 0 : index
      %165 = vector.load %arg3[%c0_152, %c2_153, %c1_154, %c0_155, %c0_156] : memref<1x4x7x16x128xf32, #tpu.memory_space<vmem>>, vector<1x1x1x16x128xf32>
      %166 = vector.shape_cast %165 : vector<1x1x1x16x128xf32> to vector<16x128xf32>
      %167 = vector.shape_cast %164 : vector<16x128xf32> to vector<1x1x1x16x128xf32>
      tpu.vector_store %arg3[%c0_152, %c2_153, %c1_154, %c0_155, %c0_156], %167 {strides = array<i32>} : memref<1x4x7x16x128xf32, #tpu.memory_space<vmem>>, vector<1x1x1x16x128xf32>,
      %c0_157 = arith.constant 0 : index
      %c3_158 = arith.constant 3 : index
      %c1_159 = arith.constant 1 : index
      %c0_160 = arith.constant 0 : index
      %c0_161 = arith.constant 0 : index
      %168 = vector.load %arg3[%c0_157, %c3_158, %c1_159, %c0_160, %c0_161] : memref<1x4x7x16x128xf32, #tpu.memory_space<vmem>>, vector<1x1x1x16x128xf32>
      %169 = vector.shape_cast %168 : vector<1x1x1x16x128xf32> to vector<16x128xf32>
      %170 = vector.shape_cast %164 : vector<16x128xf32> to vector<1x1x1x16x128xf32>
      tpu.vector_store %arg3[%c0_157, %c3_158, %c1_159, %c0_160, %c0_161], %170 {strides = array<i32>} : memref<1x4x7x16x128xf32, #tpu.memory_space<vmem>>, vector<1x1x1x16x128xf32>,
      %c0_162 = arith.constant 0 : index
      %c0_163 = arith.constant 0 : index
      %c0_164 = arith.constant 0 : index
      %c0_165 = arith.constant 0 : index
      %171 = vector.load %arg4[%c0_162, %c0_163, %c0_164, %c0_165] : memref<3x5x16x128xf32, #tpu.memory_space<vmem>>, vector<1x1x16x128xf32>
      %172 = vector.shape_cast %171 : vector<1x1x16x128xf32> to vector<16x128xf32>
      %c15_i32_166 = arith.constant 15 : i32
      %173 = tpu.dynamic_rotate %172 by %c15_i32_166 dim 0 : vector<16x128xf32>, i32 -> vector<16x128xf32>
      %cst_167 = arith.constant 0.000000e+00 : f32
      %174 = vector.broadcast %cst_167 : f32 to vector<16x128xf32>
      %175 = arith.select %13, %173, %174 : vector<16x128xi1>, vector<16x128xf32>
      %176 = arith.subf %15, %175 : vector<16x128xf32>
      %c1_168 = arith.constant 1 : index
      %c0_169 = arith.constant 0 : index
      %c0_170 = arith.constant 0 : index
      %c0_171 = arith.constant 0 : index
      %177 = vector.load %arg4[%c1_168, %c0_169, %c0_170, %c0_171] : memref<3x5x16x128xf32, #tpu.memory_space<vmem>>, vector<1x1x16x128xf32>
      %178 = vector.shape_cast %177 : vector<1x1x16x128xf32> to vector<16x128xf32>
      %c15_i32_172 = arith.constant 15 : i32
      %179 = tpu.dynamic_rotate %178 by %c15_i32_172 dim 0 : vector<16x128xf32>, i32 -> vector<16x128xf32>
      %cst_173 = arith.constant 0.000000e+00 : f32
      %180 = vector.broadcast %cst_173 : f32 to vector<16x128xf32>
      %181 = arith.select %13, %179, %180 : vector<16x128xi1>, vector<16x128xf32>
      %182 = arith.subf %17, %181 : vector<16x128xf32>
      %c2_174 = arith.constant 2 : index
      %c0_175 = arith.constant 0 : index
      %c0_176 = arith.constant 0 : index
      %c0_177 = arith.constant 0 : index
      %183 = vector.load %arg4[%c2_174, %c0_175, %c0_176, %c0_177] : memref<3x5x16x128xf32, #tpu.memory_space<vmem>>, vector<1x1x16x128xf32>
      %184 = vector.shape_cast %183 : vector<1x1x16x128xf32> to vector<16x128xf32>
      %c15_i32_178 = arith.constant 15 : i32
      %185 = tpu.dynamic_rotate %184 by %c15_i32_178 dim 0 : vector<16x128xf32>, i32 -> vector<16x128xf32>
      %cst_179 = arith.constant 0.000000e+00 : f32
      %186 = vector.broadcast %cst_179 : f32 to vector<16x128xf32>
      %187 = arith.select %13, %185, %186 : vector<16x128xi1>, vector<16x128xf32>
      %188 = arith.subf %19, %187 : vector<16x128xf32>
      %189 = arith.mulf %176, %176 : vector<16x128xf32>
      %190 = arith.mulf %182, %182 : vector<16x128xf32>
      %191 = arith.addf %189, %190 : vector<16x128xf32>
      %192 = arith.mulf %188, %188 : vector<16x128xf32>
      %193 = arith.addf %191, %192 : vector<16x128xf32>
      %cst_180 = arith.constant -2222.22217 : f32
      %194 = vector.broadcast %cst_180 : f32 to vector<16x128xf32>
      %195 = arith.mulf %193, %194 : vector<16x128xf32>
      %196 = math.exp %195 : vector<16x128xf32>
      %c0_181 = arith.constant 0 : index
      %c0_182 = arith.constant 0 : index
      %c2_183 = arith.constant 2 : index
      %c0_184 = arith.constant 0 : index
      %c0_185 = arith.constant 0 : index
      %197 = vector.load %arg3[%c0_181, %c0_182, %c2_183, %c0_184, %c0_185] : memref<1x4x7x16x128xf32, #tpu.memory_space<vmem>>, vector<1x1x1x16x128xf32>
      %198 = vector.shape_cast %197 : vector<1x1x1x16x128xf32> to vector<16x128xf32>
      %199 = vector.shape_cast %196 : vector<16x128xf32> to vector<1x1x1x16x128xf32>
      tpu.vector_store %arg3[%c0_181, %c0_182, %c2_183, %c0_184, %c0_185], %199 {strides = array<i32>} : memref<1x4x7x16x128xf32, #tpu.memory_space<vmem>>, vector<1x1x1x16x128xf32>,
      %c0_186 = arith.constant 0 : index
      %c1_187 = arith.constant 1 : index
      %c2_188 = arith.constant 2 : index
      %c0_189 = arith.constant 0 : index
      %c0_190 = arith.constant 0 : index
      %200 = vector.load %arg3[%c0_186, %c1_187, %c2_188, %c0_189, %c0_190] : memref<1x4x7x16x128xf32, #tpu.memory_space<vmem>>, vector<1x1x1x16x128xf32>
      %201 = vector.shape_cast %200 : vector<1x1x1x16x128xf32> to vector<16x128xf32>
      %202 = vector.shape_cast %196 : vector<16x128xf32> to vector<1x1x1x16x128xf32>
      tpu.vector_store %arg3[%c0_186, %c1_187, %c2_188, %c0_189, %c0_190], %202 {strides = array<i32>} : memref<1x4x7x16x128xf32, #tpu.memory_space<vmem>>, vector<1x1x1x16x128xf32>,
      %cst_191 = arith.constant -5.000000e+03 : f32
      %203 = vector.broadcast %cst_191 : f32 to vector<16x128xf32>
      %204 = arith.mulf %193, %203 : vector<16x128xf32>
      %205 = math.exp %204 : vector<16x128xf32>
      %c0_192 = arith.constant 0 : index
      %c2_193 = arith.constant 2 : index
      %c2_194 = arith.constant 2 : index
      %c0_195 = arith.constant 0 : index
      %c0_196 = arith.constant 0 : index
      %206 = vector.load %arg3[%c0_192, %c2_193, %c2_194, %c0_195, %c0_196] : memref<1x4x7x16x128xf32, #tpu.memory_space<vmem>>, vector<1x1x1x16x128xf32>
      %207 = vector.shape_cast %206 : vector<1x1x1x16x128xf32> to vector<16x128xf32>
      %208 = vector.shape_cast %205 : vector<16x128xf32> to vector<1x1x1x16x128xf32>
      tpu.vector_store %arg3[%c0_192, %c2_193, %c2_194, %c0_195, %c0_196], %208 {strides = array<i32>} : memref<1x4x7x16x128xf32, #tpu.memory_space<vmem>>, vector<1x1x1x16x128xf32>,
      %c0_197 = arith.constant 0 : index
      %c3_198 = arith.constant 3 : index
      %c2_199 = arith.constant 2 : index
      %c0_200 = arith.constant 0 : index
      %c0_201 = arith.constant 0 : index
      %209 = vector.load %arg3[%c0_197, %c3_198, %c2_199, %c0_200, %c0_201] : memref<1x4x7x16x128xf32, #tpu.memory_space<vmem>>, vector<1x1x1x16x128xf32>
      %210 = vector.shape_cast %209 : vector<1x1x1x16x128xf32> to vector<16x128xf32>
      %211 = vector.shape_cast %205 : vector<16x128xf32> to vector<1x1x1x16x128xf32>
      tpu.vector_store %arg3[%c0_197, %c3_198, %c2_199, %c0_200, %c0_201], %211 {strides = array<i32>} : memref<1x4x7x16x128xf32, #tpu.memory_space<vmem>>, vector<1x1x1x16x128xf32>,
      %c0_202 = arith.constant 0 : index
      %c1_203 = arith.constant 1 : index
      %c0_204 = arith.constant 0 : index
      %c0_205 = arith.constant 0 : index
      %212 = vector.load %arg4[%c0_202, %c1_203, %c0_204, %c0_205] : memref<3x5x16x128xf32, #tpu.memory_space<vmem>>, vector<1x1x16x128xf32>
      %213 = vector.shape_cast %212 : vector<1x1x16x128xf32> to vector<16x128xf32>
      %c15_i32_206 = arith.constant 15 : i32
      %214 = tpu.dynamic_rotate %213 by %c15_i32_206 dim 0 : vector<16x128xf32>, i32 -> vector<16x128xf32>
      %cst_207 = arith.constant 0.000000e+00 : f32
      %215 = vector.broadcast %cst_207 : f32 to vector<16x128xf32>
      %216 = arith.select %13, %214, %215 : vector<16x128xi1>, vector<16x128xf32>
      %217 = arith.subf %15, %216 : vector<16x128xf32>
      %c1_208 = arith.constant 1 : index
      %c1_209 = arith.constant 1 : index
      %c0_210 = arith.constant 0 : index
      %c0_211 = arith.constant 0 : index
      %218 = vector.load %arg4[%c1_208, %c1_209, %c0_210, %c0_211] : memref<3x5x16x128xf32, #tpu.memory_space<vmem>>, vector<1x1x16x128xf32>
      %219 = vector.shape_cast %218 : vector<1x1x16x128xf32> to vector<16x128xf32>
      %c15_i32_212 = arith.constant 15 : i32
      %220 = tpu.dynamic_rotate %219 by %c15_i32_212 dim 0 : vector<16x128xf32>, i32 -> vector<16x128xf32>
      %cst_213 = arith.constant 0.000000e+00 : f32
      %221 = vector.broadcast %cst_213 : f32 to vector<16x128xf32>
      %222 = arith.select %13, %220, %221 : vector<16x128xi1>, vector<16x128xf32>
      %223 = arith.subf %17, %222 : vector<16x128xf32>
      %c2_214 = arith.constant 2 : index
      %c1_215 = arith.constant 1 : index
      %c0_216 = arith.constant 0 : index
      %c0_217 = arith.constant 0 : index
      %224 = vector.load %arg4[%c2_214, %c1_215, %c0_216, %c0_217] : memref<3x5x16x128xf32, #tpu.memory_space<vmem>>, vector<1x1x16x128xf32>
      %225 = vector.shape_cast %224 : vector<1x1x16x128xf32> to vector<16x128xf32>
      %c15_i32_218 = arith.constant 15 : i32
      %226 = tpu.dynamic_rotate %225 by %c15_i32_218 dim 0 : vector<16x128xf32>, i32 -> vector<16x128xf32>
      %cst_219 = arith.constant 0.000000e+00 : f32
      %227 = vector.broadcast %cst_219 : f32 to vector<16x128xf32>
      %228 = arith.select %13, %226, %227 : vector<16x128xi1>, vector<16x128xf32>
      %229 = arith.subf %19, %228 : vector<16x128xf32>
      %230 = arith.mulf %217, %217 : vector<16x128xf32>
      %231 = arith.mulf %223, %223 : vector<16x128xf32>
      %232 = arith.addf %230, %231 : vector<16x128xf32>
      %233 = arith.mulf %229, %229 : vector<16x128xf32>
      %234 = arith.addf %232, %233 : vector<16x128xf32>
      %cst_220 = arith.constant -2222.22217 : f32
      %235 = vector.broadcast %cst_220 : f32 to vector<16x128xf32>
      %236 = arith.mulf %234, %235 : vector<16x128xf32>
      %237 = math.exp %236 : vector<16x128xf32>
      %c0_221 = arith.constant 0 : index
      %c0_222 = arith.constant 0 : index
      %c3_223 = arith.constant 3 : index
      %c0_224 = arith.constant 0 : index
      %c0_225 = arith.constant 0 : index
      %238 = vector.load %arg3[%c0_221, %c0_222, %c3_223, %c0_224, %c0_225] : memref<1x4x7x16x128xf32, #tpu.memory_space<vmem>>, vector<1x1x1x16x128xf32>
      %239 = vector.shape_cast %238 : vector<1x1x1x16x128xf32> to vector<16x128xf32>
      %240 = vector.shape_cast %237 : vector<16x128xf32> to vector<1x1x1x16x128xf32>
      tpu.vector_store %arg3[%c0_221, %c0_222, %c3_223, %c0_224, %c0_225], %240 {strides = array<i32>} : memref<1x4x7x16x128xf32, #tpu.memory_space<vmem>>, vector<1x1x1x16x128xf32>,
      %c0_226 = arith.constant 0 : index
      %c1_227 = arith.constant 1 : index
      %c3_228 = arith.constant 3 : index
      %c0_229 = arith.constant 0 : index
      %c0_230 = arith.constant 0 : index
      %241 = vector.load %arg3[%c0_226, %c1_227, %c3_228, %c0_229, %c0_230] : memref<1x4x7x16x128xf32, #tpu.memory_space<vmem>>, vector<1x1x1x16x128xf32>
      %242 = vector.shape_cast %241 : vector<1x1x1x16x128xf32> to vector<16x128xf32>
      %243 = vector.shape_cast %237 : vector<16x128xf32> to vector<1x1x1x16x128xf32>
      tpu.vector_store %arg3[%c0_226, %c1_227, %c3_228, %c0_229, %c0_230], %243 {strides = array<i32>} : memref<1x4x7x16x128xf32, #tpu.memory_space<vmem>>, vector<1x1x1x16x128xf32>,
      %cst_231 = arith.constant -5.000000e+03 : f32
      %244 = vector.broadcast %cst_231 : f32 to vector<16x128xf32>
      %245 = arith.mulf %234, %244 : vector<16x128xf32>
      %246 = math.exp %245 : vector<16x128xf32>
      %c0_232 = arith.constant 0 : index
      %c2_233 = arith.constant 2 : index
      %c3_234 = arith.constant 3 : index
      %c0_235 = arith.constant 0 : index
      %c0_236 = arith.constant 0 : index
      %247 = vector.load %arg3[%c0_232, %c2_233, %c3_234, %c0_235, %c0_236] : memref<1x4x7x16x128xf32, #tpu.memory_space<vmem>>, vector<1x1x1x16x128xf32>
      %248 = vector.shape_cast %247 : vector<1x1x1x16x128xf32> to vector<16x128xf32>
      %249 = vector.shape_cast %246 : vector<16x128xf32> to vector<1x1x1x16x128xf32>
      tpu.vector_store %arg3[%c0_232, %c2_233, %c3_234, %c0_235, %c0_236], %249 {strides = array<i32>} : memref<1x4x7x16x128xf32, #tpu.memory_space<vmem>>, vector<1x1x1x16x128xf32>,
      %c0_237 = arith.constant 0 : index
      %c3_238 = arith.constant 3 : index
      %c3_239 = arith.constant 3 : index
      %c0_240 = arith.constant 0 : index
      %c0_241 = arith.constant 0 : index
      %250 = vector.load %arg3[%c0_237, %c3_238, %c3_239, %c0_240, %c0_241] : memref<1x4x7x16x128xf32, #tpu.memory_space<vmem>>, vector<1x1x1x16x128xf32>
      %251 = vector.shape_cast %250 : vector<1x1x1x16x128xf32> to vector<16x128xf32>
      %252 = vector.shape_cast %246 : vector<16x128xf32> to vector<1x1x1x16x128xf32>
      tpu.vector_store %arg3[%c0_237, %c3_238, %c3_239, %c0_240, %c0_241], %252 {strides = array<i32>} : memref<1x4x7x16x128xf32, #tpu.memory_space<vmem>>, vector<1x1x1x16x128xf32>,
      %c15_i32_242 = arith.constant 15 : i32
      %253 = tpu.dynamic_rotate %15 by %c15_i32_242 dim 0 : vector<16x128xf32>, i32 -> vector<16x128xf32>
      %cst_243 = arith.constant 0.000000e+00 : f32
      %254 = vector.broadcast %cst_243 : f32 to vector<16x128xf32>
      %255 = arith.select %13, %253, %254 : vector<16x128xi1>, vector<16x128xf32>
      %256 = arith.subf %15, %255 : vector<16x128xf32>
      %c15_i32_244 = arith.constant 15 : i32
      %257 = tpu.dynamic_rotate %17 by %c15_i32_244 dim 0 : vector<16x128xf32>, i32 -> vector<16x128xf32>
      %cst_245 = arith.constant 0.000000e+00 : f32
      %258 = vector.broadcast %cst_245 : f32 to vector<16x128xf32>
      %259 = arith.select %13, %257, %258 : vector<16x128xi1>, vector<16x128xf32>
      %260 = arith.subf %17, %259 : vector<16x128xf32>
      %c15_i32_246 = arith.constant 15 : i32
      %261 = tpu.dynamic_rotate %19 by %c15_i32_246 dim 0 : vector<16x128xf32>, i32 -> vector<16x128xf32>
      %cst_247 = arith.constant 0.000000e+00 : f32
      %262 = vector.broadcast %cst_247 : f32 to vector<16x128xf32>
      %263 = arith.select %13, %261, %262 : vector<16x128xi1>, vector<16x128xf32>
      %264 = arith.subf %19, %263 : vector<16x128xf32>
      %265 = arith.mulf %256, %256 : vector<16x128xf32>
      %266 = arith.mulf %260, %260 : vector<16x128xf32>
      %267 = arith.addf %265, %266 : vector<16x128xf32>
      %268 = arith.mulf %264, %264 : vector<16x128xf32>
      %269 = arith.addf %267, %268 : vector<16x128xf32>
      %cst_248 = arith.constant -2222.22217 : f32
      %270 = vector.broadcast %cst_248 : f32 to vector<16x128xf32>
      %271 = arith.mulf %269, %270 : vector<16x128xf32>
      %272 = math.exp %271 : vector<16x128xf32>
      %c0_249 = arith.constant 0 : index
      %c0_250 = arith.constant 0 : index
      %c4_251 = arith.constant 4 : index
      %c0_252 = arith.constant 0 : index
      %c0_253 = arith.constant 0 : index
      %273 = vector.load %arg3[%c0_249, %c0_250, %c4_251, %c0_252, %c0_253] : memref<1x4x7x16x128xf32, #tpu.memory_space<vmem>>, vector<1x1x1x16x128xf32>
      %274 = vector.shape_cast %273 : vector<1x1x1x16x128xf32> to vector<16x128xf32>
      %275 = vector.shape_cast %272 : vector<16x128xf32> to vector<1x1x1x16x128xf32>
      tpu.vector_store %arg3[%c0_249, %c0_250, %c4_251, %c0_252, %c0_253], %275 {strides = array<i32>} : memref<1x4x7x16x128xf32, #tpu.memory_space<vmem>>, vector<1x1x1x16x128xf32>,
      %c0_254 = arith.constant 0 : index
      %c1_255 = arith.constant 1 : index
      %c4_256 = arith.constant 4 : index
      %c0_257 = arith.constant 0 : index
      %c0_258 = arith.constant 0 : index
      %276 = vector.load %arg3[%c0_254, %c1_255, %c4_256, %c0_257, %c0_258] : memref<1x4x7x16x128xf32, #tpu.memory_space<vmem>>, vector<1x1x1x16x128xf32>
      %277 = vector.shape_cast %276 : vector<1x1x1x16x128xf32> to vector<16x128xf32>
      %278 = vector.shape_cast %272 : vector<16x128xf32> to vector<1x1x1x16x128xf32>
      tpu.vector_store %arg3[%c0_254, %c1_255, %c4_256, %c0_257, %c0_258], %278 {strides = array<i32>} : memref<1x4x7x16x128xf32, #tpu.memory_space<vmem>>, vector<1x1x1x16x128xf32>,
      %cst_259 = arith.constant -5.000000e+03 : f32
      %279 = vector.broadcast %cst_259 : f32 to vector<16x128xf32>
      %280 = arith.mulf %269, %279 : vector<16x128xf32>
      %281 = math.exp %280 : vector<16x128xf32>
      %c0_260 = arith.constant 0 : index
      %c2_261 = arith.constant 2 : index
      %c4_262 = arith.constant 4 : index
      %c0_263 = arith.constant 0 : index
      %c0_264 = arith.constant 0 : index
      %282 = vector.load %arg3[%c0_260, %c2_261, %c4_262, %c0_263, %c0_264] : memref<1x4x7x16x128xf32, #tpu.memory_space<vmem>>, vector<1x1x1x16x128xf32>
      %283 = vector.shape_cast %282 : vector<1x1x1x16x128xf32> to vector<16x128xf32>
      %284 = vector.shape_cast %281 : vector<16x128xf32> to vector<1x1x1x16x128xf32>
      tpu.vector_store %arg3[%c0_260, %c2_261, %c4_262, %c0_263, %c0_264], %284 {strides = array<i32>} : memref<1x4x7x16x128xf32, #tpu.memory_space<vmem>>, vector<1x1x1x16x128xf32>,
      %c0_265 = arith.constant 0 : index
      %c3_266 = arith.constant 3 : index
      %c4_267 = arith.constant 4 : index
      %c0_268 = arith.constant 0 : index
      %c0_269 = arith.constant 0 : index
      %285 = vector.load %arg3[%c0_265, %c3_266, %c4_267, %c0_268, %c0_269] : memref<1x4x7x16x128xf32, #tpu.memory_space<vmem>>, vector<1x1x1x16x128xf32>
      %286 = vector.shape_cast %285 : vector<1x1x1x16x128xf32> to vector<16x128xf32>
      %287 = vector.shape_cast %281 : vector<16x128xf32> to vector<1x1x1x16x128xf32>
      tpu.vector_store %arg3[%c0_265, %c3_266, %c4_267, %c0_268, %c0_269], %287 {strides = array<i32>} : memref<1x4x7x16x128xf32, #tpu.memory_space<vmem>>, vector<1x1x1x16x128xf32>,
      %c0_270 = arith.constant 0 : index
      %c3_271 = arith.constant 3 : index
      %c0_272 = arith.constant 0 : index
      %c0_273 = arith.constant 0 : index
      %288 = vector.load %arg4[%c0_270, %c3_271, %c0_272, %c0_273] : memref<3x5x16x128xf32, #tpu.memory_space<vmem>>, vector<1x1x16x128xf32>
      %289 = vector.shape_cast %288 : vector<1x1x16x128xf32> to vector<16x128xf32>
      %c15_i32_274 = arith.constant 15 : i32
      %290 = tpu.dynamic_rotate %289 by %c15_i32_274 dim 0 : vector<16x128xf32>, i32 -> vector<16x128xf32>
      %cst_275 = arith.constant 0.000000e+00 : f32
      %291 = vector.broadcast %cst_275 : f32 to vector<16x128xf32>
      %292 = arith.select %13, %290, %291 : vector<16x128xi1>, vector<16x128xf32>
      %293 = arith.subf %15, %292 : vector<16x128xf32>
      %c1_276 = arith.constant 1 : index
      %c3_277 = arith.constant 3 : index
      %c0_278 = arith.constant 0 : index
      %c0_279 = arith.constant 0 : index
      %294 = vector.load %arg4[%c1_276, %c3_277, %c0_278, %c0_279] : memref<3x5x16x128xf32, #tpu.memory_space<vmem>>, vector<1x1x16x128xf32>
      %295 = vector.shape_cast %294 : vector<1x1x16x128xf32> to vector<16x128xf32>
      %c15_i32_280 = arith.constant 15 : i32
      %296 = tpu.dynamic_rotate %295 by %c15_i32_280 dim 0 : vector<16x128xf32>, i32 -> vector<16x128xf32>
      %cst_281 = arith.constant 0.000000e+00 : f32
      %297 = vector.broadcast %cst_281 : f32 to vector<16x128xf32>
      %298 = arith.select %13, %296, %297 : vector<16x128xi1>, vector<16x128xf32>
      %299 = arith.subf %17, %298 : vector<16x128xf32>
      %c2_282 = arith.constant 2 : index
      %c3_283 = arith.constant 3 : index
      %c0_284 = arith.constant 0 : index
      %c0_285 = arith.constant 0 : index
      %300 = vector.load %arg4[%c2_282, %c3_283, %c0_284, %c0_285] : memref<3x5x16x128xf32, #tpu.memory_space<vmem>>, vector<1x1x16x128xf32>
      %301 = vector.shape_cast %300 : vector<1x1x16x128xf32> to vector<16x128xf32>
      %c15_i32_286 = arith.constant 15 : i32
      %302 = tpu.dynamic_rotate %301 by %c15_i32_286 dim 0 : vector<16x128xf32>, i32 -> vector<16x128xf32>
      %cst_287 = arith.constant 0.000000e+00 : f32
      %303 = vector.broadcast %cst_287 : f32 to vector<16x128xf32>
      %304 = arith.select %13, %302, %303 : vector<16x128xi1>, vector<16x128xf32>
      %305 = arith.subf %19, %304 : vector<16x128xf32>
      %306 = arith.mulf %293, %293 : vector<16x128xf32>
      %307 = arith.mulf %299, %299 : vector<16x128xf32>
      %308 = arith.addf %306, %307 : vector<16x128xf32>
      %309 = arith.mulf %305, %305 : vector<16x128xf32>
      %310 = arith.addf %308, %309 : vector<16x128xf32>
      %cst_288 = arith.constant -2222.22217 : f32
      %311 = vector.broadcast %cst_288 : f32 to vector<16x128xf32>
      %312 = arith.mulf %310, %311 : vector<16x128xf32>
      %313 = math.exp %312 : vector<16x128xf32>
      %c0_289 = arith.constant 0 : index
      %c0_290 = arith.constant 0 : index
      %c5 = arith.constant 5 : index
      %c0_291 = arith.constant 0 : index
      %c0_292 = arith.constant 0 : index
      %314 = vector.load %arg3[%c0_289, %c0_290, %c5, %c0_291, %c0_292] : memref<1x4x7x16x128xf32, #tpu.memory_space<vmem>>, vector<1x1x1x16x128xf32>
      %315 = vector.shape_cast %314 : vector<1x1x1x16x128xf32> to vector<16x128xf32>
      %316 = vector.shape_cast %313 : vector<16x128xf32> to vector<1x1x1x16x128xf32>
      tpu.vector_store %arg3[%c0_289, %c0_290, %c5, %c0_291, %c0_292], %316 {strides = array<i32>} : memref<1x4x7x16x128xf32, #tpu.memory_space<vmem>>, vector<1x1x1x16x128xf32>,
      %c0_293 = arith.constant 0 : index
      %c1_294 = arith.constant 1 : index
      %c5_295 = arith.constant 5 : index
      %c0_296 = arith.constant 0 : index
      %c0_297 = arith.constant 0 : index
      %317 = vector.load %arg3[%c0_293, %c1_294, %c5_295, %c0_296, %c0_297] : memref<1x4x7x16x128xf32, #tpu.memory_space<vmem>>, vector<1x1x1x16x128xf32>
      %318 = vector.shape_cast %317 : vector<1x1x1x16x128xf32> to vector<16x128xf32>
      %319 = vector.shape_cast %313 : vector<16x128xf32> to vector<1x1x1x16x128xf32>
      tpu.vector_store %arg3[%c0_293, %c1_294, %c5_295, %c0_296, %c0_297], %319 {strides = array<i32>} : memref<1x4x7x16x128xf32, #tpu.memory_space<vmem>>, vector<1x1x1x16x128xf32>,
      %cst_298 = arith.constant -5.000000e+03 : f32
      %320 = vector.broadcast %cst_298 : f32 to vector<16x128xf32>
      %321 = arith.mulf %310, %320 : vector<16x128xf32>
      %322 = math.exp %321 : vector<16x128xf32>
      %c0_299 = arith.constant 0 : index
      %c2_300 = arith.constant 2 : index
      %c5_301 = arith.constant 5 : index
      %c0_302 = arith.constant 0 : index
      %c0_303 = arith.constant 0 : index
      %323 = vector.load %arg3[%c0_299, %c2_300, %c5_301, %c0_302, %c0_303] : memref<1x4x7x16x128xf32, #tpu.memory_space<vmem>>, vector<1x1x1x16x128xf32>
      %324 = vector.shape_cast %323 : vector<1x1x1x16x128xf32> to vector<16x128xf32>
      %325 = vector.shape_cast %322 : vector<16x128xf32> to vector<1x1x1x16x128xf32>
      tpu.vector_store %arg3[%c0_299, %c2_300, %c5_301, %c0_302, %c0_303], %325 {strides = array<i32>} : memref<1x4x7x16x128xf32, #tpu.memory_space<vmem>>, vector<1x1x1x16x128xf32>,
      %c0_304 = arith.constant 0 : index
      %c3_305 = arith.constant 3 : index
      %c5_306 = arith.constant 5 : index
      %c0_307 = arith.constant 0 : index
      %c0_308 = arith.constant 0 : index
      %326 = vector.load %arg3[%c0_304, %c3_305, %c5_306, %c0_307, %c0_308] : memref<1x4x7x16x128xf32, #tpu.memory_space<vmem>>, vector<1x1x1x16x128xf32>
      %327 = vector.shape_cast %326 : vector<1x1x1x16x128xf32> to vector<16x128xf32>
      %328 = vector.shape_cast %322 : vector<16x128xf32> to vector<1x1x1x16x128xf32>
      tpu.vector_store %arg3[%c0_304, %c3_305, %c5_306, %c0_307, %c0_308], %328 {strides = array<i32>} : memref<1x4x7x16x128xf32, #tpu.memory_space<vmem>>, vector<1x1x1x16x128xf32>,
      %c0_309 = arith.constant 0 : index
      %c4_310 = arith.constant 4 : index
      %c0_311 = arith.constant 0 : index
      %c0_312 = arith.constant 0 : index
      %329 = vector.load %arg4[%c0_309, %c4_310, %c0_311, %c0_312] : memref<3x5x16x128xf32, #tpu.memory_space<vmem>>, vector<1x1x16x128xf32>
      %330 = vector.shape_cast %329 : vector<1x1x16x128xf32> to vector<16x128xf32>
      %c15_i32_313 = arith.constant 15 : i32
      %331 = tpu.dynamic_rotate %330 by %c15_i32_313 dim 0 : vector<16x128xf32>, i32 -> vector<16x128xf32>
      %cst_314 = arith.constant 0.000000e+00 : f32
      %332 = vector.broadcast %cst_314 : f32 to vector<16x128xf32>
      %333 = arith.select %13, %331, %332 : vector<16x128xi1>, vector<16x128xf32>
      %334 = arith.subf %15, %333 : vector<16x128xf32>
      %c1_315 = arith.constant 1 : index
      %c4_316 = arith.constant 4 : index
      %c0_317 = arith.constant 0 : index
      %c0_318 = arith.constant 0 : index
      %335 = vector.load %arg4[%c1_315, %c4_316, %c0_317, %c0_318] : memref<3x5x16x128xf32, #tpu.memory_space<vmem>>, vector<1x1x16x128xf32>
      %336 = vector.shape_cast %335 : vector<1x1x16x128xf32> to vector<16x128xf32>
      %c15_i32_319 = arith.constant 15 : i32
      %337 = tpu.dynamic_rotate %336 by %c15_i32_319 dim 0 : vector<16x128xf32>, i32 -> vector<16x128xf32>
      %cst_320 = arith.constant 0.000000e+00 : f32
      %338 = vector.broadcast %cst_320 : f32 to vector<16x128xf32>
      %339 = arith.select %13, %337, %338 : vector<16x128xi1>, vector<16x128xf32>
      %340 = arith.subf %17, %339 : vector<16x128xf32>
      %c2_321 = arith.constant 2 : index
      %c4_322 = arith.constant 4 : index
      %c0_323 = arith.constant 0 : index
      %c0_324 = arith.constant 0 : index
      %341 = vector.load %arg4[%c2_321, %c4_322, %c0_323, %c0_324] : memref<3x5x16x128xf32, #tpu.memory_space<vmem>>, vector<1x1x16x128xf32>
      %342 = vector.shape_cast %341 : vector<1x1x16x128xf32> to vector<16x128xf32>
      %c15_i32_325 = arith.constant 15 : i32
      %343 = tpu.dynamic_rotate %342 by %c15_i32_325 dim 0 : vector<16x128xf32>, i32 -> vector<16x128xf32>
      %cst_326 = arith.constant 0.000000e+00 : f32
      %344 = vector.broadcast %cst_326 : f32 to vector<16x128xf32>
      %345 = arith.select %13, %343, %344 : vector<16x128xi1>, vector<16x128xf32>
      %346 = arith.subf %19, %345 : vector<16x128xf32>
      %347 = arith.mulf %334, %334 : vector<16x128xf32>
      %348 = arith.mulf %340, %340 : vector<16x128xf32>
      %349 = arith.addf %347, %348 : vector<16x128xf32>
      %350 = arith.mulf %346, %346 : vector<16x128xf32>
      %351 = arith.addf %349, %350 : vector<16x128xf32>
      %cst_327 = arith.constant -2222.22217 : f32
      %352 = vector.broadcast %cst_327 : f32 to vector<16x128xf32>
      %353 = arith.mulf %351, %352 : vector<16x128xf32>
      %354 = math.exp %353 : vector<16x128xf32>
      %c0_328 = arith.constant 0 : index
      %c0_329 = arith.constant 0 : index
      %c6 = arith.constant 6 : index
      %c0_330 = arith.constant 0 : index
      %c0_331 = arith.constant 0 : index
      %355 = vector.load %arg3[%c0_328, %c0_329, %c6, %c0_330, %c0_331] : memref<1x4x7x16x128xf32, #tpu.memory_space<vmem>>, vector<1x1x1x16x128xf32>
      %356 = vector.shape_cast %355 : vector<1x1x1x16x128xf32> to vector<16x128xf32>
      %357 = vector.shape_cast %354 : vector<16x128xf32> to vector<1x1x1x16x128xf32>
      tpu.vector_store %arg3[%c0_328, %c0_329, %c6, %c0_330, %c0_331], %357 {strides = array<i32>} : memref<1x4x7x16x128xf32, #tpu.memory_space<vmem>>, vector<1x1x1x16x128xf32>,
      %c0_332 = arith.constant 0 : index
      %c1_333 = arith.constant 1 : index
      %c6_334 = arith.constant 6 : index
      %c0_335 = arith.constant 0 : index
      %c0_336 = arith.constant 0 : index
      %358 = vector.load %arg3[%c0_332, %c1_333, %c6_334, %c0_335, %c0_336] : memref<1x4x7x16x128xf32, #tpu.memory_space<vmem>>, vector<1x1x1x16x128xf32>
      %359 = vector.shape_cast %358 : vector<1x1x1x16x128xf32> to vector<16x128xf32>
      %360 = vector.shape_cast %354 : vector<16x128xf32> to vector<1x1x1x16x128xf32>
      tpu.vector_store %arg3[%c0_332, %c1_333, %c6_334, %c0_335, %c0_336], %360 {strides = array<i32>} : memref<1x4x7x16x128xf32, #tpu.memory_space<vmem>>, vector<1x1x1x16x128xf32>,
      %cst_337 = arith.constant -5.000000e+03 : f32
      %361 = vector.broadcast %cst_337 : f32 to vector<16x128xf32>
      %362 = arith.mulf %351, %361 : vector<16x128xf32>
      %363 = math.exp %362 : vector<16x128xf32>
      %c0_338 = arith.constant 0 : index
      %c2_339 = arith.constant 2 : index
      %c6_340 = arith.constant 6 : index
      %c0_341 = arith.constant 0 : index
      %c0_342 = arith.constant 0 : index
      %364 = vector.load %arg3[%c0_338, %c2_339, %c6_340, %c0_341, %c0_342] : memref<1x4x7x16x128xf32, #tpu.memory_space<vmem>>, vector<1x1x1x16x128xf32>
      %365 = vector.shape_cast %364 : vector<1x1x1x16x128xf32> to vector<16x128xf32>
      %366 = vector.shape_cast %363 : vector<16x128xf32> to vector<1x1x1x16x128xf32>
      tpu.vector_store %arg3[%c0_338, %c2_339, %c6_340, %c0_341, %c0_342], %366 {strides = array<i32>} : memref<1x4x7x16x128xf32, #tpu.memory_space<vmem>>, vector<1x1x1x16x128xf32>,
      %c0_343 = arith.constant 0 : index
      %c3_344 = arith.constant 3 : index
      %c6_345 = arith.constant 6 : index
      %c0_346 = arith.constant 0 : index
      %c0_347 = arith.constant 0 : index
      %367 = vector.load %arg3[%c0_343, %c3_344, %c6_345, %c0_346, %c0_347] : memref<1x4x7x16x128xf32, #tpu.memory_space<vmem>>, vector<1x1x1x16x128xf32>
      %368 = vector.shape_cast %367 : vector<1x1x1x16x128xf32> to vector<16x128xf32>
      %369 = vector.shape_cast %363 : vector<16x128xf32> to vector<1x1x1x16x128xf32>
      tpu.vector_store %arg3[%c0_343, %c3_344, %c6_345, %c0_346, %c0_347], %369 {strides = array<i32>} : memref<1x4x7x16x128xf32, #tpu.memory_space<vmem>>, vector<1x1x1x16x128xf32>,
    } else {
    }
    return
  }
  func.func @transform_0(%arg0: i32, %arg1: i32) -> (i32, i32, i32, i32) {
    %c0_i32 = arith.constant 0 : i32
    %c0_i32_0 = arith.constant 0 : i32
    %c0_i32_1 = arith.constant 0 : i32
    %c0_i32_2 = arith.constant 0 : i32
    return %arg0, %c0_i32, %c0_i32_0, %c0_i32_1 : i32, i32, i32, i32
  }
  func.func @transform_1(%arg0: i32, %arg1: i32) -> (i32, i32, i32, i32, i32) {
    %c0_i32 = arith.constant 0 : i32
    %c0_i32_0 = arith.constant 0 : i32
    %c0_i32_1 = arith.constant 0 : i32
    %c0_i32_2 = arith.constant 0 : i32
    return %arg0, %c0_i32, %arg1, %c0_i32_0, %c0_i32_1 : i32, i32, i32, i32, i32
  }
}

</mosaic_0001>

<llo_original>
// kernel: tpu_custom_call.1
$region0: #{tpu_custom_call.1}
  #allocation0 [shape = 'u32[]', space=smem, size = 0x4, offset = 0x4, fixed_abs, tag = 'smem constant byte address 0x4 - core index']
  #allocation1 [shape = 'u32[144,128]{1,0:T(1,128)}', space=vmem, size = 0x12000, scoped, tag = 'internal scratch']
  #allocation2 [shape = 'f32[3,5,16,128]{3,2,1,0:T(8,128)}', space=vmem, size = 0x1e000, scoped, tag = 'scratch operand']
  #allocation7 [shape = 's32[]', space=sflag, size = 0x4, offset = 0, fixed_abs, tag = 'sflag constant byte address 0x0 - dummy sync flag']
  %s0 = inlined_call_operand.hbm [shape: f32[2,5,16,128], index: 0, kind: input, shape index: {}]
  %s1 = inlined_call_operand.hbm [shape: f32[2,4,14,16,128], index: 1, kind: output, shape index: {}]
  %s2 = sld [smem:[#allocation0]]
  $region49: #{tpu_custom_call.1} parent=0
    _
  %s4 = ssub.s32 1, %s2
  %s5 = scalar_select 0, %s4, %s2
  $region1: #{tpu_custom_call.1} parent=0
    #allocation3 [shape = 'u8[81920]{0}', space=vmem, size = 0x14000, scoped, tag = 'input window, operand 0']
    #allocation4 [shape = 's32[2]{0}', space=sflag, size = 0x8, scoped, tag = 'scoped memory for tpu_custom_call.1']
    #allocation5 [shape = 's32[2]{0}', space=sflag, size = 0x8, scoped, tag = 'scoped memory for tpu_custom_call.1']
    #allocation6 [shape = 'u8[458752]{0}', space=vmem, size = 0x70000, scoped, tag = 'output window, operand 0']
    %6 = vsyncpa [#allocation4], 0
    %s7 = scalar_lea.sflag [#allocation4], 1
    %8 = vsyncpa %s7, 0
    %9 = vsyncpa [#allocation5], 0
    %s10 = scalar_lea.sflag [#allocation5], 1
    %11 = vsyncpa %s10, 0
    loop: start=0, step=1, limit=6
    $region2: #{tpu_custom_call.1} parent=1 // loop_pre_header
      _
    $region3: #{tpu_custom_call.1} parent=1 // loop_header
      %s13 = sphi 0, %s17
      %p14 = scmp.ge.s32.totalorder %s13, 6
      %s20 = sphi 0, %s32
      %s21 = sphi 0, %s28
      %s22 = sphi 0, %s20
      %s23 = sphi 0, %s21
      %s24 = sphi 0, %s22
      %s25 = sphi 0, %s23
      %s35 = sphi 0, %s37
      %s38 = sphi 0, %s35
      %s39 = sphi 0, %s38
      %s55 = sphi 0, %s39
      %s63 = sphi 0, %s65
      %s66 = sphi 0, %s63
      %s67 = sphi 0, %s66
      %s83 = sphi 0, %s67
    $region4: #{tpu_custom_call.1} parent=1 // loop_header_branch
      %16 = sbr.rel (%p14) target = $region8
    $region5: #{tpu_custom_call.1} parent=1 // loop_body
      %s18 = ssub.s32 %s13, 1
      %s19 = ssub.s32 %s13, 2
      %s26 = sadd.s32 1, %s21
      %p27 = scmp.ge.s32.totalorder %s26, 2
      %s28 = scalar_select %p27, 0, %s26
      %s29 = sadd.s32 1, %s20
      %s30 = scalar_select %p27, %s29, %s20
      %p31 = scmp.ge.s32.totalorder %s30, 2
      %s32 = scalar_select %p31, 0, %s30
      %s33 = ssub.s32 %s20, %s32
      %p34 = scmp.eq.s32.totalorder %s33, 0
      %s36 = sadd.s32 %s35, 1
      %s37 = scalar_select %p34, %s35, %s36
      %p40 = pneg %p34
      %p41 = scmp.eq.s32.totalorder %s13, 3
      %p42 = por %p40, %p41
      %p43 = scmp.ne.s32.totalorder %s35, %s38
      %p44 = scmp.eq.s32.totalorder %s13, 0
      %p45 = por %p43, %p44
      %p46 = scmp.ne.s32.totalorder %s35, %s38
      %p47 = scmp.eq.s32.totalorder %s18, 3
      %p48 = por %p46, %p47
      %p49 = scmp.ne.s32.totalorder %s38, %s39
      %p50 = scmp.eq.s32.totalorder %s18, 0
      %p51 = por %p49, %p50
      %p52 = scmp.ne.s32.totalorder %s38, %s39
      %p53 = scmp.eq.s32.totalorder %s19, 3
      %p54 = por %p52, %p53
      %p56 = scmp.ne.s32.totalorder %s39, %s55
      %p57 = scmp.eq.s32.totalorder %s19, 0
      %p58 = por %p56, %p57
      %s59 = ssub.s32 %s20, %s32
      %s60 = ssub.s32 %s21, %s28
      %s61 = sor.u32 %s59, %s60
      %p62 = scmp.eq.s32.totalorder %s61, 0
      %s64 = sadd.s32 %s63, 1
      %s65 = scalar_select %p62, %s63, %s64
      %p68 = pneg %p62
      %p69 = scmp.eq.s32.totalorder %s13, 3
      %p70 = por %p68, %p69
      %p71 = scmp.ne.s32.totalorder %s63, %s66
      %p72 = scmp.eq.s32.totalorder %s13, 0
      %p73 = por %p71, %p72
      %p74 = scmp.ne.s32.totalorder %s63, %s66
      %p75 = scmp.eq.s32.totalorder %s18, 3
      %p76 = por %p74, %p75
      %p77 = scmp.ne.s32.totalorder %s66, %s67
      %p78 = scmp.eq.s32.totalorder %s18, 0
      %p79 = por %p77, %p78
      %p80 = scmp.ne.s32.totalorder %s66, %s67
      %p81 = scmp.eq.s32.totalorder %s19, 3
      %p82 = por %p80, %p81
      %p84 = scmp.ne.s32.totalorder %s67, %s83
      %p85 = scmp.eq.s32.totalorder %s19, 0
      %p86 = por %p84, %p85
      %p87 = scmp.le.s32.totalorder 1, %s13
      %p88 = scmp.lt.s32.totalorder %s13, 5
      %p89 = pnand %p87, %p88
      %p90 = pneg %p89
      // Predicated region
      $region9: #{tpu_custom_call.1} parent=5 // pred_check
        _
      $region10: #{tpu_custom_call.1} parent=5 // pred_check_branch
        %92 = sbr.rel (%p89) target = $region12
      $region11: #{tpu_custom_call.1} parent=5 // pred_region
        %s93 = ssub.s32 %s13, 1
      $region12: #{tpu_custom_call.1} parent=5 // pred_fallthru
        _
      %p94 = scmp.lt.s32.totalorder %s13, 4
      // Predicated region
      $region13: #{tpu_custom_call.1} parent=5 // pred_check
        %p95 = pneg %p94
      $region14: #{tpu_custom_call.1} parent=5 // pred_check_branch
        %97 = sbr.rel (%p95) target = $region16
      $region15: #{tpu_custom_call.1} parent=5 // pred_region
        // Predicated region
        $region17: #{tpu_custom_call.1} parent=15 // pred_check
          %p98 = pneg %p45
        $region18: #{tpu_custom_call.1} parent=15 // pred_check_branch
          %100 = sbr.rel (%p98) target = $region20
        $region19: #{tpu_custom_call.1} parent=15 // pred_region
          %s101 = sand.u32 %s35, 1
          %s102 = scalar_lea.sflag [#allocation4], %s101
          %s103 = sand.u32 %s35, 1
          %s104 = smul.addr %s103, 80
          %s105 = scalar_lea.vmem [#allocation3], %s104
          %s107 = ssub.s32 1280, 1280
          %108 = vsyncadd %s102, %s107
          %s109 = smul.addr %s20, 10
          %s110 = smul.addr %s109, 128
          %s111 = scalar_lea.hbm %s0, %s110
          %s112 = sshll.u32 %s105, 4
          %s113 = int_to_ptr.vmem [resolvable:$true] %s112
          %118 = dma.hbm_to_vmem [thread:$0]  %s111, 1280, %s113, %s102, 128, 128, 8
        $region20: #{tpu_custom_call.1} parent=15 // pred_fallthru
          _
      $region16: #{tpu_custom_call.1} parent=5 // pred_fallthru
        _
      %p119 = scmp.le.s32.totalorder 1, %s13
      %p120 = scmp.lt.s32.totalorder %s13, 5
      %p121 = pnand %p119, %p120
      %p122 = pneg %p121
      // Predicated region
      $region21: #{tpu_custom_call.1} parent=5 // pred_check
        _
      $region22: #{tpu_custom_call.1} parent=5 // pred_check_branch
        %124 = sbr.rel (%p121) target = $region24
      $region23: #{tpu_custom_call.1} parent=5 // pred_region
        %s125 = ssub.s32 %s13, 1
        %s126 = sand.u32 %s38, 1
        %s127 = scalar_lea.sflag [#allocation4], %s126
        %s128 = sand.u32 %s38, 1
        %s129 = smul.addr %s128, 80
        %s130 = scalar_lea.vmem [#allocation3], %s129
        // Predicated region
        $region25: #{tpu_custom_call.1} parent=23 // pred_check
          %p131 = pneg %p51
        $region26: #{tpu_custom_call.1} parent=23 // pred_check_branch
          %133 = sbr.rel (%p131) target = $region28
        $region27: #{tpu_custom_call.1} parent=23 // pred_region
          %134 = dma.done %s127, 1280
        $region28: #{tpu_custom_call.1} parent=23 // pred_fallthru
          _
        %s135 = sand.u32 %s38, 1
        %s136 = scalar_lea.sflag [#allocation4], %s135
        %s137 = sand.u32 %s38, 1
        %s138 = smul.addr %s137, 80
        %s139 = scalar_lea.vmem [#allocation3], %s138
        %p140 = pneg %p51
        %p141 = pneg %p48
        %p142 = pneg %p79
        %p143 = pneg %p76
        %s144 = sand.u32 %s66, 1
        %s145 = scalar_lea.sflag [#allocation5], %s144
        %s146 = sand.u32 %s66, 1
        %s147 = smul.addr %s146, 448
        %s148 = scalar_lea.vmem [#allocation6], %s147
        %s149 = smul.u32 7, %s23
        %v150 = vlaneseq
        %v151 = vand.u32 %v150, 127
        %v152 = vlaneseq
        %v153 = vshrl.u32 %v152, 7
        %v154 = vadd.s32 %v153, 8
        %vm155 = vcmp.ge.s32.totalorder %v151, 2
        %vm156 = vcmp.ge.s32.totalorder %v151, 1
        %vm157 = vcmp.lt.s32.totalorder %v151, 127
        %vm158 = vcmp.lt.s32.totalorder %v151, 126
        %vm159 = vcmp.ge.s32.totalorder %v153, 1
        %vm160 = vcmp.ge.s32.totalorder %v154, 1
        %vm161 = vcmp.lt.s32.totalorder %v153, 15
        %vm162 = vcmp.lt.s32.totalorder %v154, 15
        %v163 = vld [vmem:[%s130] sm:$0xff]
        %v164 = vld [vmem:[%s130 + $0x8] sm:$0xff]
        %s165 = scalar_lea.vmem %s130, 16 [#allocation3]
        %v166 = vld [vmem:[%s165] sm:$0xff]
        %v167 = vld [vmem:[%s165 + $0x8] sm:$0xff]
        %s168 = scalar_lea.vmem %s130, 32 [#allocation3]
        %v169 = vld [vmem:[%s168] sm:$0xff]
        %v170 = vld [vmem:[%s168 + $0x8] sm:$0xff]
        %171 = vrot.lane.b32.xlu0 %v163, 2
        %v172 = vpop.permute.xlu0 %171
        %173 = vrot.lane.b32.xlu0 %v164, 2
        %v174 = vpop.permute.xlu0 %173
        %v175 = vsel %vm155, %v172, 0.0
        %v176 = vsel %vm155, %v174, 0.0
        %177 = vst [vmem:[#allocation2] sm:$0xff] %v175
        %178 = vst [vmem:[#allocation2 + $0x8] sm:$0xff] %v176
        %179 = vrot.lane.b32.xlu0 %v163, 1
        %v180 = vpop.permute.xlu0 %179
        %181 = vrot.lane.b32.xlu0 %v164, 1
        %v182 = vpop.permute.xlu0 %181
        %v183 = vsel %vm156, %v180, 0.0
        %v184 = vsel %vm156, %v182, 0.0
        %s185 = scalar_lea.vmem [#allocation2], 16
        %186 = vst [vmem:[%s185] sm:$0xff] %v183
        %187 = vst [vmem:[%s185 + $0x8] sm:$0xff] %v184
        %s188 = scalar_lea.vmem [#allocation2], 32
        %189 = vst [vmem:[%s188] sm:$0xff] %v163
        %190 = vst [vmem:[%s188 + $0x8] sm:$0xff] %v164
        %191 = vrot.lane.b32.xlu0 %v163, 127
        %v192 = vpop.permute.xlu0 %191
        %193 = vrot.lane.b32.xlu0 %v164, 127
        %v194 = vpop.permute.xlu0 %193
        %v195 = vsel %vm157, %v192, 0.0
        %v196 = vsel %vm157, %v194, 0.0
        %s197 = scalar_lea.vmem [#allocation2], 48
        %198 = vst [vmem:[%s197] sm:$0xff] %v195
        %199 = vst [vmem:[%s197 + $0x8] sm:$0xff] %v196
        %200 = vrot.lane.b32.xlu0 %v163, 126
        %v201 = vpop.permute.xlu0 %200
        %202 = vrot.lane.b32.xlu0 %v164, 126
        %v203 = vpop.permute.xlu0 %202
        %v204 = vsel %vm158, %v201, 0.0
        %v205 = vsel %vm158, %v203, 0.0
        %s206 = scalar_lea.vmem [#allocation2], 64
        %207 = vst [vmem:[%s206] sm:$0xff] %v204
        %208 = vst [vmem:[%s206 + $0x8] sm:$0xff] %v205
        %209 = vrot.lane.b32.xlu0 %v166, 2
        %v210 = vpop.permute.xlu0 %209
        %211 = vrot.lane.b32.xlu0 %v167, 2
        %v212 = vpop.permute.xlu0 %211
        %v213 = vsel %vm155, %v210, 0.0
        %v214 = vsel %vm155, %v212, 0.0
        %s215 = scalar_lea.vmem [#allocation2], 80
        %216 = vst [vmem:[%s215] sm:$0xff] %v213
        %217 = vst [vmem:[%s215 + $0x8] sm:$0xff] %v214
        %218 = vrot.lane.b32.xlu0 %v166, 1
        %v219 = vpop.permute.xlu0 %218
        %220 = vrot.lane.b32.xlu0 %v167, 1
        %v221 = vpop.permute.xlu0 %220
        %v222 = vsel %vm156, %v219, 0.0
        %v223 = vsel %vm156, %v221, 0.0
        %s224 = scalar_lea.vmem [#allocation2], 96
        %225 = vst [vmem:[%s224] sm:$0xff] %v222
        %226 = vst [vmem:[%s224 + $0x8] sm:$0xff] %v223
        %s227 = scalar_lea.vmem [#allocation2], 112
        %228 = vst [vmem:[%s227] sm:$0xff] %v166
        %229 = vst [vmem:[%s227 + $0x8] sm:$0xff] %v167
        %230 = vrot.lane.b32.xlu0 %v166, 127
        %v231 = vpop.permute.xlu0 %230
        %232 = vrot.lane.b32.xlu0 %v167, 127
        %v233 = vpop.permute.xlu0 %232
        %v234 = vsel %vm157, %v231, 0.0
        %v235 = vsel %vm157, %v233, 0.0
        %s236 = scalar_lea.vmem [#allocation2], 128
        %237 = vst [vmem:[%s236] sm:$0xff] %v234
        %238 = vst [vmem:[%s236 + $0x8] sm:$0xff] %v235
        %239 = vrot.lane.b32.xlu0 %v166, 126
        %v240 = vpop.permute.xlu0 %239
        %241 = vrot.lane.b32.xlu0 %v167, 126
        %v242 = vpop.permute.xlu0 %241
        %v243 = vsel %vm158, %v240, 0.0
        %v244 = vsel %vm158, %v242, 0.0
        %s245 = scalar_lea.vmem [#allocation2], 144
        %246 = vst [vmem:[%s245] sm:$0xff] %v243
        %247 = vst [vmem:[%s245 + $0x8] sm:$0xff] %v244
        %248 = vrot.lane.b32.xlu0 %v169, 2
        %v249 = vpop.permute.xlu0 %248
        %250 = vrot.lane.b32.xlu0 %v170, 2
        %v251 = vpop.permute.xlu0 %250
        %v252 = vsel %vm155, %v249, 0.0
        %v253 = vsel %vm155, %v251, 0.0
        %s254 = scalar_lea.vmem [#allocation2], 160
        %255 = vst [vmem:[%s254] sm:$0xff] %v252
        %256 = vst [vmem:[%s254 + $0x8] sm:$0xff] %v253
        %257 = vrot.lane.b32.xlu0 %v169, 1
        %v258 = vpop.permute.xlu0 %257
        %259 = vrot.lane.b32.xlu0 %v170, 1
        %v260 = vpop.permute.xlu0 %259
        %v261 = vsel %vm156, %v258, 0.0
        %v262 = vsel %vm156, %v260, 0.0
        %s263 = scalar_lea.vmem [#allocation2], 176
        %264 = vst [vmem:[%s263] sm:$0xff] %v261
        %265 = vst [vmem:[%s263 + $0x8] sm:$0xff] %v262
        %s266 = scalar_lea.vmem [#allocation2], 192
        %267 = vst [vmem:[%s266] sm:$0xff] %v169
        %268 = vst [vmem:[%s266 + $0x8] sm:$0xff] %v170
        %269 = vrot.lane.b32.xlu0 %v169, 127
        %v270 = vpop.permute.xlu0 %269
        %271 = vrot.lane.b32.xlu0 %v170, 127
        %v272 = vpop.permute.xlu0 %271
        %v273 = vsel %vm157, %v270, 0.0
        %v274 = vsel %vm157, %v272, 0.0
        %s275 = scalar_lea.vmem [#allocation2], 208
        %276 = vst [vmem:[%s275] sm:$0xff] %v273
        %277 = vst [vmem:[%s275 + $0x8] sm:$0xff] %v274
        %278 = vrot.lane.b32.xlu0 %v169, 126
        %v279 = vpop.permute.xlu0 %278
        %280 = vrot.lane.b32.xlu0 %v170, 126
        %v281 = vpop.permute.xlu0 %280
        %v282 = vsel %vm158, %v279, 0.0
        %v283 = vsel %vm158, %v281, 0.0
        %s284 = scalar_lea.vmem [#allocation2], 224
        %285 = vst [vmem:[%s284] sm:$0xff] %v282
        %286 = vst [vmem:[%s284 + $0x8] sm:$0xff] %v283
        %p287 = scmp.eq.s32.totalorder %s23, 0
        // Predicated region
        $region29: #{tpu_custom_call.1} parent=23 // pred_check
          %p288 = pneg %p287
        $region30: #{tpu_custom_call.1} parent=23 // pred_check_branch
          %290 = sbr.rel (%p288) target = $region32
        $region31: #{tpu_custom_call.1} parent=23 // pred_region
          %v291 = vld [vmem:[#allocation2] sm:$0xff]
          %v292 = vld [vmem:[#allocation2 + $0x8] sm:$0xff]
          %v293 = vrot.slane %v291, 7
          %v294 = vrot.slane %v292, 7
          %vm295 = vcmp.lt.s32.totalorder %v153, 1
          %v296 = vsel %vm295, %v293, %v294
          %v297 = vsel %vm295, %v294, %v293
          %v298 = vsel %vm159, %v297, 0.0
          %v299 = vsel %vm160, %v296, 0.0
          %v300 = vsub.f32 %v163, %v298
          %v301 = vsub.f32 %v164, %v299
          %v302 = vld [vmem:[%s215] sm:$0xff]
          %v303 = vld [vmem:[%s215 + $0x8] sm:$0xff]
          %v304 = vrot.slane %v302, 7
          %v305 = vrot.slane %v303, 7
          %v306 = vsel %vm295, %v304, %v305
          %v307 = vsel %vm295, %v305, %v304
          %v308 = vsel %vm159, %v307, 0.0
          %v309 = vsel %vm160, %v306, 0.0
          %v310 = vsub.f32 %v166, %v308
          %v311 = vsub.f32 %v167, %v309
          %v312 = vld [vmem:[%s254] sm:$0xff]
          %v313 = vld [vmem:[%s254 + $0x8] sm:$0xff]
          %v314 = vrot.slane %v312, 7
          %v315 = vrot.slane %v313, 7
          %v316 = vsel %vm295, %v314, %v315
          %v317 = vsel %vm295, %v315, %v314
          %v318 = vsel %vm159, %v317, 0.0
          %v319 = vsel %vm160, %v316, 0.0
          %v320 = vsub.f32 %v169, %v318
          %v321 = vsub.f32 %v170, %v319
          %v322 = vmul.f32 %v300, %v300
          %v323 = vmul.f32 %v301, %v301
          %v324 = vmul.f32 %v310, %v310
          %v325 = vmul.f32 %v311, %v311
          %v326 = vadd.f32 %v322, %v324
          %v327 = vadd.f32 %v323, %v325
          %v328 = vmul.f32 %v320, %v320
          %v329 = vmul.f32 %v321, %v321
          %v330 = vadd.f32 %v326, %v328
          %v331 = vadd.f32 %v327, %v329
          %v332 = vmul.f32 %v330, -2222.2222
          %v333 = vmul.f32 %v331, -2222.2222
          %v334 = vmul.f32 %v332, 1.442695
          %v335 = vpow.pop %v334
          %v336 = vmul.f32 %v333, 1.442695
          %v337 = vpow.pop %v336
          %338 = vst [vmem:[%s148] sm:$0xff] %v335
          %339 = vst [vmem:[%s148 + $0x8] sm:$0xff] %v337
          %s340 = scalar_lea.vmem %s148, 112 [#allocation6]
          %341 = vst [vmem:[%s340] sm:$0xff] %v335
          %342 = vst [vmem:[%s340 + $0x8] sm:$0xff] %v337
          %v343 = vmul.f32 %v330, -5000.0
          %v344 = vmul.f32 %v331, -5000.0
          %v345 = vmul.f32 %v343, 1.442695
          %v346 = vpow.pop %v345
          %v347 = vmul.f32 %v344, 1.442695
          %v348 = vpow.pop %v347
          %s349 = scalar_lea.vmem %s148, 224 [#allocation6]
          %350 = vst [vmem:[%s349] sm:$0xff] %v346
          %351 = vst [vmem:[%s349 + $0x8] sm:$0xff] %v348
          %s352 = scalar_lea.vmem %s148, 336 [#allocation6]
          %353 = vst [vmem:[%s352] sm:$0xff] %v346
          %354 = vst [vmem:[%s352 + $0x8] sm:$0xff] %v348
          %v355 = vld [vmem:[%s185] sm:$0xff]
          %v356 = vld [vmem:[%s185 + $0x8] sm:$0xff]
          %v357 = vrot.slane %v355, 7
          %v358 = vrot.slane %v356, 7
          %v359 = vsel %vm295, %v357, %v358
          %v360 = vsel %vm295, %v358, %v357
          %v361 = vsel %vm159, %v360, 0.0
          %v362 = vsel %vm160, %v359, 0.0
          %v363 = vsub.f32 %v163, %v361
          %v364 = vsub.f32 %v164, %v362
          %v365 = vld [vmem:[%s224] sm:$0xff]
          %v366 = vld [vmem:[%s224 + $0x8] sm:$0xff]
          %v367 = vrot.slane %v365, 7
          %v368 = vrot.slane %v366, 7
          %v369 = vsel %vm295, %v367, %v368
          %v370 = vsel %vm295, %v368, %v367
          %v371 = vsel %vm159, %v370, 0.0
          %v372 = vsel %vm160, %v369, 0.0
          %v373 = vsub.f32 %v166, %v371
          %v374 = vsub.f32 %v167, %v372
          %v375 = vld [vmem:[%s263] sm:$0xff]
          %v376 = vld [vmem:[%s263 + $0x8] sm:$0xff]
          %v377 = vrot.slane %v375, 7
          %v378 = vrot.slane %v376, 7
          %v379 = vsel %vm295, %v377, %v378
          %v380 = vsel %vm295, %v378, %v377
          %v381 = vsel %vm159, %v380, 0.0
          %v382 = vsel %vm160, %v379, 0.0
          %v383 = vsub.f32 %v169, %v381
          %v384 = vsub.f32 %v170, %v382
          %v385 = vmul.f32 %v363, %v363
          %v386 = vmul.f32 %v364, %v364
          %v387 = vmul.f32 %v373, %v373
          %v388 = vmul.f32 %v374, %v374
          %v389 = vadd.f32 %v385, %v387
          %v390 = vadd.f32 %v386, %v388
          %v391 = vmul.f32 %v383, %v383
          %v392 = vmul.f32 %v384, %v384
          %v393 = vadd.f32 %v389, %v391
          %v394 = vadd.f32 %v390, %v392
          %v395 = vmul.f32 %v393, -2222.2222
          %v396 = vmul.f32 %v394, -2222.2222
          %v397 = vmul.f32 %v395, 1.442695
          %v398 = vpow.pop %v397
          %v399 = vmul.f32 %v396, 1.442695
          %v400 = vpow.pop %v399
          %s401 = scalar_lea.vmem %s148, 16 [#allocation6]
          %402 = vst [vmem:[%s401] sm:$0xff] %v398
          %403 = vst [vmem:[%s401 + $0x8] sm:$0xff] %v400
          %s404 = scalar_lea.vmem %s148, 128 [#allocation6]
          %405 = vst [vmem:[%s404] sm:$0xff] %v398
          %406 = vst [vmem:[%s404 + $0x8] sm:$0xff] %v400
          %v407 = vmul.f32 %v393, -5000.0
          %v408 = vmul.f32 %v394, -5000.0
          %v409 = vmul.f32 %v407, 1.442695
          %v410 = vpow.pop %v409
          %v411 = vmul.f32 %v408, 1.442695
          %v412 = vpow.pop %v411
          %s413 = scalar_lea.vmem %s148, 240 [#allocation6]
          %414 = vst [vmem:[%s413] sm:$0xff] %v410
          %415 = vst [vmem:[%s413 + $0x8] sm:$0xff] %v412
          %s416 = scalar_lea.vmem %s148, 352 [#allocation6]
          %417 = vst [vmem:[%s416] sm:$0xff] %v410
          %418 = vst [vmem:[%s416 + $0x8] sm:$0xff] %v412
          %v419 = vrot.slane %v163, 7
          %v420 = vrot.slane %v164, 7
          %v421 = vsel %vm295, %v419, %v420
          %v422 = vsel %vm295, %v420, %v419
          %v423 = vsel %vm159, %v422, 0.0
          %v424 = vsel %vm160, %v421, 0.0
          %v425 = vsub.f32 %v163, %v423
          %v426 = vsub.f32 %v164, %v424
          %v427 = vrot.slane %v166, 7
          %v428 = vrot.slane %v167, 7
          %v429 = vsel %vm295, %v427, %v428
          %v430 = vsel %vm295, %v428, %v427
          %v431 = vsel %vm159, %v430, 0.0
          %v432 = vsel %vm160, %v429, 0.0
          %v433 = vsub.f32 %v166, %v431
          %v434 = vsub.f32 %v167, %v432
          %v435 = vrot.slane %v169, 7
          %v436 = vrot.slane %v170, 7
          %v437 = vsel %vm295, %v435, %v436
          %v438 = vsel %vm295, %v436, %v435
          %v439 = vsel %vm159, %v438, 0.0
          %v440 = vsel %vm160, %v437, 0.0
          %v441 = vsub.f32 %v169, %v439
          %v442 = vsub.f32 %v170, %v440
          %v443 = vmul.f32 %v425, %v425
          %v444 = vmul.f32 %v426, %v426
          %v445 = vmul.f32 %v433, %v433
          %v446 = vmul.f32 %v434, %v434
          %v447 = vadd.f32 %v443, %v445
          %v448 = vadd.f32 %v444, %v446
          %v449 = vmul.f32 %v441, %v441
          %v450 = vmul.f32 %v442, %v442
          %v451 = vadd.f32 %v447, %v449
          %v452 = vadd.f32 %v448, %v450
          %v453 = vmul.f32 %v451, -2222.2222
          %v454 = vmul.f32 %v452, -2222.2222
          %v455 = vmul.f32 %v453, 1.442695
          %v456 = vpow.pop %v455
          %v457 = vmul.f32 %v454, 1.442695
          %v458 = vpow.pop %v457
          %s459 = scalar_lea.vmem %s148, 32 [#allocation6]
          %460 = vst [vmem:[%s459] sm:$0xff] %v456
          %461 = vst [vmem:[%s459 + $0x8] sm:$0xff] %v458
          %s462 = scalar_lea.vmem %s148, 144 [#allocation6]
          %463 = vst [vmem:[%s462] sm:$0xff] %v456
          %464 = vst [vmem:[%s462 + $0x8] sm:$0xff] %v458
          %v465 = vmul.f32 %v451, -5000.0
          %v466 = vmul.f32 %v452, -5000.0
          %v467 = vmul.f32 %v465, 1.442695
          %v468 = vpow.pop %v467
          %v469 = vmul.f32 %v466, 1.442695
          %v470 = vpow.pop %v469
          %s471 = scalar_lea.vmem %s148, 256 [#allocation6]
          %472 = vst [vmem:[%s471] sm:$0xff] %v468
          %473 = vst [vmem:[%s471 + $0x8] sm:$0xff] %v470
          %s474 = scalar_lea.vmem %s148, 368 [#allocation6]
          %475 = vst [vmem:[%s474] sm:$0xff] %v468
          %476 = vst [vmem:[%s474 + $0x8] sm:$0xff] %v470
          %v477 = vld [vmem:[%s197] sm:$0xff]
          %v478 = vld [vmem:[%s197 + $0x8] sm:$0xff]
          %v479 = vrot.slane %v477, 7
          %v480 = vrot.slane %v478, 7
          %v481 = vsel %vm295, %v479, %v480
          %v482 = vsel %vm295, %v480, %v479
          %v483 = vsel %vm159, %v482, 0.0
          %v484 = vsel %vm160, %v481, 0.0
          %v485 = vsub.f32 %v163, %v483
          %v486 = vsub.f32 %v164, %v484
          %v487 = vld [vmem:[%s236] sm:$0xff]
          %v488 = vld [vmem:[%s236 + $0x8] sm:$0xff]
          %v489 = vrot.slane %v487, 7
          %v490 = vrot.slane %v488, 7
          %v491 = vsel %vm295, %v489, %v490
          %v492 = vsel %vm295, %v490, %v489
          %v493 = vsel %vm159, %v492, 0.0
          %v494 = vsel %vm160, %v491, 0.0
          %v495 = vsub.f32 %v166, %v493
          %v496 = vsub.f32 %v167, %v494
          %v497 = vld [vmem:[%s275] sm:$0xff]
          %v498 = vld [vmem:[%s275 + $0x8] sm:$0xff]
          %v499 = vrot.slane %v497, 7
          %v500 = vrot.slane %v498, 7
          %v501 = vsel %vm295, %v499, %v500
          %v502 = vsel %vm295, %v500, %v499
          %v503 = vsel %vm159, %v502, 0.0
          %v504 = vsel %vm160, %v501, 0.0
          %v505 = vsub.f32 %v169, %v503
          %v506 = vsub.f32 %v170, %v504
          %v507 = vmul.f32 %v485, %v485
          %v508 = vmul.f32 %v486, %v486
          %v509 = vmul.f32 %v495, %v495
          %v510 = vmul.f32 %v496, %v496
          %v511 = vadd.f32 %v507, %v509
          %v512 = vadd.f32 %v508, %v510
          %v513 = vmul.f32 %v505, %v505
          %v514 = vmul.f32 %v506, %v506
          %v515 = vadd.f32 %v511, %v513
          %v516 = vadd.f32 %v512, %v514
          %v517 = vmul.f32 %v515, -2222.2222
          %v518 = vmul.f32 %v516, -2222.2222
          %v519 = vmul.f32 %v517, 1.442695
          %v520 = vpow.pop %v519
          %v521 = vmul.f32 %v518, 1.442695
          %v522 = vpow.pop %v521
          %s523 = scalar_lea.vmem %s148, 48 [#allocation6]
          %524 = vst [vmem:[%s523] sm:$0xff] %v520
          %525 = vst [vmem:[%s523 + $0x8] sm:$0xff] %v522
          %s526 = scalar_lea.vmem %s148, 160 [#allocation6]
          %527 = vst [vmem:[%s526] sm:$0xff] %v520
          %528 = vst [vmem:[%s526 + $0x8] sm:$0xff] %v522
          %v529 = vmul.f32 %v515, -5000.0
          %v530 = vmul.f32 %v516, -5000.0
          %v531 = vmul.f32 %v529, 1.442695
          %v532 = vpow.pop %v531
          %v533 = vmul.f32 %v530, 1.442695
          %v534 = vpow.pop %v533
          %s535 = scalar_lea.vmem %s148, 272 [#allocation6]
          %536 = vst [vmem:[%s535] sm:$0xff] %v532
          %537 = vst [vmem:[%s535 + $0x8] sm:$0xff] %v534
          %s538 = scalar_lea.vmem %s148, 384 [#allocation6]
          %539 = vst [vmem:[%s538] sm:$0xff] %v532
          %540 = vst [vmem:[%s538 + $0x8] sm:$0xff] %v534
          %v541 = vld [vmem:[%s206] sm:$0xff]
          %v542 = vld [vmem:[%s206 + $0x8] sm:$0xff]
          %v543 = vrot.slane %v541, 7
          %v544 = vrot.slane %v542, 7
          %v545 = vsel %vm295, %v543, %v544
          %v546 = vsel %vm295, %v544, %v543
          %v547 = vsel %vm159, %v546, 0.0
          %v548 = vsel %vm160, %v545, 0.0
          %v549 = vsub.f32 %v163, %v547
          %v550 = vsub.f32 %v164, %v548
          %v551 = vld [vmem:[%s245] sm:$0xff]
          %v552 = vld [vmem:[%s245 + $0x8] sm:$0xff]
          %v553 = vrot.slane %v551, 7
          %v554 = vrot.slane %v552, 7
          %v555 = vsel %vm295, %v553, %v554
          %v556 = vsel %vm295, %v554, %v553
          %v557 = vsel %vm159, %v556, 0.0
          %v558 = vsel %vm160, %v555, 0.0
          %v559 = vsub.f32 %v166, %v557
          %v560 = vsub.f32 %v167, %v558
          %v561 = vld [vmem:[%s284] sm:$0xff]
          %v562 = vld [vmem:[%s284 + $0x8] sm:$0xff]
          %v563 = vrot.slane %v561, 7
          %v564 = vrot.slane %v562, 7
          %v565 = vsel %vm295, %v563, %v564
          %v566 = vsel %vm295, %v564, %v563
          %v567 = vsel %vm159, %v566, 0.0
          %v568 = vsel %vm160, %v565, 0.0
          %v569 = vsub.f32 %v169, %v567
          %v570 = vsub.f32 %v170, %v568
          %v571 = vmul.f32 %v549, %v549
          %v572 = vmul.f32 %v550, %v550
          %v573 = vmul.f32 %v559, %v559
          %v574 = vmul.f32 %v560, %v560
          %v575 = vadd.f32 %v571, %v573
          %v576 = vadd.f32 %v572, %v574
          %v577 = vmul.f32 %v569, %v569
          %v578 = vmul.f32 %v570, %v570
          %v579 = vadd.f32 %v575, %v577
          %v580 = vadd.f32 %v576, %v578
          %v581 = vmul.f32 %v579, -2222.2222
          %v582 = vmul.f32 %v580, -2222.2222
          %v583 = vmul.f32 %v581, 1.442695
          %v584 = vpow.pop %v583
          %v585 = vmul.f32 %v582, 1.442695
          %v586 = vpow.pop %v585
          %s587 = scalar_lea.vmem %s148, 64 [#allocation6]
          %588 = vst [vmem:[%s587] sm:$0xff] %v584
          %589 = vst [vmem:[%s587 + $0x8] sm:$0xff] %v586
          %s590 = scalar_lea.vmem %s148, 176 [#allocation6]
          %591 = vst [vmem:[%s590] sm:$0xff] %v584
          %592 = vst [vmem:[%s590 + $0x8] sm:$0xff] %v586
          %v593 = vmul.f32 %v579, -5000.0
          %v594 = vmul.f32 %v580, -5000.0
          %v595 = vmul.f32 %v593, 1.442695
          %v596 = vpow.pop %v595
          %v597 = vmul.f32 %v594, 1.442695
          %v598 = vpow.pop %v597
          %s599 = scalar_lea.vmem %s148, 288 [#allocation6]
          %600 = vst [vmem:[%s599] sm:$0xff] %v596
          %601 = vst [vmem:[%s599 + $0x8] sm:$0xff] %v598
          %s602 = scalar_lea.vmem %s148, 400 [#allocation6]
          %603 = vst [vmem:[%s602] sm:$0xff] %v596
          %604 = vst [vmem:[%s602 + $0x8] sm:$0xff] %v598
          %v605 = vld [vmem:[#allocation2] sm:$0xff]
          %v606 = vld [vmem:[#allocation2 + $0x8] sm:$0xff]
          %v607 = vsub.f32 %v163, %v605
          %v608 = vsub.f32 %v164, %v606
          %v609 = vld [vmem:[%s215] sm:$0xff]
          %v610 = vld [vmem:[%s215 + $0x8] sm:$0xff]
          %v611 = vsub.f32 %v166, %v609
          %v612 = vsub.f32 %v167, %v610
          %v613 = vld [vmem:[%s254] sm:$0xff]
          %v614 = vld [vmem:[%s254 + $0x8] sm:$0xff]
          %v615 = vsub.f32 %v169, %v613
          %v616 = vsub.f32 %v170, %v614
          %v617 = vmul.f32 %v607, %v607
          %v618 = vmul.f32 %v608, %v608
          %v619 = vmul.f32 %v611, %v611
          %v620 = vmul.f32 %v612, %v612
          %v621 = vadd.f32 %v617, %v619
          %v622 = vadd.f32 %v618, %v620
          %v623 = vmul.f32 %v615, %v615
          %v624 = vmul.f32 %v616, %v616
          %v625 = vadd.f32 %v621, %v623
          %v626 = vadd.f32 %v622, %v624
          %v627 = vmul.f32 %v625, -2222.2222
          %v628 = vmul.f32 %v626, -2222.2222
          %v629 = vmul.f32 %v627, 1.442695
          %v630 = vpow.pop %v629
          %v631 = vmul.f32 %v628, 1.442695
          %v632 = vpow.pop %v631
          %s633 = scalar_lea.vmem %s148, 80 [#allocation6]
          %634 = vst [vmem:[%s633] sm:$0xff] %v630
          %635 = vst [vmem:[%s633 + $0x8] sm:$0xff] %v632
          %s636 = scalar_lea.vmem %s148, 192 [#allocation6]
          %637 = vst [vmem:[%s636] sm:$0xff] %v630
          %638 = vst [vmem:[%s636 + $0x8] sm:$0xff] %v632
          %v639 = vmul.f32 %v625, -5000.0
          %v640 = vmul.f32 %v626, -5000.0
          %v641 = vmul.f32 %v639, 1.442695
          %v642 = vpow.pop %v641
          %v643 = vmul.f32 %v640, 1.442695
          %v644 = vpow.pop %v643
          %s645 = scalar_lea.vmem %s148, 304 [#allocation6]
          %646 = vst [vmem:[%s645] sm:$0xff] %v642
          %647 = vst [vmem:[%s645 + $0x8] sm:$0xff] %v644
          %s648 = scalar_lea.vmem %s148, 416 [#allocation6]
          %649 = vst [vmem:[%s648] sm:$0xff] %v642
          %650 = vst [vmem:[%s648 + $0x8] sm:$0xff] %v644
          %v651 = vld [vmem:[%s185] sm:$0xff]
          %v652 = vld [vmem:[%s185 + $0x8] sm:$0xff]
          %v653 = vsub.f32 %v163, %v651
          %v654 = vsub.f32 %v164, %v652
          %v655 = vld [vmem:[%s224] sm:$0xff]
          %v656 = vld [vmem:[%s224 + $0x8] sm:$0xff]
          %v657 = vsub.f32 %v166, %v655
          %v658 = vsub.f32 %v167, %v656
          %v659 = vld [vmem:[%s263] sm:$0xff]
          %v660 = vld [vmem:[%s263 + $0x8] sm:$0xff]
          %v661 = vsub.f32 %v169, %v659
          %v662 = vsub.f32 %v170, %v660
          %v663 = vmul.f32 %v653, %v653
          %v664 = vmul.f32 %v654, %v654
          %v665 = vmul.f32 %v657, %v657
          %v666 = vmul.f32 %v658, %v658
          %v667 = vadd.f32 %v663, %v665
          %v668 = vadd.f32 %v664, %v666
          %v669 = vmul.f32 %v661, %v661
          %v670 = vmul.f32 %v662, %v662
          %v671 = vadd.f32 %v667, %v669
          %v672 = vadd.f32 %v668, %v670
          %v673 = vmul.f32 %v671, -2222.2222
          %v674 = vmul.f32 %v672, -2222.2222
          %v675 = vmul.f32 %v673, 1.442695
          %v676 = vpow.pop %v675
          %v677 = vmul.f32 %v674, 1.442695
          %v678 = vpow.pop %v677
          %s679 = scalar_lea.vmem %s148, 96 [#allocation6]
          %680 = vst [vmem:[%s679] sm:$0xff] %v676
          %681 = vst [vmem:[%s679 + $0x8] sm:$0xff] %v678
          %s682 = scalar_lea.vmem %s148, 208 [#allocation6]
          %683 = vst [vmem:[%s682] sm:$0xff] %v676
          %684 = vst [vmem:[%s682 + $0x8] sm:$0xff] %v678
          %v685 = vmul.f32 %v671, -5000.0
          %v686 = vmul.f32 %v672, -5000.0
          %v687 = vmul.f32 %v685, 1.442695
          %v688 = vpow.pop %v687
          %v689 = vmul.f32 %v686, 1.442695
          %v690 = vpow.pop %v689
          %s691 = scalar_lea.vmem %s148, 320 [#allocation6]
          %692 = vst [vmem:[%s691] sm:$0xff] %v688
          %693 = vst [vmem:[%s691 + $0x8] sm:$0xff] %v690
          %s694 = scalar_lea.vmem %s148, 432 [#allocation6]
          %695 = vst [vmem:[%s694] sm:$0xff] %v688
          %696 = vst [vmem:[%s694 + $0x8] sm:$0xff] %v690
        $region32: #{tpu_custom_call.1} parent=23 // pred_fallthru
          _
        %p697 = scmp.eq.s32.totalorder %s23, 1
        // Predicated region
        $region33: #{tpu_custom_call.1} parent=23 // pred_check
          %p698 = pneg %p697
        $region34: #{tpu_custom_call.1} parent=23 // pred_check_branch
          %700 = sbr.rel (%p698) target = $region36
        $region35: #{tpu_custom_call.1} parent=23 // pred_region
          %v701 = vld [vmem:[%s197] sm:$0xff]
          %v702 = vld [vmem:[%s197 + $0x8] sm:$0xff]
          %v703 = vsub.f32 %v163, %v701
          %v704 = vsub.f32 %v164, %v702
          %v705 = vld [vmem:[%s236] sm:$0xff]
          %v706 = vld [vmem:[%s236 + $0x8] sm:$0xff]
          %v707 = vsub.f32 %v166, %v705
          %v708 = vsub.f32 %v167, %v706
          %v709 = vld [vmem:[%s275] sm:$0xff]
          %v710 = vld [vmem:[%s275 + $0x8] sm:$0xff]
          %v711 = vsub.f32 %v169, %v709
          %v712 = vsub.f32 %v170, %v710
          %v713 = vmul.f32 %v703, %v703
          %v714 = vmul.f32 %v704, %v704
          %v715 = vmul.f32 %v707, %v707
          %v716 = vmul.f32 %v708, %v708
          %v717 = vadd.f32 %v713, %v715
          %v718 = vadd.f32 %v714, %v716
          %v719 = vmul.f32 %v711, %v711
          %v720 = vmul.f32 %v712, %v712
          %v721 = vadd.f32 %v717, %v719
          %v722 = vadd.f32 %v718, %v720
          %v723 = vmul.f32 %v721, -2222.2222
          %v724 = vmul.f32 %v722, -2222.2222
          %v725 = vmul.f32 %v723, 1.442695
          %v726 = vpow.pop %v725
          %v727 = vmul.f32 %v724, 1.442695
          %v728 = vpow.pop %v727
          %729 = vst [vmem:[%s148] sm:$0xff] %v726
          %730 = vst [vmem:[%s148 + $0x8] sm:$0xff] %v728
          %s731 = scalar_lea.vmem %s148, 112 [#allocation6]
          %732 = vst [vmem:[%s731] sm:$0xff] %v726
          %733 = vst [vmem:[%s731 + $0x8] sm:$0xff] %v728
          %v734 = vmul.f32 %v721, -5000.0
          %v735 = vmul.f32 %v722, -5000.0
          %v736 = vmul.f32 %v734, 1.442695
          %v737 = vpow.pop %v736
          %v738 = vmul.f32 %v735, 1.442695
          %v739 = vpow.pop %v738
          %s740 = scalar_lea.vmem %s148, 224 [#allocation6]
          %741 = vst [vmem:[%s740] sm:$0xff] %v737
          %742 = vst [vmem:[%s740 + $0x8] sm:$0xff] %v739
          %s743 = scalar_lea.vmem %s148, 336 [#allocation6]
          %744 = vst [vmem:[%s743] sm:$0xff] %v737
          %745 = vst [vmem:[%s743 + $0x8] sm:$0xff] %v739
          %v746 = vld [vmem:[%s206] sm:$0xff]
          %v747 = vld [vmem:[%s206 + $0x8] sm:$0xff]
          %v748 = vsub.f32 %v163, %v746
          %v749 = vsub.f32 %v164, %v747
          %v750 = vld [vmem:[%s245] sm:$0xff]
          %v751 = vld [vmem:[%s245 + $0x8] sm:$0xff]
          %v752 = vsub.f32 %v166, %v750
          %v753 = vsub.f32 %v167, %v751
          %v754 = vld [vmem:[%s284] sm:$0xff]
          %v755 = vld [vmem:[%s284 + $0x8] sm:$0xff]
          %v756 = vsub.f32 %v169, %v754
          %v757 = vsub.f32 %v170, %v755
          %v758 = vmul.f32 %v748, %v748
          %v759 = vmul.f32 %v749, %v749
          %v760 = vmul.f32 %v752, %v752
          %v761 = vmul.f32 %v753, %v753
          %v762 = vadd.f32 %v758, %v760
          %v763 = vadd.f32 %v759, %v761
          %v764 = vmul.f32 %v756, %v756
          %v765 = vmul.f32 %v757, %v757
          %v766 = vadd.f32 %v762, %v764
          %v767 = vadd.f32 %v763, %v765
          %v768 = vmul.f32 %v766, -2222.2222
          %v769 = vmul.f32 %v767, -2222.2222
          %v770 = vmul.f32 %v768, 1.442695
          %v771 = vpow.pop %v770
          %v772 = vmul.f32 %v769, 1.442695
          %v773 = vpow.pop %v772
          %s774 = scalar_lea.vmem %s148, 16 [#allocation6]
          %775 = vst [vmem:[%s774] sm:$0xff] %v771
          %776 = vst [vmem:[%s774 + $0x8] sm:$0xff] %v773
          %s777 = scalar_lea.vmem %s148, 128 [#allocation6]
          %778 = vst [vmem:[%s777] sm:$0xff] %v771
          %779 = vst [vmem:[%s777 + $0x8] sm:$0xff] %v773
          %v780 = vmul.f32 %v766, -5000.0
          %v781 = vmul.f32 %v767, -5000.0
          %v782 = vmul.f32 %v780, 1.442695
          %v783 = vpow.pop %v782
          %v784 = vmul.f32 %v781, 1.442695
          %v785 = vpow.pop %v784
          %s786 = scalar_lea.vmem %s148, 240 [#allocation6]
          %787 = vst [vmem:[%s786] sm:$0xff] %v783
          %788 = vst [vmem:[%s786 + $0x8] sm:$0xff] %v785
          %s789 = scalar_lea.vmem %s148, 352 [#allocation6]
          %790 = vst [vmem:[%s789] sm:$0xff] %v783
          %791 = vst [vmem:[%s789 + $0x8] sm:$0xff] %v785
          %v792 = vld [vmem:[#allocation2] sm:$0xff]
          %v793 = vld [vmem:[#allocation2 + $0x8] sm:$0xff]
          %v794 = vrot.slane %v792, 1
          %v795 = vrot.slane %v793, 1
          %vm796 = vcmp.lt.s32.totalorder %v153, 7
          %v797 = vsel %vm796, %v794, %v795
          %v798 = vsel %vm796, %v795, %v794
          %v799 = vsel %vm161, %v797, 0.0
          %v800 = vsel %vm162, %v798, 0.0
          %v801 = vsub.f32 %v163, %v799
          %v802 = vsub.f32 %v164, %v800
          %v803 = vld [vmem:[%s215] sm:$0xff]
          %v804 = vld [vmem:[%s215 + $0x8] sm:$0xff]
          %v805 = vrot.slane %v803, 1
          %v806 = vrot.slane %v804, 1
          %v807 = vsel %vm796, %v805, %v806
          %v808 = vsel %vm796, %v806, %v805
          %v809 = vsel %vm161, %v807, 0.0
          %v810 = vsel %vm162, %v808, 0.0
          %v811 = vsub.f32 %v166, %v809
          %v812 = vsub.f32 %v167, %v810
          %v813 = vld [vmem:[%s254] sm:$0xff]
          %v814 = vld [vmem:[%s254 + $0x8] sm:$0xff]
          %v815 = vrot.slane %v813, 1
          %v816 = vrot.slane %v814, 1
          %v817 = vsel %vm796, %v815, %v816
          %v818 = vsel %vm796, %v816, %v815
          %v819 = vsel %vm161, %v817, 0.0
          %v820 = vsel %vm162, %v818, 0.0
          %v821 = vsub.f32 %v169, %v819
          %v822 = vsub.f32 %v170, %v820
          %v823 = vmul.f32 %v801, %v801
          %v824 = vmul.f32 %v802, %v802
          %v825 = vmul.f32 %v811, %v811
          %v826 = vmul.f32 %v812, %v812
          %v827 = vadd.f32 %v823, %v825
          %v828 = vadd.f32 %v824, %v826
          %v829 = vmul.f32 %v821, %v821
          %v830 = vmul.f32 %v822, %v822
          %v831 = vadd.f32 %v827, %v829
          %v832 = vadd.f32 %v828, %v830
          %v833 = vmul.f32 %v831, -2222.2222
          %v834 = vmul.f32 %v832, -2222.2222
          %v835 = vmul.f32 %v833, 1.442695
          %v836 = vpow.pop %v835
          %v837 = vmul.f32 %v834, 1.442695
          %v838 = vpow.pop %v837
          %s839 = scalar_lea.vmem %s148, 32 [#allocation6]
          %840 = vst [vmem:[%s839] sm:$0xff] %v836
          %841 = vst [vmem:[%s839 + $0x8] sm:$0xff] %v838
          %s842 = scalar_lea.vmem %s148, 144 [#allocation6]
          %843 = vst [vmem:[%s842] sm:$0xff] %v836
          %844 = vst [vmem:[%s842 + $0x8] sm:$0xff] %v838
          %v845 = vmul.f32 %v831, -5000.0
          %v846 = vmul.f32 %v832, -5000.0
          %v847 = vmul.f32 %v845, 1.442695
          %v848 = vpow.pop %v847
          %v849 = vmul.f32 %v846, 1.442695
          %v850 = vpow.pop %v849
          %s851 = scalar_lea.vmem %s148, 256 [#allocation6]
          %852 = vst [vmem:[%s851] sm:$0xff] %v848
          %853 = vst [vmem:[%s851 + $0x8] sm:$0xff] %v850
          %s854 = scalar_lea.vmem %s148, 368 [#allocation6]
          %855 = vst [vmem:[%s854] sm:$0xff] %v848
          %856 = vst [vmem:[%s854 + $0x8] sm:$0xff] %v850
          %v857 = vld [vmem:[%s185] sm:$0xff]
          %v858 = vld [vmem:[%s185 + $0x8] sm:$0xff]
          %v859 = vrot.slane %v857, 1
          %v860 = vrot.slane %v858, 1
          %v861 = vsel %vm796, %v859, %v860
          %v862 = vsel %vm796, %v860, %v859
          %v863 = vsel %vm161, %v861, 0.0
          %v864 = vsel %vm162, %v862, 0.0
          %v865 = vsub.f32 %v163, %v863
          %v866 = vsub.f32 %v164, %v864
          %v867 = vld [vmem:[%s224] sm:$0xff]
          %v868 = vld [vmem:[%s224 + $0x8] sm:$0xff]
          %v869 = vrot.slane %v867, 1
          %v870 = vrot.slane %v868, 1
          %v871 = vsel %vm796, %v869, %v870
          %v872 = vsel %vm796, %v870, %v869
          %v873 = vsel %vm161, %v871, 0.0
          %v874 = vsel %vm162, %v872, 0.0
          %v875 = vsub.f32 %v166, %v873
          %v876 = vsub.f32 %v167, %v874
          %v877 = vld [vmem:[%s263] sm:$0xff]
          %v878 = vld [vmem:[%s263 + $0x8] sm:$0xff]
          %v879 = vrot.slane %v877, 1
          %v880 = vrot.slane %v878, 1
          %v881 = vsel %vm796, %v879, %v880
          %v882 = vsel %vm796, %v880, %v879
          %v883 = vsel %vm161, %v881, 0.0
          %v884 = vsel %vm162, %v882, 0.0
          %v885 = vsub.f32 %v169, %v883
          %v886 = vsub.f32 %v170, %v884
          %v887 = vmul.f32 %v865, %v865
          %v888 = vmul.f32 %v866, %v866
          %v889 = vmul.f32 %v875, %v875
          %v890 = vmul.f32 %v876, %v876
          %v891 = vadd.f32 %v887, %v889
          %v892 = vadd.f32 %v888, %v890
          %v893 = vmul.f32 %v885, %v885
          %v894 = vmul.f32 %v886, %v886
          %v895 = vadd.f32 %v891, %v893
          %v896 = vadd.f32 %v892, %v894
          %v897 = vmul.f32 %v895, -2222.2222
          %v898 = vmul.f32 %v896, -2222.2222
          %v899 = vmul.f32 %v897, 1.442695
          %v900 = vpow.pop %v899
          %v901 = vmul.f32 %v898, 1.442695
          %v902 = vpow.pop %v901
          %s903 = scalar_lea.vmem %s148, 48 [#allocation6]
          %904 = vst [vmem:[%s903] sm:$0xff] %v900
          %905 = vst [vmem:[%s903 + $0x8] sm:$0xff] %v902
          %s906 = scalar_lea.vmem %s148, 160 [#allocation6]
          %907 = vst [vmem:[%s906] sm:$0xff] %v900
          %908 = vst [vmem:[%s906 + $0x8] sm:$0xff] %v902
          %v909 = vmul.f32 %v895, -5000.0
          %v910 = vmul.f32 %v896, -5000.0
          %v911 = vmul.f32 %v909, 1.442695
          %v912 = vpow.pop %v911
          %v913 = vmul.f32 %v910, 1.442695
          %v914 = vpow.pop %v913
          %s915 = scalar_lea.vmem %s148, 272 [#allocation6]
          %916 = vst [vmem:[%s915] sm:$0xff] %v912
          %917 = vst [vmem:[%s915 + $0x8] sm:$0xff] %v914
          %s918 = scalar_lea.vmem %s148, 384 [#allocation6]
          %919 = vst [vmem:[%s918] sm:$0xff] %v912
          %920 = vst [vmem:[%s918 + $0x8] sm:$0xff] %v914
          %v921 = vrot.slane %v163, 1
          %v922 = vrot.slane %v164, 1
          %v923 = vsel %vm796, %v921, %v922
          %v924 = vsel %vm796, %v922, %v921
          %v925 = vsel %vm161, %v923, 0.0
          %v926 = vsel %vm162, %v924, 0.0
          %v927 = vsub.f32 %v163, %v925
          %v928 = vsub.f32 %v164, %v926
          %v929 = vrot.slane %v166, 1
          %v930 = vrot.slane %v167, 1
          %v931 = vsel %vm796, %v929, %v930
          %v932 = vsel %vm796, %v930, %v929
          %v933 = vsel %vm161, %v931, 0.0
          %v934 = vsel %vm162, %v932, 0.0
          %v935 = vsub.f32 %v166, %v933
          %v936 = vsub.f32 %v167, %v934
          %v937 = vrot.slane %v169, 1
          %v938 = vrot.slane %v170, 1
          %v939 = vsel %vm796, %v937, %v938
          %v940 = vsel %vm796, %v938, %v937
          %v941 = vsel %vm161, %v939, 0.0
          %v942 = vsel %vm162, %v940, 0.0
          %v943 = vsub.f32 %v169, %v941
          %v944 = vsub.f32 %v170, %v942
          %v945 = vmul.f32 %v927, %v927
          %v946 = vmul.f32 %v928, %v928
          %v947 = vmul.f32 %v935, %v935
          %v948 = vmul.f32 %v936, %v936
          %v949 = vadd.f32 %v945, %v947
          %v950 = vadd.f32 %v946, %v948
          %v951 = vmul.f32 %v943, %v943
          %v952 = vmul.f32 %v944, %v944
          %v953 = vadd.f32 %v949, %v951
          %v954 = vadd.f32 %v950, %v952
          %v955 = vmul.f32 %v953, -2222.2222
          %v956 = vmul.f32 %v954, -2222.2222
          %v957 = vmul.f32 %v955, 1.442695
          %v958 = vpow.pop %v957
          %v959 = vmul.f32 %v956, 1.442695
          %v960 = vpow.pop %v959
          %s961 = scalar_lea.vmem %s148, 64 [#allocation6]
          %962 = vst [vmem:[%s961] sm:$0xff] %v958
          %963 = vst [vmem:[%s961 + $0x8] sm:$0xff] %v960
          %s964 = scalar_lea.vmem %s148, 176 [#allocation6]
          %965 = vst [vmem:[%s964] sm:$0xff] %v958
          %966 = vst [vmem:[%s964 + $0x8] sm:$0xff] %v960
          %v967 = vmul.f32 %v953, -5000.0
          %v968 = vmul.f32 %v954, -5000.0
          %v969 = vmul.f32 %v967, 1.442695
          %v970 = vpow.pop %v969
          %v971 = vmul.f32 %v968, 1.442695
          %v972 = vpow.pop %v971
          %s973 = scalar_lea.vmem %s148, 288 [#allocation6]
          %974 = vst [vmem:[%s973] sm:$0xff] %v970
          %975 = vst [vmem:[%s973 + $0x8] sm:$0xff] %v972
          %s976 = scalar_lea.vmem %s148, 400 [#allocation6]
          %977 = vst [vmem:[%s976] sm:$0xff] %v970
          %978 = vst [vmem:[%s976 + $0x8] sm:$0xff] %v972
          %v979 = vld [vmem:[%s197] sm:$0xff]
          %v980 = vld [vmem:[%s197 + $0x8] sm:$0xff]
          %v981 = vrot.slane %v979, 1
          %v982 = vrot.slane %v980, 1
          %v983 = vsel %vm796, %v981, %v982
          %v984 = vsel %vm796, %v982, %v981
          %v985 = vsel %vm161, %v983, 0.0
          %v986 = vsel %vm162, %v984, 0.0
          %v987 = vsub.f32 %v163, %v985
          %v988 = vsub.f32 %v164, %v986
          %v989 = vld [vmem:[%s236] sm:$0xff]
          %v990 = vld [vmem:[%s236 + $0x8] sm:$0xff]
          %v991 = vrot.slane %v989, 1
          %v992 = vrot.slane %v990, 1
          %v993 = vsel %vm796, %v991, %v992
          %v994 = vsel %vm796, %v992, %v991
          %v995 = vsel %vm161, %v993, 0.0
          %v996 = vsel %vm162, %v994, 0.0
          %v997 = vsub.f32 %v166, %v995
          %v998 = vsub.f32 %v167, %v996
          %v999 = vld [vmem:[%s275] sm:$0xff]
          %v1000 = vld [vmem:[%s275 + $0x8] sm:$0xff]
          %v1001 = vrot.slane %v999, 1
          %v1002 = vrot.slane %v1000, 1
          %v1003 = vsel %vm796, %v1001, %v1002
          %v1004 = vsel %vm796, %v1002, %v1001
          %v1005 = vsel %vm161, %v1003, 0.0
          %v1006 = vsel %vm162, %v1004, 0.0
          %v1007 = vsub.f32 %v169, %v1005
          %v1008 = vsub.f32 %v170, %v1006
          %v1009 = vmul.f32 %v987, %v987
          %v1010 = vmul.f32 %v988, %v988
          %v1011 = vmul.f32 %v997, %v997
          %v1012 = vmul.f32 %v998, %v998
          %v1013 = vadd.f32 %v1009, %v1011
          %v1014 = vadd.f32 %v1010, %v1012
          %v1015 = vmul.f32 %v1007, %v1007
          %v1016 = vmul.f32 %v1008, %v1008
          %v1017 = vadd.f32 %v1013, %v1015
          %v1018 = vadd.f32 %v1014, %v1016
          %v1019 = vmul.f32 %v1017, -2222.2222
          %v1020 = vmul.f32 %v1018, -2222.2222
          %v1021 = vmul.f32 %v1019, 1.442695
          %v1022 = vpow.pop %v1021
          %v1023 = vmul.f32 %v1020, 1.442695
          %v1024 = vpow.pop %v1023
          %s1025 = scalar_lea.vmem %s148, 80 [#allocation6]
          %1026 = vst [vmem:[%s1025] sm:$0xff] %v1022
          %1027 = vst [vmem:[%s1025 + $0x8] sm:$0xff] %v1024
          %s1028 = scalar_lea.vmem %s148, 192 [#allocation6]
          %1029 = vst [vmem:[%s1028] sm:$0xff] %v1022
          %1030 = vst [vmem:[%s1028 + $0x8] sm:$0xff] %v1024
          %v1031 = vmul.f32 %v1017, -5000.0
          %v1032 = vmul.f32 %v1018, -5000.0
          %v1033 = vmul.f32 %v1031, 1.442695
          %v1034 = vpow.pop %v1033
          %v1035 = vmul.f32 %v1032, 1.442695
          %v1036 = vpow.pop %v1035
          %s1037 = scalar_lea.vmem %s148, 304 [#allocation6]
          %1038 = vst [vmem:[%s1037] sm:$0xff] %v1034
          %1039 = vst [vmem:[%s1037 + $0x8] sm:$0xff] %v1036
          %s1040 = scalar_lea.vmem %s148, 416 [#allocation6]
          %1041 = vst [vmem:[%s1040] sm:$0xff] %v1034
          %1042 = vst [vmem:[%s1040 + $0x8] sm:$0xff] %v1036
          %v1043 = vld [vmem:[%s206] sm:$0xff]
          %v1044 = vld [vmem:[%s206 + $0x8] sm:$0xff]
          %v1045 = vrot.slane %v1043, 1
          %v1046 = vrot.slane %v1044, 1
          %v1047 = vsel %vm796, %v1045, %v1046
          %v1048 = vsel %vm796, %v1046, %v1045
          %v1049 = vsel %vm161, %v1047, 0.0
          %v1050 = vsel %vm162, %v1048, 0.0
          %v1051 = vsub.f32 %v163, %v1049
          %v1052 = vsub.f32 %v164, %v1050
          %v1053 = vld [vmem:[%s245] sm:$0xff]
          %v1054 = vld [vmem:[%s245 + $0x8] sm:$0xff]
          %v1055 = vrot.slane %v1053, 1
          %v1056 = vrot.slane %v1054, 1
          %v1057 = vsel %vm796, %v1055, %v1056
          %v1058 = vsel %vm796, %v1056, %v1055
          %v1059 = vsel %vm161, %v1057, 0.0
          %v1060 = vsel %vm162, %v1058, 0.0
          %v1061 = vsub.f32 %v166, %v1059
          %v1062 = vsub.f32 %v167, %v1060
          %v1063 = vld [vmem:[%s284] sm:$0xff]
          %v1064 = vld [vmem:[%s284 + $0x8] sm:$0xff]
          %v1065 = vrot.slane %v1063, 1
          %v1066 = vrot.slane %v1064, 1
          %v1067 = vsel %vm796, %v1065, %v1066
          %v1068 = vsel %vm796, %v1066, %v1065
          %v1069 = vsel %vm161, %v1067, 0.0
          %v1070 = vsel %vm162, %v1068, 0.0
          %v1071 = vsub.f32 %v169, %v1069
          %v1072 = vsub.f32 %v170, %v1070
          %v1073 = vmul.f32 %v1051, %v1051
          %v1074 = vmul.f32 %v1052, %v1052
          %v1075 = vmul.f32 %v1061, %v1061
          %v1076 = vmul.f32 %v1062, %v1062
          %v1077 = vadd.f32 %v1073, %v1075
          %v1078 = vadd.f32 %v1074, %v1076
          %v1079 = vmul.f32 %v1071, %v1071
          %v1080 = vmul.f32 %v1072, %v1072
          %v1081 = vadd.f32 %v1077, %v1079
          %v1082 = vadd.f32 %v1078, %v1080
          %v1083 = vmul.f32 %v1081, -2222.2222
          %v1084 = vmul.f32 %v1082, -2222.2222
          %v1085 = vmul.f32 %v1083, 1.442695
          %v1086 = vpow.pop %v1085
          %v1087 = vmul.f32 %v1084, 1.442695
          %v1088 = vpow.pop %v1087
          %s1089 = scalar_lea.vmem %s148, 96 [#allocation6]
          %1090 = vst [vmem:[%s1089] sm:$0xff] %v1086
          %1091 = vst [vmem:[%s1089 + $0x8] sm:$0xff] %v1088
          %s1092 = scalar_lea.vmem %s148, 208 [#allocation6]
          %1093 = vst [vmem:[%s1092] sm:$0xff] %v1086
          %1094 = vst [vmem:[%s1092 + $0x8] sm:$0xff] %v1088
          %v1095 = vmul.f32 %v1081, -5000.0
          %v1096 = vmul.f32 %v1082, -5000.0
          %v1097 = vmul.f32 %v1095, 1.442695
          %v1098 = vpow.pop %v1097
          %v1099 = vmul.f32 %v1096, 1.442695
          %v1100 = vpow.pop %v1099
          %s1101 = scalar_lea.vmem %s148, 320 [#allocation6]
          %1102 = vst [vmem:[%s1101] sm:$0xff] %v1098
          %1103 = vst [vmem:[%s1101 + $0x8] sm:$0xff] %v1100
          %s1104 = scalar_lea.vmem %s148, 432 [#allocation6]
          %1105 = vst [vmem:[%s1104] sm:$0xff] %v1098
          %1106 = vst [vmem:[%s1104 + $0x8] sm:$0xff] %v1100
        $region36: #{tpu_custom_call.1} parent=23 // pred_fallthru
          _
        %s1107 = sand.u32 %s66, 1
        %s1108 = scalar_lea.sflag [#allocation5], %s1107
        %s1109 = sand.u32 %s66, 1
        %s1110 = smul.addr %s1109, 448
        %s1111 = scalar_lea.vmem [#allocation6], %s1110
        // Predicated region
        $region37: #{tpu_custom_call.1} parent=23 // pred_check
          %p1112 = pneg %p76
        $region38: #{tpu_custom_call.1} parent=23 // pred_check_branch
          %1114 = sbr.rel (%p1112) target = $region40
        $region39: #{tpu_custom_call.1} parent=23 // pred_region
          #allocation8 [shape = 'u32[6]{0}', space=smem, size = 0x18, scoped, tag = 'DMA stride descriptor']
          %s1115 = smul.u32 7, %s23
          %s1117 = ssub.s32 7168, 7168
          %1118 = vsyncadd %s1108, %s1117
          %s1119 = smul.addr %s1115, 2
          %s1120 = smul.addr %s22, 112
          %s1121 = sadd.s32 %s1119, %s1120
          %s1122 = smul.addr %s1121, 128
          %s1123 = scalar_lea.hbm %s1, %s1122
          %s1125 = sshll.u32 1, 14
          %s1126 = sxor.u32 4294967295, %s1125
          %s1129 = sshll.u32 7, 18
          %s1130 = sxor.u32 4294967295, %s1129
          %s1131 = sand.u32 0, %s1130
          %s1133 = sor.u32 %s1131, 0
          %s1134 = sshll.u32 %s1111, 4
          %s1135 = int_to_ptr.vmem [resolvable:$true] %s1134
          %1141 = sst [smem:[#allocation8]] 1792
          %s1142 = scalar_lea.smem [#allocation8], 1
          %1143 = sst [smem:[%s1142]] 3584
          %s1144 = scalar_lea.smem [#allocation8], 2
          %1145 = sst [smem:[%s1144]] 14
          %s1146 = scalar_lea.smem [#allocation8], 3
          %1147 = sst [smem:[%s1146]] 128
          %s1148 = scalar_lea.smem [#allocation8], 4
          %1149 = sst [smem:[%s1148]] 128
          %s1150 = scalar_lea.smem [#allocation8], 5
          %1151 = sst [smem:[%s1150]] 8
          %1153 = dma.general %s1135, 7168, %s1123, %s1108, 131072, [#allocation8], %s1133, 0
        $region40: #{tpu_custom_call.1} parent=23 // pred_fallthru
          _
      $region24: #{tpu_custom_call.1} parent=5 // pred_fallthru
        _
      %p1154 = scmp.le.s32.totalorder 2, %s13
      // Predicated region
      $region41: #{tpu_custom_call.1} parent=5 // pred_check
        %p1155 = pneg %p1154
      $region42: #{tpu_custom_call.1} parent=5 // pred_check_branch
        %1157 = sbr.rel (%p1155) target = $region44
      $region43: #{tpu_custom_call.1} parent=5 // pred_region
        %s1158 = ssub.s32 %s13, 2
        // Predicated region
        $region45: #{tpu_custom_call.1} parent=43 // pred_check
          %p1159 = pneg %p82
        $region46: #{tpu_custom_call.1} parent=43 // pred_check_branch
          %1161 = sbr.rel (%p1159) target = $region48
        $region47: #{tpu_custom_call.1} parent=43 // pred_region
          %s1162 = sand.u32 %s67, 1
          %s1163 = scalar_lea.sflag [#allocation5], %s1162
          %s1164 = sand.u32 %s67, 1
          %s1165 = smul.addr %s1164, 448
          %s1166 = scalar_lea.vmem [#allocation6], %s1165
          %1167 = dma.done %s1163, 7168
        $region48: #{tpu_custom_call.1} parent=43 // pred_fallthru
          _
      $region44: #{tpu_custom_call.1} parent=5 // pred_fallthru
        _
    $region6: #{tpu_custom_call.1} parent=1 // loop_footer
      %s17 = sadd.s32 1, %s13
    $region7: #{tpu_custom_call.1} parent=1 // loop_footer_branch
      %12 = sbr.rel target = $region3
    $region8: #{tpu_custom_call.1} parent=1 // loop_exit
      _
    %1168 = vsyncpa [#allocation4], 1
    %s1169 = scalar_lea.sflag [#allocation4], 1
    %1170 = vsyncpa %s1169, 1
    %1171 = vsyncpa [#allocation5], 1
    %s1172 = scalar_lea.sflag [#allocation5], 1
    %1173 = vsyncpa %s1172, 1

</llo_original>
